<compile_context>
chip_gen: v6e
topology: v6e:2x2x1
jax: 0.10.0
libtpu: 0.0.40
codegen_flags: <defaults>
</compile_context>

<pallas_src>
import functools

import jax
import jax.numpy as jnp
from jax.experimental import pallas as pl
from jax.experimental.pallas import tpu as pltpu


# ----------------------------------------------------------------------------
# Pallas kernels
# ----------------------------------------------------------------------------
def _conv_pool_bn_kernel(pt_ref, w_ref, b_ref, g_ref, be_ref, o_ref, *, n_phase, r):
    """Fused conv(+bias,ReLU) [+2x2 maxpool] + train-mode BN on a transposed slab.

    pt_ref : (K, n_phase*r)  im2col patches, pixels on lanes, pooling-phase major
    w_ref  : (Cout, K)       conv weight (cross-correlation, k = (di*3+dj)*Cin+c)
    b/g/be : (Cout, 1)       conv bias, BN gamma, BN beta
    o_ref  : (Cout, r)       pooled+normalized activations, columns = (n, h, w)
    """
    z = jnp.dot(w_ref[...], pt_ref[...], preferred_element_type=jnp.float32)
    z = jnp.maximum(z + b_ref[...], 0.0)                 # bias + ReLU
    m = z[:, 0:r]
    for ph in range(1, n_phase):                         # fused 2x2 maxpool
        m = jnp.maximum(m, z[:, ph * r:(ph + 1) * r])
    # Train-mode BatchNorm over the full batch slab (grid=(1,) keeps stats exact).
    mean = jnp.mean(m, axis=1, keepdims=True)
    var = jnp.mean(m * m, axis=1, keepdims=True) - mean * mean   # one-pass variance
    inv = jax.lax.rsqrt(var + 1e-5)
    o_ref[...] = (m - mean) * inv * g_ref[...] + be_ref[...]
    # TODO(synk): BatchNorm running_mean/running_var buffer updates (training
    # state) are not materialized; only the forward value is computed.


def _fc_chain_kernel(x_ref, y_ref, w1_ref, b1_ref, w2_ref, b2_ref, w3_ref, b3_ref,
                     w4a_ref, w4b_ref, b4_ref, w5_ref, b5_ref, o_ref):
    """fc1..fc5 (with ReLUs) fused in one launch; concat(x, y) folded into fc4."""
    def dot(a, b):
        return jnp.dot(a, b, preferred_element_type=jnp.float32)

    h = jnp.maximum(dot(x_ref[...], w1_ref[...]) + b1_ref[...], 0.0)
    h = jnp.maximum(dot(h, w2_ref[...]) + b2_ref[...], 0.0)
    h = jnp.maximum(dot(h, w3_ref[...]) + b3_ref[...], 0.0)
    # fc4(cat([h, y])) == h @ w4[:8] + y @ w4[8:]
    h = jnp.maximum(dot(h, w4a_ref[...]) + dot(y_ref[...], w4b_ref[...]) + b4_ref[...], 0.0)
    o_ref[...] = dot(h, w5_ref[...]) + b5_ref[...]


# ----------------------------------------------------------------------------
# Wrappers
# ----------------------------------------------------------------------------
def conv_bn_stage(x_nhwc, w_hwio, b, gamma, beta, *, pool):
    """One fused pallas_call per stage: conv3x3/s2 + bias + ReLU [+ pool] + BN."""
    N, H, W, Cin = x_nhwc.shape
    Ho, Wo = H // 2, W // 2
    Cout = w_hwio.shape[-1]
    K = 9 * Cin
    if pool:
        H2, W2, n_phase = Ho // 2, Wo // 2, 4
    else:
        H2, W2, n_phase = Ho, Wo, 1
    R = N * H2 * W2

    # im2col in glue (<= 0.6 MB), laid out transposed + pooling-phase-major so
    # the kernel is one lane-dense matmul followed by aligned lane slices.
    xp = jnp.pad(x_nhwc, ((0, 0), (1, 1), (1, 1), (0, 0)))
    taps = [xp[:, di:di + 2 * Ho:2, dj:dj + 2 * Wo:2, :]
            for di in range(3) for dj in range(3)]
    p = jnp.stack(taps, axis=3).reshape(N, Ho, Wo, K)              # (n, h, w, k)
    if pool:
        p = p.reshape(N, H2, 2, W2, 2, K).transpose(2, 4, 0, 1, 3, 5)  # (s,t,n,i,j,k)
    pt = p.reshape(n_phase * R, K).T                               # (K, n_phase*R)

    w2 = w_hwio.reshape(K, Cout).T                                 # (Cout, K)
    kernel = functools.partial(_conv_pool_bn_kernel, n_phase=n_phase, r=R)
    out = pl.pallas_call(
        kernel,
        out_shape=jax.ShapeDtypeStruct((Cout, R), jnp.float32),
        grid=(1,),
        in_specs=[
            pl.BlockSpec((K, n_phase * R), lambda i: (0, 0)),
            pl.BlockSpec((Cout, K), lambda i: (0, 0)),
            pl.BlockSpec((Cout, 1), lambda i: (0, 0)),
            pl.BlockSpec((Cout, 1), lambda i: (0, 0)),
            pl.BlockSpec((Cout, 1), lambda i: (0, 0)),
        ],
        out_specs=pl.BlockSpec((Cout, R), lambda i: (0, 0)),
        compiler_params=pltpu.CompilerParams(dimension_semantics=("arbitrary",)),
    )(pt, w2, b.reshape(Cout, 1), gamma.reshape(Cout, 1), beta.reshape(Cout, 1))
    # (Cout, R) with columns ordered (n, h, w) -> NHWC for the next stage.
    return out.reshape(Cout, N, H2, W2).transpose(1, 2, 3, 0)


def fc_head(flat, y, p):
    """All five Linear layers (+ReLU, +concat with y) in a single pallas_call."""
    N = flat.shape[0]
    args = (
        flat, y,
        p['fc1_w'], p['fc1_b'].reshape(1, -1),
        p['fc2_w'], p['fc2_b'].reshape(1, -1),
        p['fc3_w'], p['fc3_b'].reshape(1, -1),
        p['fc4_w'][:8, :], p['fc4_w'][8:, :], p['fc4_b'].reshape(1, -1),
        p['fc5_w'], p['fc5_b'].reshape(1, -1),
    )
    return pl.pallas_call(
        _fc_chain_kernel,
        out_shape=jax.ShapeDtypeStruct((N, 1), jnp.float32),
        grid=(1,),
        in_specs=[pl.BlockSpec(a.shape, lambda i: (0, 0)) for a in args],
        out_specs=pl.BlockSpec((N, 1), lambda i: (0, 0)),
        compiler_params=pltpu.CompilerParams(dimension_semantics=("arbitrary",)),
    )(*args)


# ----------------------------------------------------------------------------
# Parameters (deterministic synthetic init, PyTorch-equivalent layouts)
# ----------------------------------------------------------------------------
def init_params(key):
    ks = iter(jax.random.split(key, 26))

    def conv(cin, cout):
        w = jax.random.normal(next(ks), (3, 3, cin, cout), jnp.float32) / jnp.sqrt(9.0 * cin)
        b = 0.01 * jax.random.normal(next(ks), (cout,), jnp.float32)
        return w, b

    def fc(din, dout):
        w = jax.random.normal(next(ks), (din, dout), jnp.float32) / jnp.sqrt(float(din))
        b = 0.01 * jax.random.normal(next(ks), (dout,), jnp.float32)
        return w, b

    def bn(c):
        g = 1.0 + 0.1 * jax.random.normal(next(ks), (c,), jnp.float32)
        b = 0.1 * jax.random.normal(next(ks), (c,), jnp.float32)
        return g, b

    p = {}
    p['conv1_w'], p['conv1_b'] = conv(2, 4)
    p['bn1_g'], p['bn1_b'] = bn(4)
    p['conv2_w'], p['conv2_b'] = conv(4, 8)
    p['bn2_g'], p['bn2_b'] = bn(8)
    p['conv3_w'], p['conv3_b'] = conv(8, 16)
    p['bn3_g'], p['bn3_b'] = bn(16)
    p['conv4_w'], p['conv4_b'] = conv(16, 32)
    p['bn4_g'], p['bn4_b'] = bn(32)
    p['fc1_w'], p['fc1_b'] = fc(128, 64)
    p['fc2_w'], p['fc2_b'] = fc(64, 16)
    p['fc3_w'], p['fc3_b'] = fc(16, 8)
    p['fc4_w'], p['fc4_b'] = fc(8 + 4, 12)
    p['fc5_w'], p['fc5_b'] = fc(12, 1)
    return p


# ----------------------------------------------------------------------------
# Forward pass (mirrors Net.forward)
# ----------------------------------------------------------------------------
def net_forward(p, x_nchw, y):
    x = jnp.transpose(x_nchw, (0, 2, 3, 1)).astype(jnp.float32)      # NCHW -> NHWC

    h = conv_bn_stage(x, p['conv1_w'], p['conv1_b'], p['bn1_g'], p['bn1_b'], pool=True)   # (N,32,32,4)
    h = conv_bn_stage(h, p['conv2_w'], p['conv2_b'], p['bn2_g'], p['bn2_b'], pool=True)   # (N,8,8,8)
    h = conv_bn_stage(h, p['conv3_w'], p['conv3_b'], p['bn3_g'], p['bn3_b'], pool=False)  # (N,4,4,16)
    h = conv_bn_stage(h, p['conv4_w'], p['conv4_b'], p['bn4_g'], p['bn4_b'], pool=False)  # (N,2,2,32)

    # PyTorch flattens NCHW: (N, C*H*W) in channel-major order.
    flat = jnp.transpose(h, (0, 3, 1, 2)).reshape(h.shape[0], -1)    # (N, 128)
    return fc_head(flat, y.astype(jnp.float32), p)                   # (N, 1)


if __name__ == "__main__":
    key = jax.random.PRNGKey(0)
    kp, kx, ky = jax.random.split(key, 3)
    params = init_params(kp)

    # Input spatial size is forced to 128x128 by the flatten-to-128 constraint
    # (32 channels * 2 * 2 spatial after four stride-2 convs and two maxpools).
    x = jax.random.normal(kx, (2, 2, 128, 128), jnp.float32)
    y = jax.random.normal(ky, (2, 4), jnp.float32)

    out = jax.jit(net_forward)(params, x, y)
    out = jax.block_until_ready(out)
    assert out.shape == (2, 1), out.shape
    assert bool(jnp.all(jnp.isfinite(out)))
    print("KERNEL_OK")
</pallas_src>

<mosaic_0001>
module attributes {stable_mosaic.version = 11 : i64} {
  func.func @_conv_pool_bn_kernel(%arg0: i32, %arg1: memref<18x8192xf32, #tpu.memory_space<vmem>>, %arg2: memref<4x18xf32, #tpu.memory_space<vmem>>, %arg3: memref<4x1xf32, #tpu.memory_space<vmem>>, %arg4: memref<4x1xf32, #tpu.memory_space<vmem>>, %arg5: memref<4x1xf32, #tpu.memory_space<vmem>>, %arg6: memref<4x2048xf32, #tpu.memory_space<vmem>>) attributes {dimension_semantics = [#tpu.dimension_semantics<arbitrary>], iteration_bounds = array<i64: 1>, scalar_prefetch = 0 : i64, scratch_operands = 0 : i64, tpu.core_type = #tpu.core_type<tc>, window_params = [{pipeline_mode = #tpu.pipeline_mode<synchronous>, transform_indices = @transform_0, window_bounds = array<i64: 18, 8192>}, {pipeline_mode = #tpu.pipeline_mode<synchronous>, transform_indices = @transform_1, window_bounds = array<i64: 4, 18>}, {pipeline_mode = #tpu.pipeline_mode<synchronous>, transform_indices = @transform_2, window_bounds = array<i64: 4, 1>}, {pipeline_mode = #tpu.pipeline_mode<synchronous>, transform_indices = @transform_3, window_bounds = array<i64: 4, 1>}, {pipeline_mode = #tpu.pipeline_mode<synchronous>, transform_indices = @transform_4, window_bounds = array<i64: 4, 1>}, {pipeline_mode = #tpu.pipeline_mode<synchronous>, transform_indices = @transform_5, window_bounds = array<i64: 4, 2048>}]} {
    %c0 = arith.constant 0 : index
    %c0_0 = arith.constant 0 : index
    %0 = vector.load %arg2[%c0, %c0_0] : memref<4x18xf32, #tpu.memory_space<vmem>>, vector<4x18xf32>
    %c0_1 = arith.constant 0 : index
    %c0_2 = arith.constant 0 : index
    %1 = vector.load %arg1[%c0_1, %c0_2] : memref<18x8192xf32, #tpu.memory_space<vmem>>, vector<18x8192xf32>
    %cst = arith.constant dense<0.000000e+00> : vector<4x8192xf32>
    %2 = tpu.matmul %0, %1, %cst {dimension_numbers = #tpu.dot_dimension_numbers<[1], [0], [0], [1], [0, 0, 1, 1], [], []>} : vector<4x18xf32>, vector<18x8192xf32>, vector<4x8192xf32> -> vector<4x8192xf32>
    %c0_3 = arith.constant 0 : index
    %c0_4 = arith.constant 0 : index
    %3 = vector.load %arg3[%c0_3, %c0_4] : memref<4x1xf32, #tpu.memory_space<vmem>>, vector<4x1xf32>
    %4 = vector.broadcast %3 : vector<4x1xf32> to vector<4x8192xf32>
    %5 = arith.addf %2, %4 : vector<4x8192xf32>
    %cst_5 = arith.constant 0.000000e+00 : f32
    %6 = vector.broadcast %cst_5 : f32 to vector<4x8192xf32>
    %7 = arith.maximumf %5, %6 : vector<4x8192xf32>
    %8 = vector.extract_strided_slice %7 {offsets = [0, 0], sizes = [4, 2048], strides = [1, 1]} : vector<4x8192xf32> to vector<4x2048xf32>
    %9 = vector.extract_strided_slice %7 {offsets = [0, 2048], sizes = [4, 2048], strides = [1, 1]} : vector<4x8192xf32> to vector<4x2048xf32>
    %10 = arith.maximumf %8, %9 : vector<4x2048xf32>
    %11 = vector.extract_strided_slice %7 {offsets = [0, 4096], sizes = [4, 2048], strides = [1, 1]} : vector<4x8192xf32> to vector<4x2048xf32>
    %12 = arith.maximumf %10, %11 : vector<4x2048xf32>
    %13 = vector.extract_strided_slice %7 {offsets = [0, 6144], sizes = [4, 2048], strides = [1, 1]} : vector<4x8192xf32> to vector<4x2048xf32>
    %14 = arith.maximumf %12, %13 : vector<4x2048xf32>
    %cst_6 = arith.constant dense<0.000000e+00> : vector<4xf32>
    %15 = vector.multi_reduction <add>, %14, %cst_6 [1] : vector<4x2048xf32> to vector<4xf32>
    %16 = vector.shape_cast %15 : vector<4xf32> to vector<4x1xf32>
    %cst_7 = arith.constant 2.048000e+03 : f32
    %17 = vector.broadcast %cst_7 : f32 to vector<4x1xf32>
    %18 = arith.divf %16, %17 : vector<4x1xf32>
    %19 = arith.mulf %14, %14 : vector<4x2048xf32>
    %cst_8 = arith.constant dense<0.000000e+00> : vector<4xf32>
    %20 = vector.multi_reduction <add>, %19, %cst_8 [1] : vector<4x2048xf32> to vector<4xf32>
    %21 = vector.shape_cast %20 : vector<4xf32> to vector<4x1xf32>
    %cst_9 = arith.constant 2.048000e+03 : f32
    %22 = vector.broadcast %cst_9 : f32 to vector<4x1xf32>
    %23 = arith.divf %21, %22 : vector<4x1xf32>
    %24 = arith.mulf %18, %18 : vector<4x1xf32>
    %25 = arith.subf %23, %24 : vector<4x1xf32>
    %cst_10 = arith.constant 9.99999974E-6 : f32
    %26 = vector.broadcast %cst_10 : f32 to vector<4x1xf32>
    %27 = arith.addf %25, %26 : vector<4x1xf32>
    %28 = math.rsqrt %27 : vector<4x1xf32>
    %29 = vector.broadcast %18 : vector<4x1xf32> to vector<4x2048xf32>
    %30 = arith.subf %14, %29 : vector<4x2048xf32>
    %31 = vector.broadcast %28 : vector<4x1xf32> to vector<4x2048xf32>
    %32 = arith.mulf %30, %31 : vector<4x2048xf32>
    %c0_11 = arith.constant 0 : index
    %c0_12 = arith.constant 0 : index
    %33 = vector.load %arg4[%c0_11, %c0_12] : memref<4x1xf32, #tpu.memory_space<vmem>>, vector<4x1xf32>
    %34 = vector.broadcast %33 : vector<4x1xf32> to vector<4x2048xf32>
    %35 = arith.mulf %32, %34 : vector<4x2048xf32>
    %c0_13 = arith.constant 0 : index
    %c0_14 = arith.constant 0 : index
    %36 = vector.load %arg5[%c0_13, %c0_14] : memref<4x1xf32, #tpu.memory_space<vmem>>, vector<4x1xf32>
    %37 = vector.broadcast %36 : vector<4x1xf32> to vector<4x2048xf32>
    %38 = arith.addf %35, %37 : vector<4x2048xf32>
    %c0_15 = arith.constant 0 : index
    %c0_16 = arith.constant 0 : index
    %39 = vector.load %arg6[%c0_15, %c0_16] : memref<4x2048xf32, #tpu.memory_space<vmem>>, vector<4x2048xf32>
    tpu.vector_store %arg6[%c0_15, %c0_16], %38 {strides = array<i32>} : memref<4x2048xf32, #tpu.memory_space<vmem>>, vector<4x2048xf32>,
    return
  }
  func.func @transform_0(%arg0: i32) -> (i32, i32) {
    %c0_i32 = arith.constant 0 : i32
    %c0_i32_0 = arith.constant 0 : i32
    %c0_i32_1 = arith.constant 0 : i32
    return %c0_i32, %c0_i32_0 : i32, i32
  }
  func.func @transform_1(%arg0: i32) -> (i32, i32) {
    %c0_i32 = arith.constant 0 : i32
    %c0_i32_0 = arith.constant 0 : i32
    %c0_i32_1 = arith.constant 0 : i32
    return %c0_i32, %c0_i32_0 : i32, i32
  }
  func.func @transform_2(%arg0: i32) -> (i32, i32) {
    %c0_i32 = arith.constant 0 : i32
    %c0_i32_0 = arith.constant 0 : i32
    %c0_i32_1 = arith.constant 0 : i32
    return %c0_i32, %c0_i32_0 : i32, i32
  }
  func.func @transform_3(%arg0: i32) -> (i32, i32) {
    %c0_i32 = arith.constant 0 : i32
    %c0_i32_0 = arith.constant 0 : i32
    %c0_i32_1 = arith.constant 0 : i32
    return %c0_i32, %c0_i32_0 : i32, i32
  }
  func.func @transform_4(%arg0: i32) -> (i32, i32) {
    %c0_i32 = arith.constant 0 : i32
    %c0_i32_0 = arith.constant 0 : i32
    %c0_i32_1 = arith.constant 0 : i32
    return %c0_i32, %c0_i32_0 : i32, i32
  }
  func.func @transform_5(%arg0: i32) -> (i32, i32) {
    %c0_i32 = arith.constant 0 : i32
    %c0_i32_0 = arith.constant 0 : i32
    %c0_i32_1 = arith.constant 0 : i32
    return %c0_i32, %c0_i32_0 : i32, i32
  }
}

module attributes {stable_mosaic.version = 11 : i64} {
  func.func @_conv_pool_bn_kernel(%arg0: i32, %arg1: memref<36x512xf32, #tpu.memory_space<vmem>>, %arg2: memref<8x36xf32, #tpu.memory_space<vmem>>, %arg3: memref<8x1xf32, #tpu.memory_space<vmem>>, %arg4: memref<8x1xf32, #tpu.memory_space<vmem>>, %arg5: memref<8x1xf32, #tpu.memory_space<vmem>>, %arg6: memref<8x128xf32, #tpu.memory_space<vmem>>) attributes {dimension_semantics = [#tpu.dimension_semantics<arbitrary>], iteration_bounds = array<i64: 1>, scalar_prefetch = 0 : i64, scratch_operands = 0 : i64, tpu.core_type = #tpu.core_type<tc>, window_params = [{pipeline_mode = #tpu.pipeline_mode<synchronous>, transform_indices = @transform_0, window_bounds = array<i64: 36, 512>}, {pipeline_mode = #tpu.pipeline_mode<synchronous>, transform_indices = @transform_1, window_bounds = array<i64: 8, 36>}, {pipeline_mode = #tpu.pipeline_mode<synchronous>, transform_indices = @transform_2, window_bounds = array<i64: 8, 1>}, {pipeline_mode = #tpu.pipeline_mode<synchronous>, transform_indices = @transform_3, window_bounds = array<i64: 8, 1>}, {pipeline_mode = #tpu.pipeline_mode<synchronous>, transform_indices = @transform_4, window_bounds = array<i64: 8, 1>}, {pipeline_mode = #tpu.pipeline_mode<synchronous>, transform_indices = @transform_5, window_bounds = array<i64: 8, 128>}]} {
    %c0 = arith.constant 0 : index
    %c0_0 = arith.constant 0 : index
    %0 = vector.load %arg2[%c0, %c0_0] : memref<8x36xf32, #tpu.memory_space<vmem>>, vector<8x36xf32>
    %c0_1 = arith.constant 0 : index
    %c0_2 = arith.constant 0 : index
    %1 = vector.load %arg1[%c0_1, %c0_2] : memref<36x512xf32, #tpu.memory_space<vmem>>, vector<36x512xf32>
    %cst = arith.constant dense<0.000000e+00> : vector<8x512xf32>
    %2 = tpu.matmul %0, %1, %cst {dimension_numbers = #tpu.dot_dimension_numbers<[1], [0], [0], [1], [0, 0, 1, 1], [], []>} : vector<8x36xf32>, vector<36x512xf32>, vector<8x512xf32> -> vector<8x512xf32>
    %c0_3 = arith.constant 0 : index
    %c0_4 = arith.constant 0 : index
    %3 = vector.load %arg3[%c0_3, %c0_4] : memref<8x1xf32, #tpu.memory_space<vmem>>, vector<8x1xf32>
    %4 = vector.broadcast %3 : vector<8x1xf32> to vector<8x512xf32>
    %5 = arith.addf %2, %4 : vector<8x512xf32>
    %cst_5 = arith.constant 0.000000e+00 : f32
    %6 = vector.broadcast %cst_5 : f32 to vector<8x512xf32>
    %7 = arith.maximumf %5, %6 : vector<8x512xf32>
    %8 = vector.extract_strided_slice %7 {offsets = [0, 0], sizes = [8, 128], strides = [1, 1]} : vector<8x512xf32> to vector<8x128xf32>
    %9 = vector.extract_strided_slice %7 {offsets = [0, 128], sizes = [8, 128], strides = [1, 1]} : vector<8x512xf32> to vector<8x128xf32>
    %10 = arith.maximumf %8, %9 : vector<8x128xf32>
    %11 = vector.extract_strided_slice %7 {offsets = [0, 256], sizes = [8, 128], strides = [1, 1]} : vector<8x512xf32> to vector<8x128xf32>
    %12 = arith.maximumf %10, %11 : vector<8x128xf32>
    %13 = vector.extract_strided_slice %7 {offsets = [0, 384], sizes = [8, 128], strides = [1, 1]} : vector<8x512xf32> to vector<8x128xf32>
    %14 = arith.maximumf %12, %13 : vector<8x128xf32>
    %cst_6 = arith.constant dense<0.000000e+00> : vector<8xf32>
    %15 = vector.multi_reduction <add>, %14, %cst_6 [1] : vector<8x128xf32> to vector<8xf32>
    %16 = vector.shape_cast %15 : vector<8xf32> to vector<8x1xf32>
    %cst_7 = arith.constant 1.280000e+02 : f32
    %17 = vector.broadcast %cst_7 : f32 to vector<8x1xf32>
    %18 = arith.divf %16, %17 : vector<8x1xf32>
    %19 = arith.mulf %14, %14 : vector<8x128xf32>
    %cst_8 = arith.constant dense<0.000000e+00> : vector<8xf32>
    %20 = vector.multi_reduction <add>, %19, %cst_8 [1] : vector<8x128xf32> to vector<8xf32>
    %21 = vector.shape_cast %20 : vector<8xf32> to vector<8x1xf32>
    %cst_9 = arith.constant 1.280000e+02 : f32
    %22 = vector.broadcast %cst_9 : f32 to vector<8x1xf32>
    %23 = arith.divf %21, %22 : vector<8x1xf32>
    %24 = arith.mulf %18, %18 : vector<8x1xf32>
    %25 = arith.subf %23, %24 : vector<8x1xf32>
    %cst_10 = arith.constant 9.99999974E-6 : f32
    %26 = vector.broadcast %cst_10 : f32 to vector<8x1xf32>
    %27 = arith.addf %25, %26 : vector<8x1xf32>
    %28 = math.rsqrt %27 : vector<8x1xf32>
    %29 = vector.broadcast %18 : vector<8x1xf32> to vector<8x128xf32>
    %30 = arith.subf %14, %29 : vector<8x128xf32>
    %31 = vector.broadcast %28 : vector<8x1xf32> to vector<8x128xf32>
    %32 = arith.mulf %30, %31 : vector<8x128xf32>
    %c0_11 = arith.constant 0 : index
    %c0_12 = arith.constant 0 : index
    %33 = vector.load %arg4[%c0_11, %c0_12] : memref<8x1xf32, #tpu.memory_space<vmem>>, vector<8x1xf32>
    %34 = vector.broadcast %33 : vector<8x1xf32> to vector<8x128xf32>
    %35 = arith.mulf %32, %34 : vector<8x128xf32>
    %c0_13 = arith.constant 0 : index
    %c0_14 = arith.constant 0 : index
    %36 = vector.load %arg5[%c0_13, %c0_14] : memref<8x1xf32, #tpu.memory_space<vmem>>, vector<8x1xf32>
    %37 = vector.broadcast %36 : vector<8x1xf32> to vector<8x128xf32>
    %38 = arith.addf %35, %37 : vector<8x128xf32>
    %c0_15 = arith.constant 0 : index
    %c0_16 = arith.constant 0 : index
    %39 = vector.load %arg6[%c0_15, %c0_16] : memref<8x128xf32, #tpu.memory_space<vmem>>, vector<8x128xf32>
    tpu.vector_store %arg6[%c0_15, %c0_16], %38 {strides = array<i32>} : memref<8x128xf32, #tpu.memory_space<vmem>>, vector<8x128xf32>,
    return
  }
  func.func @transform_0(%arg0: i32) -> (i32, i32) {
    %c0_i32 = arith.constant 0 : i32
    %c0_i32_0 = arith.constant 0 : i32
    %c0_i32_1 = arith.constant 0 : i32
    return %c0_i32, %c0_i32_0 : i32, i32
  }
  func.func @transform_1(%arg0: i32) -> (i32, i32) {
    %c0_i32 = arith.constant 0 : i32
    %c0_i32_0 = arith.constant 0 : i32
    %c0_i32_1 = arith.constant 0 : i32
    return %c0_i32, %c0_i32_0 : i32, i32
  }
  func.func @transform_2(%arg0: i32) -> (i32, i32) {
    %c0_i32 = arith.constant 0 : i32
    %c0_i32_0 = arith.constant 0 : i32
    %c0_i32_1 = arith.constant 0 : i32
    return %c0_i32, %c0_i32_0 : i32, i32
  }
  func.func @transform_3(%arg0: i32) -> (i32, i32) {
    %c0_i32 = arith.constant 0 : i32
    %c0_i32_0 = arith.constant 0 : i32
    %c0_i32_1 = arith.constant 0 : i32
    return %c0_i32, %c0_i32_0 : i32, i32
  }
  func.func @transform_4(%arg0: i32) -> (i32, i32) {
    %c0_i32 = arith.constant 0 : i32
    %c0_i32_0 = arith.constant 0 : i32
    %c0_i32_1 = arith.constant 0 : i32
    return %c0_i32, %c0_i32_0 : i32, i32
  }
  func.func @transform_5(%arg0: i32) -> (i32, i32) {
    %c0_i32 = arith.constant 0 : i32
    %c0_i32_0 = arith.constant 0 : i32
    %c0_i32_1 = arith.constant 0 : i32
    return %c0_i32, %c0_i32_0 : i32, i32
  }
}

module attributes {stable_mosaic.version = 11 : i64} {
  func.func @_conv_pool_bn_kernel(%arg0: i32, %arg1: memref<72x32xf32, #tpu.memory_space<vmem>>, %arg2: memref<16x72xf32, #tpu.memory_space<vmem>>, %arg3: memref<16x1xf32, #tpu.memory_space<vmem>>, %arg4: memref<16x1xf32, #tpu.memory_space<vmem>>, %arg5: memref<16x1xf32, #tpu.memory_space<vmem>>, %arg6: memref<16x32xf32, #tpu.memory_space<vmem>>) attributes {dimension_semantics = [#tpu.dimension_semantics<arbitrary>], iteration_bounds = array<i64: 1>, scalar_prefetch = 0 : i64, scratch_operands = 0 : i64, tpu.core_type = #tpu.core_type<tc>, window_params = [{pipeline_mode = #tpu.pipeline_mode<synchronous>, transform_indices = @transform_0, window_bounds = array<i64: 72, 32>}, {pipeline_mode = #tpu.pipeline_mode<synchronous>, transform_indices = @transform_1, window_bounds = array<i64: 16, 72>}, {pipeline_mode = #tpu.pipeline_mode<synchronous>, transform_indices = @transform_2, window_bounds = array<i64: 16, 1>}, {pipeline_mode = #tpu.pipeline_mode<synchronous>, transform_indices = @transform_3, window_bounds = array<i64: 16, 1>}, {pipeline_mode = #tpu.pipeline_mode<synchronous>, transform_indices = @transform_4, window_bounds = array<i64: 16, 1>}, {pipeline_mode = #tpu.pipeline_mode<synchronous>, transform_indices = @transform_5, window_bounds = array<i64: 16, 32>}]} {
    %c0 = arith.constant 0 : index
    %c0_0 = arith.constant 0 : index
    %0 = vector.load %arg2[%c0, %c0_0] : memref<16x72xf32, #tpu.memory_space<vmem>>, vector<16x72xf32>
    %c0_1 = arith.constant 0 : index
    %c0_2 = arith.constant 0 : index
    %1 = vector.load %arg1[%c0_1, %c0_2] : memref<72x32xf32, #tpu.memory_space<vmem>>, vector<72x32xf32>
    %cst = arith.constant dense<0.000000e+00> : vector<16x32xf32>
    %2 = tpu.matmul %0, %1, %cst {dimension_numbers = #tpu.dot_dimension_numbers<[1], [0], [0], [1], [0, 0, 1, 1], [], []>} : vector<16x72xf32>, vector<72x32xf32>, vector<16x32xf32> -> vector<16x32xf32>
    %c0_3 = arith.constant 0 : index
    %c0_4 = arith.constant 0 : index
    %3 = vector.load %arg3[%c0_3, %c0_4] : memref<16x1xf32, #tpu.memory_space<vmem>>, vector<16x1xf32>
    %4 = vector.broadcast %3 : vector<16x1xf32> to vector<16x32xf32>
    %5 = arith.addf %2, %4 : vector<16x32xf32>
    %cst_5 = arith.constant 0.000000e+00 : f32
    %6 = vector.broadcast %cst_5 : f32 to vector<16x32xf32>
    %7 = arith.maximumf %5, %6 : vector<16x32xf32>
    %cst_6 = arith.constant dense<0.000000e+00> : vector<16xf32>
    %8 = vector.multi_reduction <add>, %7, %cst_6 [1] : vector<16x32xf32> to vector<16xf32>
    %9 = vector.shape_cast %8 : vector<16xf32> to vector<16x1xf32>
    %cst_7 = arith.constant 3.200000e+01 : f32
    %10 = vector.broadcast %cst_7 : f32 to vector<16x1xf32>
    %11 = arith.divf %9, %10 : vector<16x1xf32>
    %12 = arith.mulf %7, %7 : vector<16x32xf32>
    %cst_8 = arith.constant dense<0.000000e+00> : vector<16xf32>
    %13 = vector.multi_reduction <add>, %12, %cst_8 [1] : vector<16x32xf32> to vector<16xf32>
    %14 = vector.shape_cast %13 : vector<16xf32> to vector<16x1xf32>
    %cst_9 = arith.constant 3.200000e+01 : f32
    %15 = vector.broadcast %cst_9 : f32 to vector<16x1xf32>
    %16 = arith.divf %14, %15 : vector<16x1xf32>
    %17 = arith.mulf %11, %11 : vector<16x1xf32>
    %18 = arith.subf %16, %17 : vector<16x1xf32>
    %cst_10 = arith.constant 9.99999974E-6 : f32
    %19 = vector.broadcast %cst_10 : f32 to vector<16x1xf32>
    %20 = arith.addf %18, %19 : vector<16x1xf32>
    %21 = math.rsqrt %20 : vector<16x1xf32>
    %22 = vector.broadcast %11 : vector<16x1xf32> to vector<16x32xf32>
    %23 = arith.subf %7, %22 : vector<16x32xf32>
    %24 = vector.broadcast %21 : vector<16x1xf32> to vector<16x32xf32>
    %25 = arith.mulf %23, %24 : vector<16x32xf32>
    %c0_11 = arith.constant 0 : index
    %c0_12 = arith.constant 0 : index
    %26 = vector.load %arg4[%c0_11, %c0_12] : memref<16x1xf32, #tpu.memory_space<vmem>>, vector<16x1xf32>
    %27 = vector.broadcast %26 : vector<16x1xf32> to vector<16x32xf32>
    %28 = arith.mulf %25, %27 : vector<16x32xf32>
    %c0_13 = arith.constant 0 : index
    %c0_14 = arith.constant 0 : index
    %29 = vector.load %arg5[%c0_13, %c0_14] : memref<16x1xf32, #tpu.memory_space<vmem>>, vector<16x1xf32>
    %30 = vector.broadcast %29 : vector<16x1xf32> to vector<16x32xf32>
    %31 = arith.addf %28, %30 : vector<16x32xf32>
    %c0_15 = arith.constant 0 : index
    %c0_16 = arith.constant 0 : index
    %32 = vector.load %arg6[%c0_15, %c0_16] : memref<16x32xf32, #tpu.memory_space<vmem>>, vector<16x32xf32>
    tpu.vector_store %arg6[%c0_15, %c0_16], %31 {strides = array<i32>} : memref<16x32xf32, #tpu.memory_space<vmem>>, vector<16x32xf32>,
    return
  }
  func.func @transform_0(%arg0: i32) -> (i32, i32) {
    %c0_i32 = arith.constant 0 : i32
    %c0_i32_0 = arith.constant 0 : i32
    %c0_i32_1 = arith.constant 0 : i32
    return %c0_i32, %c0_i32_0 : i32, i32
  }
  func.func @transform_1(%arg0: i32) -> (i32, i32) {
    %c0_i32 = arith.constant 0 : i32
    %c0_i32_0 = arith.constant 0 : i32
    %c0_i32_1 = arith.constant 0 : i32
    return %c0_i32, %c0_i32_0 : i32, i32
  }
  func.func @transform_2(%arg0: i32) -> (i32, i32) {
    %c0_i32 = arith.constant 0 : i32
    %c0_i32_0 = arith.constant 0 : i32
    %c0_i32_1 = arith.constant 0 : i32
    return %c0_i32, %c0_i32_0 : i32, i32
  }
  func.func @transform_3(%arg0: i32) -> (i32, i32) {
    %c0_i32 = arith.constant 0 : i32
    %c0_i32_0 = arith.constant 0 : i32
    %c0_i32_1 = arith.constant 0 : i32
    return %c0_i32, %c0_i32_0 : i32, i32
  }
  func.func @transform_4(%arg0: i32) -> (i32, i32) {
    %c0_i32 = arith.constant 0 : i32
    %c0_i32_0 = arith.constant 0 : i32
    %c0_i32_1 = arith.constant 0 : i32
    return %c0_i32, %c0_i32_0 : i32, i32
  }
  func.func @transform_5(%arg0: i32) -> (i32, i32) {
    %c0_i32 = arith.constant 0 : i32
    %c0_i32_0 = arith.constant 0 : i32
    %c0_i32_1 = arith.constant 0 : i32
    return %c0_i32, %c0_i32_0 : i32, i32
  }
}

module attributes {stable_mosaic.version = 11 : i64} {
  func.func @_conv_pool_bn_kernel(%arg0: i32, %arg1: memref<144x8xf32, #tpu.memory_space<vmem>>, %arg2: memref<32x144xf32, #tpu.memory_space<vmem>>, %arg3: memref<32x1xf32, #tpu.memory_space<vmem>>, %arg4: memref<32x1xf32, #tpu.memory_space<vmem>>, %arg5: memref<32x1xf32, #tpu.memory_space<vmem>>, %arg6: memref<32x8xf32, #tpu.memory_space<vmem>>) attributes {dimension_semantics = [#tpu.dimension_semantics<arbitrary>], iteration_bounds = array<i64: 1>, scalar_prefetch = 0 : i64, scratch_operands = 0 : i64, tpu.core_type = #tpu.core_type<tc>, window_params = [{pipeline_mode = #tpu.pipeline_mode<synchronous>, transform_indices = @transform_0, window_bounds = array<i64: 144, 8>}, {pipeline_mode = #tpu.pipeline_mode<synchronous>, transform_indices = @transform_1, window_bounds = array<i64: 32, 144>}, {pipeline_mode = #tpu.pipeline_mode<synchronous>, transform_indices = @transform_2, window_bounds = array<i64: 32, 1>}, {pipeline_mode = #tpu.pipeline_mode<synchronous>, transform_indices = @transform_3, window_bounds = array<i64: 32, 1>}, {pipeline_mode = #tpu.pipeline_mode<synchronous>, transform_indices = @transform_4, window_bounds = array<i64: 32, 1>}, {pipeline_mode = #tpu.pipeline_mode<synchronous>, transform_indices = @transform_5, window_bounds = array<i64: 32, 8>}]} {
    %c0 = arith.constant 0 : index
    %c0_0 = arith.constant 0 : index
    %0 = vector.load %arg2[%c0, %c0_0] : memref<32x144xf32, #tpu.memory_space<vmem>>, vector<32x144xf32>
    %c0_1 = arith.constant 0 : index
    %c0_2 = arith.constant 0 : index
    %1 = vector.load %arg1[%c0_1, %c0_2] : memref<144x8xf32, #tpu.memory_space<vmem>>, vector<144x8xf32>
    %cst = arith.constant dense<0.000000e+00> : vector<32x8xf32>
    %2 = tpu.matmul %0, %1, %cst {dimension_numbers = #tpu.dot_dimension_numbers<[1], [0], [0], [1], [0, 0, 1, 1], [], []>} : vector<32x144xf32>, vector<144x8xf32>, vector<32x8xf32> -> vector<32x8xf32>
    %c0_3 = arith.constant 0 : index
    %c0_4 = arith.constant 0 : index
    %3 = vector.load %arg3[%c0_3, %c0_4] : memref<32x1xf32, #tpu.memory_space<vmem>>, vector<32x1xf32>
    %4 = vector.broadcast %3 : vector<32x1xf32> to vector<32x8xf32>
    %5 = arith.addf %2, %4 : vector<32x8xf32>
    %cst_5 = arith.constant 0.000000e+00 : f32
    %6 = vector.broadcast %cst_5 : f32 to vector<32x8xf32>
    %7 = arith.maximumf %5, %6 : vector<32x8xf32>
    %cst_6 = arith.constant dense<0.000000e+00> : vector<32xf32>
    %8 = vector.multi_reduction <add>, %7, %cst_6 [1] : vector<32x8xf32> to vector<32xf32>
    %9 = vector.shape_cast %8 : vector<32xf32> to vector<32x1xf32>
    %cst_7 = arith.constant 8.000000e+00 : f32
    %10 = vector.broadcast %cst_7 : f32 to vector<32x1xf32>
    %11 = arith.divf %9, %10 : vector<32x1xf32>
    %12 = arith.mulf %7, %7 : vector<32x8xf32>
    %cst_8 = arith.constant dense<0.000000e+00> : vector<32xf32>
    %13 = vector.multi_reduction <add>, %12, %cst_8 [1] : vector<32x8xf32> to vector<32xf32>
    %14 = vector.shape_cast %13 : vector<32xf32> to vector<32x1xf32>
    %cst_9 = arith.constant 8.000000e+00 : f32
    %15 = vector.broadcast %cst_9 : f32 to vector<32x1xf32>
    %16 = arith.divf %14, %15 : vector<32x1xf32>
    %17 = arith.mulf %11, %11 : vector<32x1xf32>
    %18 = arith.subf %16, %17 : vector<32x1xf32>
    %cst_10 = arith.constant 9.99999974E-6 : f32
    %19 = vector.broadcast %cst_10 : f32 to vector<32x1xf32>
    %20 = arith.addf %18, %19 : vector<32x1xf32>
    %21 = math.rsqrt %20 : vector<32x1xf32>
    %22 = vector.broadcast %11 : vector<32x1xf32> to vector<32x8xf32>
    %23 = arith.subf %7, %22 : vector<32x8xf32>
    %24 = vector.broadcast %21 : vector<32x1xf32> to vector<32x8xf32>
    %25 = arith.mulf %23, %24 : vector<32x8xf32>
    %c0_11 = arith.constant 0 : index
    %c0_12 = arith.constant 0 : index
    %26 = vector.load %arg4[%c0_11, %c0_12] : memref<32x1xf32, #tpu.memory_space<vmem>>, vector<32x1xf32>
    %27 = vector.broadcast %26 : vector<32x1xf32> to vector<32x8xf32>
    %28 = arith.mulf %25, %27 : vector<32x8xf32>
    %c0_13 = arith.constant 0 : index
    %c0_14 = arith.constant 0 : index
    %29 = vector.load %arg5[%c0_13, %c0_14] : memref<32x1xf32, #tpu.memory_space<vmem>>, vector<32x1xf32>
    %30 = vector.broadcast %29 : vector<32x1xf32> to vector<32x8xf32>
    %31 = arith.addf %28, %30 : vector<32x8xf32>
    %c0_15 = arith.constant 0 : index
    %c0_16 = arith.constant 0 : index
    %32 = vector.load %arg6[%c0_15, %c0_16] : memref<32x8xf32, #tpu.memory_space<vmem>>, vector<32x8xf32>
    tpu.vector_store %arg6[%c0_15, %c0_16], %31 {strides = array<i32>} : memref<32x8xf32, #tpu.memory_space<vmem>>, vector<32x8xf32>,
    return
  }
  func.func @transform_0(%arg0: i32) -> (i32, i32) {
    %c0_i32 = arith.constant 0 : i32
    %c0_i32_0 = arith.constant 0 : i32
    %c0_i32_1 = arith.constant 0 : i32
    return %c0_i32, %c0_i32_0 : i32, i32
  }
  func.func @transform_1(%arg0: i32) -> (i32, i32) {
    %c0_i32 = arith.constant 0 : i32
    %c0_i32_0 = arith.constant 0 : i32
    %c0_i32_1 = arith.constant 0 : i32
    return %c0_i32, %c0_i32_0 : i32, i32
  }
  func.func @transform_2(%arg0: i32) -> (i32, i32) {
    %c0_i32 = arith.constant 0 : i32
    %c0_i32_0 = arith.constant 0 : i32
    %c0_i32_1 = arith.constant 0 : i32
    return %c0_i32, %c0_i32_0 : i32, i32
  }
  func.func @transform_3(%arg0: i32) -> (i32, i32) {
    %c0_i32 = arith.constant 0 : i32
    %c0_i32_0 = arith.constant 0 : i32
    %c0_i32_1 = arith.constant 0 : i32
    return %c0_i32, %c0_i32_0 : i32, i32
  }
  func.func @transform_4(%arg0: i32) -> (i32, i32) {
    %c0_i32 = arith.constant 0 : i32
    %c0_i32_0 = arith.constant 0 : i32
    %c0_i32_1 = arith.constant 0 : i32
    return %c0_i32, %c0_i32_0 : i32, i32
  }
  func.func @transform_5(%arg0: i32) -> (i32, i32) {
    %c0_i32 = arith.constant 0 : i32
    %c0_i32_0 = arith.constant 0 : i32
    %c0_i32_1 = arith.constant 0 : i32
    return %c0_i32, %c0_i32_0 : i32, i32
  }
}

module attributes {stable_mosaic.version = 11 : i64} {
  func.func @_fc_chain_kernel(%arg0: i32, %arg1: memref<2x128xf32, #tpu.memory_space<vmem>>, %arg2: memref<2x4xf32, #tpu.memory_space<vmem>>, %arg3: memref<128x64xf32, #tpu.memory_space<vmem>>, %arg4: memref<1x64xf32, #tpu.memory_space<vmem>>, %arg5: memref<64x16xf32, #tpu.memory_space<vmem>>, %arg6: memref<1x16xf32, #tpu.memory_space<vmem>>, %arg7: memref<16x8xf32, #tpu.memory_space<vmem>>, %arg8: memref<1x8xf32, #tpu.memory_space<vmem>>, %arg9: memref<8x12xf32, #tpu.memory_space<vmem>>, %arg10: memref<4x12xf32, #tpu.memory_space<vmem>>, %arg11: memref<1x12xf32, #tpu.memory_space<vmem>>, %arg12: memref<12x1xf32, #tpu.memory_space<vmem>>, %arg13: memref<1x1xf32, #tpu.memory_space<vmem>>, %arg14: memref<2x1xf32, #tpu.memory_space<vmem>>) attributes {dimension_semantics = [#tpu.dimension_semantics<arbitrary>], iteration_bounds = array<i64: 1>, scalar_prefetch = 0 : i64, scratch_operands = 0 : i64, tpu.core_type = #tpu.core_type<tc>, window_params = [{pipeline_mode = #tpu.pipeline_mode<synchronous>, transform_indices = @transform_0, window_bounds = array<i64: 2, 128>}, {pipeline_mode = #tpu.pipeline_mode<synchronous>, transform_indices = @transform_1, window_bounds = array<i64: 2, 4>}, {pipeline_mode = #tpu.pipeline_mode<synchronous>, transform_indices = @transform_2, window_bounds = array<i64: 128, 64>}, {pipeline_mode = #tpu.pipeline_mode<synchronous>, transform_indices = @transform_3, window_bounds = array<i64: 1, 64>}, {pipeline_mode = #tpu.pipeline_mode<synchronous>, transform_indices = @transform_4, window_bounds = array<i64: 64, 16>}, {pipeline_mode = #tpu.pipeline_mode<synchronous>, transform_indices = @transform_5, window_bounds = array<i64: 1, 16>}, {pipeline_mode = #tpu.pipeline_mode<synchronous>, transform_indices = @transform_6, window_bounds = array<i64: 16, 8>}, {pipeline_mode = #tpu.pipeline_mode<synchronous>, transform_indices = @transform_7, window_bounds = array<i64: 1, 8>}, {pipeline_mode = #tpu.pipeline_mode<synchronous>, transform_indices = @transform_8, window_bounds = array<i64: 8, 12>}, {pipeline_mode = #tpu.pipeline_mode<synchronous>, transform_indices = @transform_9, window_bounds = array<i64: 4, 12>}, {pipeline_mode = #tpu.pipeline_mode<synchronous>, transform_indices = @transform_10, window_bounds = array<i64: 1, 12>}, {pipeline_mode = #tpu.pipeline_mode<synchronous>, transform_indices = @transform_11, window_bounds = array<i64: 12, 1>}, {pipeline_mode = #tpu.pipeline_mode<synchronous>, transform_indices = @transform_12, window_bounds = array<i64: 1, 1>}, {pipeline_mode = #tpu.pipeline_mode<synchronous>, transform_indices = @transform_13, window_bounds = array<i64: 2, 1>}]} {
    %c0 = arith.constant 0 : index
    %c0_0 = arith.constant 0 : index
    %0 = vector.load %arg1[%c0, %c0_0] : memref<2x128xf32, #tpu.memory_space<vmem>>, vector<2x128xf32>
    %c0_1 = arith.constant 0 : index
    %c0_2 = arith.constant 0 : index
    %1 = vector.load %arg3[%c0_1, %c0_2] : memref<128x64xf32, #tpu.memory_space<vmem>>, vector<128x64xf32>
    %cst = arith.constant dense<0.000000e+00> : vector<2x64xf32>
    %2 = tpu.matmul %0, %1, %cst {dimension_numbers = #tpu.dot_dimension_numbers<[1], [0], [0], [1], [0, 0, 1, 1], [], []>} : vector<2x128xf32>, vector<128x64xf32>, vector<2x64xf32> -> vector<2x64xf32>
    %c0_3 = arith.constant 0 : index
    %c0_4 = arith.constant 0 : index
    %3 = vector.load %arg4[%c0_3, %c0_4] : memref<1x64xf32, #tpu.memory_space<vmem>>, vector<1x64xf32>
    %4 = vector.broadcast %3 : vector<1x64xf32> to vector<2x64xf32>
    %5 = arith.addf %2, %4 : vector<2x64xf32>
    %cst_5 = arith.constant 0.000000e+00 : f32
    %6 = vector.broadcast %cst_5 : f32 to vector<2x64xf32>
    %7 = arith.maximumf %5, %6 : vector<2x64xf32>
    %c0_6 = arith.constant 0 : index
    %c0_7 = arith.constant 0 : index
    %8 = vector.load %arg5[%c0_6, %c0_7] : memref<64x16xf32, #tpu.memory_space<vmem>>, vector<64x16xf32>
    %cst_8 = arith.constant dense<0.000000e+00> : vector<2x16xf32>
    %9 = tpu.matmul %7, %8, %cst_8 {dimension_numbers = #tpu.dot_dimension_numbers<[1], [0], [0], [1], [0, 0, 1, 1], [], []>} : vector<2x64xf32>, vector<64x16xf32>, vector<2x16xf32> -> vector<2x16xf32>
    %c0_9 = arith.constant 0 : index
    %c0_10 = arith.constant 0 : index
    %10 = vector.load %arg6[%c0_9, %c0_10] : memref<1x16xf32, #tpu.memory_space<vmem>>, vector<1x16xf32>
    %11 = vector.broadcast %10 : vector<1x16xf32> to vector<2x16xf32>
    %12 = arith.addf %9, %11 : vector<2x16xf32>
    %cst_11 = arith.constant 0.000000e+00 : f32
    %13 = vector.broadcast %cst_11 : f32 to vector<2x16xf32>
    %14 = arith.maximumf %12, %13 : vector<2x16xf32>
    %c0_12 = arith.constant 0 : index
    %c0_13 = arith.constant 0 : index
    %15 = vector.load %arg7[%c0_12, %c0_13] : memref<16x8xf32, #tpu.memory_space<vmem>>, vector<16x8xf32>
    %cst_14 = arith.constant dense<0.000000e+00> : vector<2x8xf32>
    %16 = tpu.matmul %14, %15, %cst_14 {dimension_numbers = #tpu.dot_dimension_numbers<[1], [0], [0], [1], [0, 0, 1, 1], [], []>} : vector<2x16xf32>, vector<16x8xf32>, vector<2x8xf32> -> vector<2x8xf32>
    %c0_15 = arith.constant 0 : index
    %c0_16 = arith.constant 0 : index
    %17 = vector.load %arg8[%c0_15, %c0_16] : memref<1x8xf32, #tpu.memory_space<vmem>>, vector<1x8xf32>
    %18 = vector.broadcast %17 : vector<1x8xf32> to vector<2x8xf32>
    %19 = arith.addf %16, %18 : vector<2x8xf32>
    %cst_17 = arith.constant 0.000000e+00 : f32
    %20 = vector.broadcast %cst_17 : f32 to vector<2x8xf32>
    %21 = arith.maximumf %19, %20 : vector<2x8xf32>
    %c0_18 = arith.constant 0 : index
    %c0_19 = arith.constant 0 : index
    %22 = vector.load %arg9[%c0_18, %c0_19] : memref<8x12xf32, #tpu.memory_space<vmem>>, vector<8x12xf32>
    %cst_20 = arith.constant dense<0.000000e+00> : vector<2x12xf32>
    %23 = tpu.matmul %21, %22, %cst_20 {dimension_numbers = #tpu.dot_dimension_numbers<[1], [0], [0], [1], [0, 0, 1, 1], [], []>} : vector<2x8xf32>, vector<8x12xf32>, vector<2x12xf32> -> vector<2x12xf32>
    %c0_21 = arith.constant 0 : index
    %c0_22 = arith.constant 0 : index
    %24 = vector.load %arg2[%c0_21, %c0_22] : memref<2x4xf32, #tpu.memory_space<vmem>>, vector<2x4xf32>
    %c0_23 = arith.constant 0 : index
    %c0_24 = arith.constant 0 : index
    %25 = vector.load %arg10[%c0_23, %c0_24] : memref<4x12xf32, #tpu.memory_space<vmem>>, vector<4x12xf32>
    %cst_25 = arith.constant dense<0.000000e+00> : vector<2x12xf32>
    %26 = tpu.matmul %24, %25, %cst_25 {dimension_numbers = #tpu.dot_dimension_numbers<[1], [0], [0], [1], [0, 0, 1, 1], [], []>} : vector<2x4xf32>, vector<4x12xf32>, vector<2x12xf32> -> vector<2x12xf32>
    %27 = arith.addf %23, %26 : vector<2x12xf32>
    %c0_26 = arith.constant 0 : index
    %c0_27 = arith.constant 0 : index
    %28 = vector.load %arg11[%c0_26, %c0_27] : memref<1x12xf32, #tpu.memory_space<vmem>>, vector<1x12xf32>
    %29 = vector.broadcast %28 : vector<1x12xf32> to vector<2x12xf32>
    %30 = arith.addf %27, %29 : vector<2x12xf32>
    %cst_28 = arith.constant 0.000000e+00 : f32
    %31 = vector.broadcast %cst_28 : f32 to vector<2x12xf32>
    %32 = arith.maximumf %30, %31 : vector<2x12xf32>
    %c0_29 = arith.constant 0 : index
    %c0_30 = arith.constant 0 : index
    %33 = vector.load %arg12[%c0_29, %c0_30] : memref<12x1xf32, #tpu.memory_space<vmem>>, vector<12x1xf32>
    %cst_31 = arith.constant dense<0.000000e+00> : vector<2x1xf32>
    %34 = tpu.matmul %32, %33, %cst_31 {dimension_numbers = #tpu.dot_dimension_numbers<[1], [0], [0], [1], [0, 0, 1, 1], [], []>} : vector<2x12xf32>, vector<12x1xf32>, vector<2x1xf32> -> vector<2x1xf32>
    %c0_32 = arith.constant 0 : index
    %c0_33 = arith.constant 0 : index
    %35 = vector.load %arg13[%c0_32, %c0_33] : memref<1x1xf32, #tpu.memory_space<vmem>>, vector<1x1xf32>
    %36 = vector.broadcast %35 : vector<1x1xf32> to vector<2x1xf32>
    %37 = arith.addf %34, %36 : vector<2x1xf32>
    %c0_34 = arith.constant 0 : index
    %c0_35 = arith.constant 0 : index
    %38 = vector.load %arg14[%c0_34, %c0_35] : memref<2x1xf32, #tpu.memory_space<vmem>>, vector<2x1xf32>
    tpu.vector_store %arg14[%c0_34, %c0_35], %37 {strides = array<i32>} : memref<2x1xf32, #tpu.memory_space<vmem>>, vector<2x1xf32>,
    return
  }
  func.func @transform_0(%arg0: i32) -> (i32, i32) {
    %c0_i32 = arith.constant 0 : i32
    %c0_i32_0 = arith.constant 0 : i32
    %c0_i32_1 = arith.constant 0 : i32
    return %c0_i32, %c0_i32_0 : i32, i32
  }
  func.func @transform_1(%arg0: i32) -> (i32, i32) {
    %c0_i32 = arith.constant 0 : i32
    %c0_i32_0 = arith.constant 0 : i32
    %c0_i32_1 = arith.constant 0 : i32
    return %c0_i32, %c0_i32_0 : i32, i32
  }
  func.func @transform_2(%arg0: i32) -> (i32, i32) {
    %c0_i32 = arith.constant 0 : i32
    %c0_i32_0 = arith.constant 0 : i32
    %c0_i32_1 = arith.constant 0 : i32
    return %c0_i32, %c0_i32_0 : i32, i32
  }
  func.func @transform_3(%arg0: i32) -> (i32, i32) {
    %c0_i32 = arith.constant 0 : i32
    %c0_i32_0 = arith.constant 0 : i32
    %c0_i32_1 = arith.constant 0 : i32
    return %c0_i32, %c0_i32_0 : i32, i32
  }
  func.func @transform_4(%arg0: i32) -> (i32, i32) {
    %c0_i32 = arith.constant 0 : i32
    %c0_i32_0 = arith.constant 0 : i32
    %c0_i32_1 = arith.constant 0 : i32
    return %c0_i32, %c0_i32_0 : i32, i32
  }
  func.func @transform_5(%arg0: i32) -> (i32, i32) {
    %c0_i32 = arith.constant 0 : i32
    %c0_i32_0 = arith.constant 0 : i32
    %c0_i32_1 = arith.constant 0 : i32
    return %c0_i32, %c0_i32_0 : i32, i32
  }
  func.func @transform_6(%arg0: i32) -> (i32, i32) {
    %c0_i32 = arith.constant 0 : i32
    %c0_i32_0 = arith.constant 0 : i32
    %c0_i32_1 = arith.constant 0 : i32
    return %c0_i32, %c0_i32_0 : i32, i32
  }
  func.func @transform_7(%arg0: i32) -> (i32, i32) {
    %c0_i32 = arith.constant 0 : i32
    %c0_i32_0 = arith.constant 0 : i32
    %c0_i32_1 = arith.constant 0 : i32
    return %c0_i32, %c0_i32_0 : i32, i32
  }
  func.func @transform_8(%arg0: i32) -> (i32, i32) {
    %c0_i32 = arith.constant 0 : i32
    %c0_i32_0 = arith.constant 0 : i32
    %c0_i32_1 = arith.constant 0 : i32
    return %c0_i32, %c0_i32_0 : i32, i32
  }
  func.func @transform_9(%arg0: i32) -> (i32, i32) {
    %c0_i32 = arith.constant 0 : i32
    %c0_i32_0 = arith.constant 0 : i32
    %c0_i32_1 = arith.constant 0 : i32
    return %c0_i32, %c0_i32_0 : i32, i32
  }
  func.func @transform_10(%arg0: i32) -> (i32, i32) {
    %c0_i32 = arith.constant 0 : i32
    %c0_i32_0 = arith.constant 0 : i32
    %c0_i32_1 = arith.constant 0 : i32
    return %c0_i32, %c0_i32_0 : i32, i32
  }
  func.func @transform_11(%arg0: i32) -> (i32, i32) {
    %c0_i32 = arith.constant 0 : i32
    %c0_i32_0 = arith.constant 0 : i32
    %c0_i32_1 = arith.constant 0 : i32
    return %c0_i32, %c0_i32_0 : i32, i32
  }
  func.func @transform_12(%arg0: i32) -> (i32, i32) {
    %c0_i32 = arith.constant 0 : i32
    %c0_i32_0 = arith.constant 0 : i32
    %c0_i32_1 = arith.constant 0 : i32
    return %c0_i32, %c0_i32_0 : i32, i32
  }
  func.func @transform_13(%arg0: i32) -> (i32, i32) {
    %c0_i32 = arith.constant 0 : i32
    %c0_i32_0 = arith.constant 0 : i32
    %c0_i32_1 = arith.constant 0 : i32
    return %c0_i32, %c0_i32_0 : i32, i32
  }
}

</mosaic_0001>

<llo_original>
// kernel: net_forward.5
$region0: #{net_forward.5}
  #allocation0 [shape = 'u32[]', space=smem, size = 0x4, offset = 0x4, fixed_abs, tag = 'smem constant byte address 0x4 - core index']
  #allocation1 [shape = 'u32[144,128]{1,0:T(1,128)}', space=vmem, size = 0x12000, scoped, tag = 'internal scratch']
  %s0 = inlined_call_operand.vmem [shape: f32[18,8192], index: 0, kind: input, shape index: {}]
  %s1 = inlined_call_operand.vmem [shape: f32[4,18], index: 1, kind: input, shape index: {}]
  %s2 = inlined_call_operand.vmem [shape: f32[4,1], index: 2, kind: input, shape index: {}]
  %s3 = inlined_call_operand.vmem [shape: f32[4,1], index: 3, kind: input, shape index: {}]
  %s4 = inlined_call_operand.vmem [shape: f32[4,1], index: 4, kind: input, shape index: {}]
  %s5 = inlined_call_operand.vmem [shape: f32[4,2048], index: 5, kind: output, shape index: {}]
  %s6 = sld [smem:[#allocation0]]
  $region30: #{net_forward.5} parent=0
    _
  %s8 = ssub.s32 1, %s6
  %s9 = scalar_select 0, %s8, %s6
  // Predicated region
  $region2: #{net_forward.5} parent=0 // pred_check
    _
  $region3: #{net_forward.5} parent=0 // pred_check_branch
    %11 = sbr.rel (0) target = $region5
  $region4: #{net_forward.5} parent=0 // pred_region
    _
  $region5: #{net_forward.5} parent=0 // pred_fallthru
    _
  // Predicated region
  $region6: #{net_forward.5} parent=0 // pred_check
    _
  $region7: #{net_forward.5} parent=0 // pred_check_branch
    %13 = sbr.rel (0) target = $region9
  $region8: #{net_forward.5} parent=0 // pred_region
    _
  $region9: #{net_forward.5} parent=0 // pred_fallthru
    _
  // Predicated region
  $region10: #{net_forward.5} parent=0 // pred_check
    _
  $region11: #{net_forward.5} parent=0 // pred_check_branch
    %15 = sbr.rel (0) target = $region13
  $region12: #{net_forward.5} parent=0 // pred_region
    _
  $region13: #{net_forward.5} parent=0 // pred_fallthru
    _
  // Predicated region
  $region14: #{net_forward.5} parent=0 // pred_check
    _
  $region15: #{net_forward.5} parent=0 // pred_check_branch
    %17 = sbr.rel (0) target = $region17
  $region16: #{net_forward.5} parent=0 // pred_region
    _
  $region17: #{net_forward.5} parent=0 // pred_fallthru
    _
  // Predicated region
  $region18: #{net_forward.5} parent=0 // pred_check
    _
  $region19: #{net_forward.5} parent=0 // pred_check_branch
    %19 = sbr.rel (0) target = $region21
  $region20: #{net_forward.5} parent=0 // pred_region
    _
  $region21: #{net_forward.5} parent=0 // pred_fallthru
    _
  %v20 = vld [vmem:[%s1] sm:$0xf]
  %v21 = vld [vmem:[%s0] sm:$0xff]
  %v22 = vld [vmem:[%s0 + $0x8] sm:$0xff]
  %v23 = vld [vmem:[%s0 + $0x10] sm:$0xff]
  %v24 = vld [vmem:[%s0 + $0x18] sm:$0xff]
  %v25 = vld [vmem:[%s0 + $0x20] sm:$0xff]
  %v26 = vld [vmem:[%s0 + $0x28] sm:$0xff]
  %v27 = vld [vmem:[%s0 + $0x30] sm:$0xff]
  %v28 = vld [vmem:[%s0 + $0x38] sm:$0xff]
  %v29 = vld [vmem:[%s0 + $0x40] sm:$0xff]
  %v30 = vld [vmem:[%s0 + $0x48] sm:$0xff]
  %v31 = vld [vmem:[%s0 + $0x50] sm:$0xff]
  %v32 = vld [vmem:[%s0 + $0x58] sm:$0xff]
  %v33 = vld [vmem:[%s0 + $0x60] sm:$0xff]
  %v34 = vld [vmem:[%s0 + $0x68] sm:$0xff]
  %v35 = vld [vmem:[%s0 + $0x70] sm:$0xff]
  %v36 = vld [vmem:[%s0 + $0x78] sm:$0xff]
  %v37 = vld [vmem:[%s0 + $0x80] sm:$0xff]
  %v38 = vld [vmem:[%s0 + $0x88] sm:$0xff]
  %v39 = vld [vmem:[%s0 + $0x90] sm:$0xff]
  %v40 = vld [vmem:[%s0 + $0x98] sm:$0xff]
  %v41 = vld [vmem:[%s0 + $0xa0] sm:$0xff]
  %v42 = vld [vmem:[%s0 + $0xa8] sm:$0xff]
  %v43 = vld [vmem:[%s0 + $0xb0] sm:$0xff]
  %v44 = vld [vmem:[%s0 + $0xb8] sm:$0xff]
  %v45 = vld [vmem:[%s0 + $0xc0] sm:$0xff]
  %v46 = vld [vmem:[%s0 + $0xc8] sm:$0xff]
  %v47 = vld [vmem:[%s0 + $0xd0] sm:$0xff]
  %v48 = vld [vmem:[%s0 + $0xd8] sm:$0xff]
  %v49 = vld [vmem:[%s0 + $0xe0] sm:$0xff]
  %v50 = vld [vmem:[%s0 + $0xe8] sm:$0xff]
  %v51 = vld [vmem:[%s0 + $0xf0] sm:$0xff]
  %v52 = vld [vmem:[%s0 + $0xf8] sm:$0xff]
  %v53 = vld [vmem:[%s0 + $0x100] sm:$0xff]
  %v54 = vld [vmem:[%s0 + $0x108] sm:$0xff]
  %v55 = vld [vmem:[%s0 + $0x110] sm:$0xff]
  %v56 = vld [vmem:[%s0 + $0x118] sm:$0xff]
  %v57 = vld [vmem:[%s0 + $0x120] sm:$0xff]
  %v58 = vld [vmem:[%s0 + $0x128] sm:$0xff]
  %v59 = vld [vmem:[%s0 + $0x130] sm:$0xff]
  %v60 = vld [vmem:[%s0 + $0x138] sm:$0xff]
  %v61 = vld [vmem:[%s0 + $0x140] sm:$0xff]
  %v62 = vld [vmem:[%s0 + $0x148] sm:$0xff]
  %v63 = vld [vmem:[%s0 + $0x150] sm:$0xff]
  %v64 = vld [vmem:[%s0 + $0x158] sm:$0xff]
  %v65 = vld [vmem:[%s0 + $0x160] sm:$0xff]
  %v66 = vld [vmem:[%s0 + $0x168] sm:$0xff]
  %v67 = vld [vmem:[%s0 + $0x170] sm:$0xff]
  %v68 = vld [vmem:[%s0 + $0x178] sm:$0xff]
  %v69 = vld [vmem:[%s0 + $0x180] sm:$0xff]
  %v70 = vld [vmem:[%s0 + $0x188] sm:$0xff]
  %v71 = vld [vmem:[%s0 + $0x190] sm:$0xff]
  %v72 = vld [vmem:[%s0 + $0x198] sm:$0xff]
  %v73 = vld [vmem:[%s0 + $0x1a0] sm:$0xff]
  %v74 = vld [vmem:[%s0 + $0x1a8] sm:$0xff]
  %v75 = vld [vmem:[%s0 + $0x1b0] sm:$0xff]
  %v76 = vld [vmem:[%s0 + $0x1b8] sm:$0xff]
  %v77 = vld [vmem:[%s0 + $0x1c0] sm:$0xff]
  %v78 = vld [vmem:[%s0 + $0x1c8] sm:$0xff]
  %v79 = vld [vmem:[%s0 + $0x1d0] sm:$0xff]
  %v80 = vld [vmem:[%s0 + $0x1d8] sm:$0xff]
  %v81 = vld [vmem:[%s0 + $0x1e0] sm:$0xff]
  %v82 = vld [vmem:[%s0 + $0x1e8] sm:$0xff]
  %v83 = vld [vmem:[%s0 + $0x1f0] sm:$0xff]
  %v84 = vld [vmem:[%s0 + $0x1f8] sm:$0xff]
  %v85 = vld [vmem:[%s0 + $0x200] sm:$0xff]
  %v86 = vld [vmem:[%s0 + $0x208] sm:$0xff]
  %v87 = vld [vmem:[%s0 + $0x210] sm:$0xff]
  %v88 = vld [vmem:[%s0 + $0x218] sm:$0xff]
  %v89 = vld [vmem:[%s0 + $0x220] sm:$0xff]
  %v90 = vld [vmem:[%s0 + $0x228] sm:$0xff]
  %v91 = vld [vmem:[%s0 + $0x230] sm:$0xff]
  %v92 = vld [vmem:[%s0 + $0x238] sm:$0xff]
  %v93 = vld [vmem:[%s0 + $0x240] sm:$0xff]
  %v94 = vld [vmem:[%s0 + $0x248] sm:$0xff]
  %v95 = vld [vmem:[%s0 + $0x250] sm:$0xff]
  %v96 = vld [vmem:[%s0 + $0x258] sm:$0xff]
  %v97 = vld [vmem:[%s0 + $0x260] sm:$0xff]
  %v98 = vld [vmem:[%s0 + $0x268] sm:$0xff]
  %v99 = vld [vmem:[%s0 + $0x270] sm:$0xff]
  %v100 = vld [vmem:[%s0 + $0x278] sm:$0xff]
  %v101 = vld [vmem:[%s0 + $0x280] sm:$0xff]
  %v102 = vld [vmem:[%s0 + $0x288] sm:$0xff]
  %v103 = vld [vmem:[%s0 + $0x290] sm:$0xff]
  %v104 = vld [vmem:[%s0 + $0x298] sm:$0xff]
  %v105 = vld [vmem:[%s0 + $0x2a0] sm:$0xff]
  %v106 = vld [vmem:[%s0 + $0x2a8] sm:$0xff]
  %v107 = vld [vmem:[%s0 + $0x2b0] sm:$0xff]
  %v108 = vld [vmem:[%s0 + $0x2b8] sm:$0xff]
  %v109 = vld [vmem:[%s0 + $0x2c0] sm:$0xff]
  %v110 = vld [vmem:[%s0 + $0x2c8] sm:$0xff]
  %v111 = vld [vmem:[%s0 + $0x2d0] sm:$0xff]
  %v112 = vld [vmem:[%s0 + $0x2d8] sm:$0xff]
  %v113 = vld [vmem:[%s0 + $0x2e0] sm:$0xff]
  %v114 = vld [vmem:[%s0 + $0x2e8] sm:$0xff]
  %v115 = vld [vmem:[%s0 + $0x2f0] sm:$0xff]
  %v116 = vld [vmem:[%s0 + $0x2f8] sm:$0xff]
  %v117 = vld [vmem:[%s0 + $0x300] sm:$0xff]
  %v118 = vld [vmem:[%s0 + $0x308] sm:$0xff]
  %v119 = vld [vmem:[%s0 + $0x310] sm:$0xff]
  %v120 = vld [vmem:[%s0 + $0x318] sm:$0xff]
  %v121 = vld [vmem:[%s0 + $0x320] sm:$0xff]
  %v122 = vld [vmem:[%s0 + $0x328] sm:$0xff]
  %v123 = vld [vmem:[%s0 + $0x330] sm:$0xff]
  %v124 = vld [vmem:[%s0 + $0x338] sm:$0xff]
  %v125 = vld [vmem:[%s0 + $0x340] sm:$0xff]
  %v126 = vld [vmem:[%s0 + $0x348] sm:$0xff]
  %v127 = vld [vmem:[%s0 + $0x350] sm:$0xff]
  %v128 = vld [vmem:[%s0 + $0x358] sm:$0xff]
  %v129 = vld [vmem:[%s0 + $0x360] sm:$0xff]
  %v130 = vld [vmem:[%s0 + $0x368] sm:$0xff]
  %v131 = vld [vmem:[%s0 + $0x370] sm:$0xff]
  %v132 = vld [vmem:[%s0 + $0x378] sm:$0xff]
  %v133 = vld [vmem:[%s0 + $0x380] sm:$0xff]
  %v134 = vld [vmem:[%s0 + $0x388] sm:$0xff]
  %v135 = vld [vmem:[%s0 + $0x390] sm:$0xff]
  %v136 = vld [vmem:[%s0 + $0x398] sm:$0xff]
  %v137 = vld [vmem:[%s0 + $0x3a0] sm:$0xff]
  %v138 = vld [vmem:[%s0 + $0x3a8] sm:$0xff]
  %v139 = vld [vmem:[%s0 + $0x3b0] sm:$0xff]
  %v140 = vld [vmem:[%s0 + $0x3b8] sm:$0xff]
  %v141 = vld [vmem:[%s0 + $0x3c0] sm:$0xff]
  %v142 = vld [vmem:[%s0 + $0x3c8] sm:$0xff]
  %v143 = vld [vmem:[%s0 + $0x3d0] sm:$0xff]
  %v144 = vld [vmem:[%s0 + $0x3d8] sm:$0xff]
  %v145 = vld [vmem:[%s0 + $0x3e0] sm:$0xff]
  %v146 = vld [vmem:[%s0 + $0x3e8] sm:$0xff]
  %v147 = vld [vmem:[%s0 + $0x3f0] sm:$0xff]
  %v148 = vld [vmem:[%s0 + $0x3f8] sm:$0xff]
  %v149 = vld [vmem:[%s0 + $0x400] sm:$0x3]
  %v150 = vld [vmem:[%s0 + $0x408] sm:$0x3]
  %v151 = vld [vmem:[%s0 + $0x410] sm:$0x3]
  %v152 = vld [vmem:[%s0 + $0x418] sm:$0x3]
  %v153 = vld [vmem:[%s0 + $0x420] sm:$0x3]
  %v154 = vld [vmem:[%s0 + $0x428] sm:$0x3]
  %v155 = vld [vmem:[%s0 + $0x430] sm:$0x3]
  %v156 = vld [vmem:[%s0 + $0x438] sm:$0x3]
  %v157 = vld [vmem:[%s0 + $0x440] sm:$0x3]
  %v158 = vld [vmem:[%s0 + $0x448] sm:$0x3]
  %v159 = vld [vmem:[%s0 + $0x450] sm:$0x3]
  %v160 = vld [vmem:[%s0 + $0x458] sm:$0x3]
  %v161 = vld [vmem:[%s0 + $0x460] sm:$0x3]
  %v162 = vld [vmem:[%s0 + $0x468] sm:$0x3]
  %v163 = vld [vmem:[%s0 + $0x470] sm:$0x3]
  %v164 = vld [vmem:[%s0 + $0x478] sm:$0x3]
  %v165 = vld [vmem:[%s0 + $0x480] sm:$0x3]
  %v166 = vld [vmem:[%s0 + $0x488] sm:$0x3]
  %v167 = vld [vmem:[%s0 + $0x490] sm:$0x3]
  %v168 = vld [vmem:[%s0 + $0x498] sm:$0x3]
  %v169 = vld [vmem:[%s0 + $0x4a0] sm:$0x3]
  %v170 = vld [vmem:[%s0 + $0x4a8] sm:$0x3]
  %v171 = vld [vmem:[%s0 + $0x4b0] sm:$0x3]
  %v172 = vld [vmem:[%s0 + $0x4b8] sm:$0x3]
  %v173 = vld [vmem:[%s0 + $0x4c0] sm:$0x3]
  %v174 = vld [vmem:[%s0 + $0x4c8] sm:$0x3]
  %v175 = vld [vmem:[%s0 + $0x4d0] sm:$0x3]
  %v176 = vld [vmem:[%s0 + $0x4d8] sm:$0x3]
  %v177 = vld [vmem:[%s0 + $0x4e0] sm:$0x3]
  %v178 = vld [vmem:[%s0 + $0x4e8] sm:$0x3]
  %v179 = vld [vmem:[%s0 + $0x4f0] sm:$0x3]
  %v180 = vld [vmem:[%s0 + $0x4f8] sm:$0x3]
  %v181 = vld [vmem:[%s0 + $0x500] sm:$0x3]
  %v182 = vld [vmem:[%s0 + $0x508] sm:$0x3]
  %v183 = vld [vmem:[%s0 + $0x510] sm:$0x3]
  %v184 = vld [vmem:[%s0 + $0x518] sm:$0x3]
  %v185 = vld [vmem:[%s0 + $0x520] sm:$0x3]
  %v186 = vld [vmem:[%s0 + $0x528] sm:$0x3]
  %v187 = vld [vmem:[%s0 + $0x530] sm:$0x3]
  %v188 = vld [vmem:[%s0 + $0x538] sm:$0x3]
  %v189 = vld [vmem:[%s0 + $0x540] sm:$0x3]
  %v190 = vld [vmem:[%s0 + $0x548] sm:$0x3]
  %v191 = vld [vmem:[%s0 + $0x550] sm:$0x3]
  %v192 = vld [vmem:[%s0 + $0x558] sm:$0x3]
  %v193 = vld [vmem:[%s0 + $0x560] sm:$0x3]
  %v194 = vld [vmem:[%s0 + $0x568] sm:$0x3]
  %v195 = vld [vmem:[%s0 + $0x570] sm:$0x3]
  %v196 = vld [vmem:[%s0 + $0x578] sm:$0x3]
  %v197 = vld [vmem:[%s0 + $0x580] sm:$0x3]
  %v198 = vld [vmem:[%s0 + $0x588] sm:$0x3]
  %v199 = vld [vmem:[%s0 + $0x590] sm:$0x3]
  %v200 = vld [vmem:[%s0 + $0x598] sm:$0x3]
  %v201 = vld [vmem:[%s0 + $0x5a0] sm:$0x3]
  %v202 = vld [vmem:[%s0 + $0x5a8] sm:$0x3]
  %v203 = vld [vmem:[%s0 + $0x5b0] sm:$0x3]
  %v204 = vld [vmem:[%s0 + $0x5b8] sm:$0x3]
  %v205 = vld [vmem:[%s0 + $0x5c0] sm:$0x3]
  %v206 = vld [vmem:[%s0 + $0x5c8] sm:$0x3]
  %v207 = vld [vmem:[%s0 + $0x5d0] sm:$0x3]
  %v208 = vld [vmem:[%s0 + $0x5d8] sm:$0x3]
  %v209 = vld [vmem:[%s0 + $0x5e0] sm:$0x3]
  %v210 = vld [vmem:[%s0 + $0x5e8] sm:$0x3]
  %v211 = vld [vmem:[%s0 + $0x5f0] sm:$0x3]
  %v212 = vld [vmem:[%s0 + $0x5f8] sm:$0x3]
  %v213 = vld [vmem:[%s2] sm:$0xf]
  %215 = vset.pattern.permute.xlu0 0
  %216 = vperm.xlu0 %215, %v213
  %v217 = vpop.permute.xlu0 %216
  %vm219 = vcmask 146432
  %v221 = vsel %vm219, %v20, 0
  %vm223 = vcmask 1041408
  %v225 = vsel %vm223, %v149, 0
  %v228 = vsel %vm223, %v150, 0
  %v231 = vsel %vm223, %v151, 0
  %v234 = vsel %vm223, %v152, 0
  %v237 = vsel %vm223, %v153, 0
  %v240 = vsel %vm223, %v154, 0
  %v243 = vsel %vm223, %v155, 0
  %v246 = vsel %vm223, %v156, 0
  %v249 = vsel %vm223, %v157, 0
  %v252 = vsel %vm223, %v158, 0
  %v255 = vsel %vm223, %v159, 0
  %v258 = vsel %vm223, %v160, 0
  %v261 = vsel %vm223, %v161, 0
  %v264 = vsel %vm223, %v162, 0
  %v267 = vsel %vm223, %v163, 0
  %v270 = vsel %vm223, %v164, 0
  %v273 = vsel %vm223, %v165, 0
  %v276 = vsel %vm223, %v166, 0
  %v279 = vsel %vm223, %v167, 0
  %v282 = vsel %vm223, %v168, 0
  %v285 = vsel %vm223, %v169, 0
  %v288 = vsel %vm223, %v170, 0
  %v291 = vsel %vm223, %v171, 0
  %v294 = vsel %vm223, %v172, 0
  %v297 = vsel %vm223, %v173, 0
  %v300 = vsel %vm223, %v174, 0
  %v303 = vsel %vm223, %v175, 0
  %v306 = vsel %vm223, %v176, 0
  %v309 = vsel %vm223, %v177, 0
  %v312 = vsel %vm223, %v178, 0
  %v315 = vsel %vm223, %v179, 0
  %v318 = vsel %vm223, %v180, 0
  %v321 = vsel %vm223, %v181, 0
  %v324 = vsel %vm223, %v182, 0
  %v327 = vsel %vm223, %v183, 0
  %v330 = vsel %vm223, %v184, 0
  %v333 = vsel %vm223, %v185, 0
  %v336 = vsel %vm223, %v186, 0
  %v339 = vsel %vm223, %v187, 0
  %v342 = vsel %vm223, %v188, 0
  %v345 = vsel %vm223, %v189, 0
  %v348 = vsel %vm223, %v190, 0
  %v351 = vsel %vm223, %v191, 0
  %v354 = vsel %vm223, %v192, 0
  %v357 = vsel %vm223, %v193, 0
  %v360 = vsel %vm223, %v194, 0
  %v363 = vsel %vm223, %v195, 0
  %v366 = vsel %vm223, %v196, 0
  %v369 = vsel %vm223, %v197, 0
  %v372 = vsel %vm223, %v198, 0
  %v375 = vsel %vm223, %v199, 0
  %v378 = vsel %vm223, %v200, 0
  %v381 = vsel %vm223, %v201, 0
  %v384 = vsel %vm223, %v202, 0
  %v387 = vsel %vm223, %v203, 0
  %v390 = vsel %vm223, %v204, 0
  %v393 = vsel %vm223, %v205, 0
  %v396 = vsel %vm223, %v206, 0
  %v399 = vsel %vm223, %v207, 0
  %v402 = vsel %vm223, %v208, 0
  %v405 = vsel %vm223, %v209, 0
  %v408 = vsel %vm223, %v210, 0
  %v411 = vsel %vm223, %v211, 0
  %v414 = vsel %vm223, %v212, 0
  %416 = vmatprep.subr.mxu0 0.0
  %417 = vmatpush1.msra.mxu0 0.0
  %418 = vmatprep.subr.mxu0 0.0
  %419 = vmatpush1.msra.mxu0 0.0
  %420 = vmatprep.subr.mxu0 0.0
  %421 = vmatpush1.msra.mxu0 0.0
  %422 = vmatprep.subr.mxu0 0.0
  %423 = vmatpush1.msra.mxu0 0.0
  %424 = vmatprep.subr.mxu0 0.0
  %425 = vmatpush1.msra.mxu0 0.0
  %426 = vmatprep.subr.mxu0 0.0
  %427 = vmatpush1.msra.mxu0 0.0
  %428 = vmatprep.subr.mxu0 0.0
  %429 = vmatpush1.msra.mxu0 0.0
  %430 = vmatprep.subr.mxu0 0.0
  %431 = vmatpush1.msra.mxu0 0.0
  %432 = vmatprep.subr.mxu0 0.0
  %433 = vmatpush1.msra.mxu0 0.0
  %434 = vmatprep.subr.mxu0 0.0
  %435 = vmatpush1.msra.mxu0 0.0
  %436 = vmatprep.subr.mxu0 0.0
  %437 = vmatpush1.msra.mxu0 0.0
  %438 = vmatprep.subr.mxu0 0.0
  %439 = vmatpush1.msra.mxu0 0.0
  %440 = vmatprep.subr.mxu0 0.0
  %441 = vmatpush1.msra.mxu0 0.0
  %442 = vmatprep.subr.mxu0 %v228
  %443 = vmatpush1.msra.mxu0 %v225
  %444 = vmatprep.subr.mxu0 %v86
  %445 = vmatpush1.msra.mxu0 %v85
  %446 = vmatprep.subr.mxu0 %v22
  %447 = vmatpush1.msra.mxu0 %v21
  %448 = vmatprep.subr.mxu0 0.0
  %449 = vmatpush2.msra.mxu0 0.0
  %450 = vmatprep.subr.mxu0 0.0
  %451 = vmatpush2.msra.mxu0 0.0
  %452 = vmatprep.subr.mxu0 0.0
  %453 = vmatpush2.msra.mxu0 0.0
  %454 = vmatprep.subr.mxu0 0.0
  %455 = vmatpush2.msra.mxu0 0.0
  %456 = vmatprep.subr.mxu0 0.0
  %457 = vmatpush2.msra.mxu0 0.0
  %458 = vmatprep.subr.mxu0 0.0
  %459 = vmatpush2.msra.mxu0 0.0
  %460 = vmatprep.subr.mxu0 0.0
  %461 = vmatpush2.msra.mxu0 0.0
  %462 = vmatprep.subr.mxu0 0.0
  %463 = vmatpush2.msra.mxu0 0.0
  %464 = vmatprep.subr.mxu0 0.0
  %465 = vmatpush2.msra.mxu0 0.0
  %466 = vmatprep.subr.mxu0 0.0
  %467 = vmatpush2.msra.mxu0 0.0
  %468 = vmatprep.subr.mxu0 0.0
  %469 = vmatpush2.msra.mxu0 0.0
  %470 = vmatprep.subr.mxu0 0.0
  %471 = vmatpush2.msra.mxu0 0.0
  %472 = vmatprep.subr.mxu0 0.0
  %473 = vmatpush2.msra.mxu0 0.0
  %474 = vmatprep.subr.mxu0 0.0
  %475 = vmatpush2.msra.mxu0 0.0
  %476 = vmatprep.subr.mxu0 0.0
  %477 = vmatpush2.msra.mxu0 0.0
  %478 = vmatprep.subr.mxu0 0.0
  %479 = vmatpush2.msra.mxu0 0.0
  %480 = vmatprep.mubr.f32.mxu0 0.0
  %481 = vmatmul.mubr.f32.gmra.mxu0 %v221
  %v482 = vpop.f32.mrf.mxu0
  %v483 = vadd.f32 %v217, %v482
  %v484 = vpop.f32.mrf.mxu0
  %v485 = vadd.f32 %v217, %v484
  %486 = vdwg.mxu0
  %487 = vmatprep.subr.mxu0 0.0
  %488 = vmatpush1.msra.mxu0 0.0
  %489 = vmatprep.subr.mxu0 0.0
  %490 = vmatpush1.msra.mxu0 0.0
  %491 = vmatprep.subr.mxu0 0.0
  %492 = vmatpush1.msra.mxu0 0.0
  %493 = vmatprep.subr.mxu0 0.0
  %494 = vmatpush1.msra.mxu0 0.0
  %495 = vmatprep.subr.mxu0 0.0
  %496 = vmatpush1.msra.mxu0 0.0
  %497 = vmatprep.subr.mxu0 0.0
  %498 = vmatpush1.msra.mxu0 0.0
  %499 = vmatprep.subr.mxu0 0.0
  %500 = vmatpush1.msra.mxu0 0.0
  %501 = vmatprep.subr.mxu0 0.0
  %502 = vmatpush1.msra.mxu0 0.0
  %503 = vmatprep.subr.mxu0 0.0
  %504 = vmatpush1.msra.mxu0 0.0
  %505 = vmatprep.subr.mxu0 0.0
  %506 = vmatpush1.msra.mxu0 0.0
  %507 = vmatprep.subr.mxu0 0.0
  %508 = vmatpush1.msra.mxu0 0.0
  %509 = vmatprep.subr.mxu0 0.0
  %510 = vmatpush1.msra.mxu0 0.0
  %511 = vmatprep.subr.mxu0 0.0
  %512 = vmatpush1.msra.mxu0 0.0
  %513 = vmatprep.subr.mxu0 %v234
  %514 = vmatpush1.msra.mxu0 %v231
  %515 = vmatprep.subr.mxu0 %v88
  %516 = vmatpush1.msra.mxu0 %v87
  %517 = vmatprep.subr.mxu0 %v24
  %518 = vmatpush1.msra.mxu0 %v23
  %519 = vmatprep.subr.mxu0 0.0
  %520 = vmatpush2.msra.mxu0 0.0
  %521 = vmatprep.subr.mxu0 0.0
  %522 = vmatpush2.msra.mxu0 0.0
  %523 = vmatprep.subr.mxu0 0.0
  %524 = vmatpush2.msra.mxu0 0.0
  %525 = vmatprep.subr.mxu0 0.0
  %526 = vmatpush2.msra.mxu0 0.0
  %527 = vmatprep.subr.mxu0 0.0
  %528 = vmatpush2.msra.mxu0 0.0
  %529 = vmatprep.subr.mxu0 0.0
  %530 = vmatpush2.msra.mxu0 0.0
  %531 = vmatprep.subr.mxu0 0.0
  %532 = vmatpush2.msra.mxu0 0.0
  %533 = vmatprep.subr.mxu0 0.0
  %534 = vmatpush2.msra.mxu0 0.0
  %535 = vmatprep.subr.mxu0 0.0
  %536 = vmatpush2.msra.mxu0 0.0
  %537 = vmatprep.subr.mxu0 0.0
  %538 = vmatpush2.msra.mxu0 0.0
  %539 = vmatprep.subr.mxu0 0.0
  %540 = vmatpush2.msra.mxu0 0.0
  %541 = vmatprep.subr.mxu0 0.0
  %542 = vmatpush2.msra.mxu0 0.0
  %543 = vmatprep.subr.mxu0 0.0
  %544 = vmatpush2.msra.mxu0 0.0
  %545 = vmatprep.subr.mxu0 0.0
  %546 = vmatpush2.msra.mxu0 0.0
  %547 = vmatprep.subr.mxu0 0.0
  %548 = vmatpush2.msra.mxu0 0.0
  %549 = vmatprep.subr.mxu0 0.0
  %550 = vmatpush2.msra.mxu0 0.0
  %551 = vmatprep.mubr.f32.mxu0 0.0
  %552 = vmatmul.mubr.f32.gmra.mxu0 %v221
  %v553 = vpop.f32.mrf.mxu0
  %v554 = vadd.f32 %v217, %v553
  %v555 = vpop.f32.mrf.mxu0
  %v556 = vadd.f32 %v217, %v555
  %557 = vdwg.mxu0
  %558 = vmatprep.subr.mxu0 0.0
  %559 = vmatpush1.msra.mxu0 0.0
  %560 = vmatprep.subr.mxu0 0.0
  %561 = vmatpush1.msra.mxu0 0.0
  %562 = vmatprep.subr.mxu0 0.0
  %563 = vmatpush1.msra.mxu0 0.0
  %564 = vmatprep.subr.mxu0 0.0
  %565 = vmatpush1.msra.mxu0 0.0
  %566 = vmatprep.subr.mxu0 0.0
  %567 = vmatpush1.msra.mxu0 0.0
  %568 = vmatprep.subr.mxu0 0.0
  %569 = vmatpush1.msra.mxu0 0.0
  %570 = vmatprep.subr.mxu0 0.0
  %571 = vmatpush1.msra.mxu0 0.0
  %572 = vmatprep.subr.mxu0 0.0
  %573 = vmatpush1.msra.mxu0 0.0
  %574 = vmatprep.subr.mxu0 0.0
  %575 = vmatpush1.msra.mxu0 0.0
  %576 = vmatprep.subr.mxu0 0.0
  %577 = vmatpush1.msra.mxu0 0.0
  %578 = vmatprep.subr.mxu0 0.0
  %579 = vmatpush1.msra.mxu0 0.0
  %580 = vmatprep.subr.mxu0 0.0
  %581 = vmatpush1.msra.mxu0 0.0
  %582 = vmatprep.subr.mxu0 0.0
  %583 = vmatpush1.msra.mxu0 0.0
  %584 = vmatprep.subr.mxu0 %v240
  %585 = vmatpush1.msra.mxu0 %v237
  %586 = vmatprep.subr.mxu0 %v90
  %587 = vmatpush1.msra.mxu0 %v89
  %588 = vmatprep.subr.mxu0 %v26
  %589 = vmatpush1.msra.mxu0 %v25
  %590 = vmatprep.subr.mxu0 0.0
  %591 = vmatpush2.msra.mxu0 0.0
  %592 = vmatprep.subr.mxu0 0.0
  %593 = vmatpush2.msra.mxu0 0.0
  %594 = vmatprep.subr.mxu0 0.0
  %595 = vmatpush2.msra.mxu0 0.0
  %596 = vmatprep.subr.mxu0 0.0
  %597 = vmatpush2.msra.mxu0 0.0
  %598 = vmatprep.subr.mxu0 0.0
  %599 = vmatpush2.msra.mxu0 0.0
  %600 = vmatprep.subr.mxu0 0.0
  %601 = vmatpush2.msra.mxu0 0.0
  %602 = vmatprep.subr.mxu0 0.0
  %603 = vmatpush2.msra.mxu0 0.0
  %604 = vmatprep.subr.mxu0 0.0
  %605 = vmatpush2.msra.mxu0 0.0
  %606 = vmatprep.subr.mxu0 0.0
  %607 = vmatpush2.msra.mxu0 0.0
  %608 = vmatprep.subr.mxu0 0.0
  %609 = vmatpush2.msra.mxu0 0.0
  %610 = vmatprep.subr.mxu0 0.0
  %611 = vmatpush2.msra.mxu0 0.0
  %612 = vmatprep.subr.mxu0 0.0
  %613 = vmatpush2.msra.mxu0 0.0
  %614 = vmatprep.subr.mxu0 0.0
  %615 = vmatpush2.msra.mxu0 0.0
  %616 = vmatprep.subr.mxu0 0.0
  %617 = vmatpush2.msra.mxu0 0.0
  %618 = vmatprep.subr.mxu0 0.0
  %619 = vmatpush2.msra.mxu0 0.0
  %620 = vmatprep.subr.mxu0 0.0
  %621 = vmatpush2.msra.mxu0 0.0
  %622 = vmatprep.mubr.f32.mxu0 0.0
  %623 = vmatmul.mubr.f32.gmra.mxu0 %v221
  %v624 = vpop.f32.mrf.mxu0
  %v625 = vadd.f32 %v217, %v624
  %v626 = vpop.f32.mrf.mxu0
  %v627 = vadd.f32 %v217, %v626
  %628 = vdwg.mxu0
  %629 = vmatprep.subr.mxu0 0.0
  %630 = vmatpush1.msra.mxu0 0.0
  %631 = vmatprep.subr.mxu0 0.0
  %632 = vmatpush1.msra.mxu0 0.0
  %633 = vmatprep.subr.mxu0 0.0
  %634 = vmatpush1.msra.mxu0 0.0
  %635 = vmatprep.subr.mxu0 0.0
  %636 = vmatpush1.msra.mxu0 0.0
  %637 = vmatprep.subr.mxu0 0.0
  %638 = vmatpush1.msra.mxu0 0.0
  %639 = vmatprep.subr.mxu0 0.0
  %640 = vmatpush1.msra.mxu0 0.0
  %641 = vmatprep.subr.mxu0 0.0
  %642 = vmatpush1.msra.mxu0 0.0
  %643 = vmatprep.subr.mxu0 0.0
  %644 = vmatpush1.msra.mxu0 0.0
  %645 = vmatprep.subr.mxu0 0.0
  %646 = vmatpush1.msra.mxu0 0.0
  %647 = vmatprep.subr.mxu0 0.0
  %648 = vmatpush1.msra.mxu0 0.0
  %649 = vmatprep.subr.mxu0 0.0
  %650 = vmatpush1.msra.mxu0 0.0
  %651 = vmatprep.subr.mxu0 0.0
  %652 = vmatpush1.msra.mxu0 0.0
  %653 = vmatprep.subr.mxu0 0.0
  %654 = vmatpush1.msra.mxu0 0.0
  %655 = vmatprep.subr.mxu0 %v246
  %656 = vmatpush1.msra.mxu0 %v243
  %657 = vmatprep.subr.mxu0 %v92
  %658 = vmatpush1.msra.mxu0 %v91
  %659 = vmatprep.subr.mxu0 %v28
  %660 = vmatpush1.msra.mxu0 %v27
  %661 = vmatprep.subr.mxu0 0.0
  %662 = vmatpush2.msra.mxu0 0.0
  %663 = vmatprep.subr.mxu0 0.0
  %664 = vmatpush2.msra.mxu0 0.0
  %665 = vmatprep.subr.mxu0 0.0
  %666 = vmatpush2.msra.mxu0 0.0
  %667 = vmatprep.subr.mxu0 0.0
  %668 = vmatpush2.msra.mxu0 0.0
  %669 = vmatprep.subr.mxu0 0.0
  %670 = vmatpush2.msra.mxu0 0.0
  %671 = vmatprep.subr.mxu0 0.0
  %672 = vmatpush2.msra.mxu0 0.0
  %673 = vmatprep.subr.mxu0 0.0
  %674 = vmatpush2.msra.mxu0 0.0
  %675 = vmatprep.subr.mxu0 0.0
  %676 = vmatpush2.msra.mxu0 0.0
  %677 = vmatprep.subr.mxu0 0.0
  %678 = vmatpush2.msra.mxu0 0.0
  %679 = vmatprep.subr.mxu0 0.0
  %680 = vmatpush2.msra.mxu0 0.0
  %681 = vmatprep.subr.mxu0 0.0
  %682 = vmatpush2.msra.mxu0 0.0
  %683 = vmatprep.subr.mxu0 0.0
  %684 = vmatpush2.msra.mxu0 0.0
  %685 = vmatprep.subr.mxu0 0.0
  %686 = vmatpush2.msra.mxu0 0.0
  %687 = vmatprep.subr.mxu0 0.0
  %688 = vmatpush2.msra.mxu0 0.0
  %689 = vmatprep.subr.mxu0 0.0
  %690 = vmatpush2.msra.mxu0 0.0
  %691 = vmatprep.subr.mxu0 0.0
  %692 = vmatpush2.msra.mxu0 0.0
  %693 = vmatprep.mubr.f32.mxu0 0.0
  %694 = vmatmul.mubr.f32.gmra.mxu0 %v221
  %v695 = vpop.f32.mrf.mxu0
  %v696 = vadd.f32 %v217, %v695
  %v697 = vpop.f32.mrf.mxu0
  %v698 = vadd.f32 %v217, %v697
  %699 = vdwg.mxu0
  %700 = vmatprep.subr.mxu0 0.0
  %701 = vmatpush1.msra.mxu0 0.0
  %702 = vmatprep.subr.mxu0 0.0
  %703 = vmatpush1.msra.mxu0 0.0
  %704 = vmatprep.subr.mxu0 0.0
  %705 = vmatpush1.msra.mxu0 0.0
  %706 = vmatprep.subr.mxu0 0.0
  %707 = vmatpush1.msra.mxu0 0.0
  %708 = vmatprep.subr.mxu0 0.0
  %709 = vmatpush1.msra.mxu0 0.0
  %710 = vmatprep.subr.mxu0 0.0
  %711 = vmatpush1.msra.mxu0 0.0
  %712 = vmatprep.subr.mxu0 0.0
  %713 = vmatpush1.msra.mxu0 0.0
  %714 = vmatprep.subr.mxu0 0.0
  %715 = vmatpush1.msra.mxu0 0.0
  %716 = vmatprep.subr.mxu0 0.0
  %717 = vmatpush1.msra.mxu0 0.0
  %718 = vmatprep.subr.mxu0 0.0
  %719 = vmatpush1.msra.mxu0 0.0
  %720 = vmatprep.subr.mxu0 0.0
  %721 = vmatpush1.msra.mxu0 0.0
  %722 = vmatprep.subr.mxu0 0.0
  %723 = vmatpush1.msra.mxu0 0.0
  %724 = vmatprep.subr.mxu0 0.0
  %725 = vmatpush1.msra.mxu0 0.0
  %726 = vmatprep.subr.mxu0 %v252
  %727 = vmatpush1.msra.mxu0 %v249
  %728 = vmatprep.subr.mxu0 %v94
  %729 = vmatpush1.msra.mxu0 %v93
  %730 = vmatprep.subr.mxu0 %v30
  %731 = vmatpush1.msra.mxu0 %v29
  %732 = vmatprep.subr.mxu0 0.0
  %733 = vmatpush2.msra.mxu0 0.0
  %734 = vmatprep.subr.mxu0 0.0
  %735 = vmatpush2.msra.mxu0 0.0
  %736 = vmatprep.subr.mxu0 0.0
  %737 = vmatpush2.msra.mxu0 0.0
  %738 = vmatprep.subr.mxu0 0.0
  %739 = vmatpush2.msra.mxu0 0.0
  %740 = vmatprep.subr.mxu0 0.0
  %741 = vmatpush2.msra.mxu0 0.0
  %742 = vmatprep.subr.mxu0 0.0
  %743 = vmatpush2.msra.mxu0 0.0
  %744 = vmatprep.subr.mxu0 0.0
  %745 = vmatpush2.msra.mxu0 0.0
  %746 = vmatprep.subr.mxu0 0.0
  %747 = vmatpush2.msra.mxu0 0.0
  %748 = vmatprep.subr.mxu0 0.0
  %749 = vmatpush2.msra.mxu0 0.0
  %750 = vmatprep.subr.mxu0 0.0
  %751 = vmatpush2.msra.mxu0 0.0
  %752 = vmatprep.subr.mxu0 0.0
  %753 = vmatpush2.msra.mxu0 0.0
  %754 = vmatprep.subr.mxu0 0.0
  %755 = vmatpush2.msra.mxu0 0.0
  %756 = vmatprep.subr.mxu0 0.0
  %757 = vmatpush2.msra.mxu0 0.0
  %758 = vmatprep.subr.mxu0 0.0
  %759 = vmatpush2.msra.mxu0 0.0
  %760 = vmatprep.subr.mxu0 0.0
  %761 = vmatpush2.msra.mxu0 0.0
  %762 = vmatprep.subr.mxu0 0.0
  %763 = vmatpush2.msra.mxu0 0.0
  %764 = vmatprep.mubr.f32.mxu0 0.0
  %765 = vmatmul.mubr.f32.gmra.mxu0 %v221
  %v766 = vpop.f32.mrf.mxu0
  %v767 = vadd.f32 %v217, %v766
  %v768 = vpop.f32.mrf.mxu0
  %v769 = vadd.f32 %v217, %v768
  %770 = vdwg.mxu0
  %771 = vmatprep.subr.mxu0 0.0
  %772 = vmatpush1.msra.mxu0 0.0
  %773 = vmatprep.subr.mxu0 0.0
  %774 = vmatpush1.msra.mxu0 0.0
  %775 = vmatprep.subr.mxu0 0.0
  %776 = vmatpush1.msra.mxu0 0.0
  %777 = vmatprep.subr.mxu0 0.0
  %778 = vmatpush1.msra.mxu0 0.0
  %779 = vmatprep.subr.mxu0 0.0
  %780 = vmatpush1.msra.mxu0 0.0
  %781 = vmatprep.subr.mxu0 0.0
  %782 = vmatpush1.msra.mxu0 0.0
  %783 = vmatprep.subr.mxu0 0.0
  %784 = vmatpush1.msra.mxu0 0.0
  %785 = vmatprep.subr.mxu0 0.0
  %786 = vmatpush1.msra.mxu0 0.0
  %787 = vmatprep.subr.mxu0 0.0
  %788 = vmatpush1.msra.mxu0 0.0
  %789 = vmatprep.subr.mxu0 0.0
  %790 = vmatpush1.msra.mxu0 0.0
  %791 = vmatprep.subr.mxu0 0.0
  %792 = vmatpush1.msra.mxu0 0.0
  %793 = vmatprep.subr.mxu0 0.0
  %794 = vmatpush1.msra.mxu0 0.0
  %795 = vmatprep.subr.mxu0 0.0
  %796 = vmatpush1.msra.mxu0 0.0
  %797 = vmatprep.subr.mxu0 %v258
  %798 = vmatpush1.msra.mxu0 %v255
  %799 = vmatprep.subr.mxu0 %v96
  %800 = vmatpush1.msra.mxu0 %v95
  %801 = vmatprep.subr.mxu0 %v32
  %802 = vmatpush1.msra.mxu0 %v31
  %803 = vmatprep.subr.mxu0 0.0
  %804 = vmatpush2.msra.mxu0 0.0
  %805 = vmatprep.subr.mxu0 0.0
  %806 = vmatpush2.msra.mxu0 0.0
  %807 = vmatprep.subr.mxu0 0.0
  %808 = vmatpush2.msra.mxu0 0.0
  %809 = vmatprep.subr.mxu0 0.0
  %810 = vmatpush2.msra.mxu0 0.0
  %811 = vmatprep.subr.mxu0 0.0
  %812 = vmatpush2.msra.mxu0 0.0
  %813 = vmatprep.subr.mxu0 0.0
  %814 = vmatpush2.msra.mxu0 0.0
  %815 = vmatprep.subr.mxu0 0.0
  %816 = vmatpush2.msra.mxu0 0.0
  %817 = vmatprep.subr.mxu0 0.0
  %818 = vmatpush2.msra.mxu0 0.0
  %819 = vmatprep.subr.mxu0 0.0
  %820 = vmatpush2.msra.mxu0 0.0
  %821 = vmatprep.subr.mxu0 0.0
  %822 = vmatpush2.msra.mxu0 0.0
  %823 = vmatprep.subr.mxu0 0.0
  %824 = vmatpush2.msra.mxu0 0.0
  %825 = vmatprep.subr.mxu0 0.0
  %826 = vmatpush2.msra.mxu0 0.0
  %827 = vmatprep.subr.mxu0 0.0
  %828 = vmatpush2.msra.mxu0 0.0
  %829 = vmatprep.subr.mxu0 0.0
  %830 = vmatpush2.msra.mxu0 0.0
  %831 = vmatprep.subr.mxu0 0.0
  %832 = vmatpush2.msra.mxu0 0.0
  %833 = vmatprep.subr.mxu0 0.0
  %834 = vmatpush2.msra.mxu0 0.0
  %835 = vmatprep.mubr.f32.mxu0 0.0
  %836 = vmatmul.mubr.f32.gmra.mxu0 %v221
  %v837 = vpop.f32.mrf.mxu0
  %v838 = vadd.f32 %v217, %v837
  %v839 = vpop.f32.mrf.mxu0
  %v840 = vadd.f32 %v217, %v839
  %841 = vdwg.mxu0
  %842 = vmatprep.subr.mxu0 0.0
  %843 = vmatpush1.msra.mxu0 0.0
  %844 = vmatprep.subr.mxu0 0.0
  %845 = vmatpush1.msra.mxu0 0.0
  %846 = vmatprep.subr.mxu0 0.0
  %847 = vmatpush1.msra.mxu0 0.0
  %848 = vmatprep.subr.mxu0 0.0
  %849 = vmatpush1.msra.mxu0 0.0
  %850 = vmatprep.subr.mxu0 0.0
  %851 = vmatpush1.msra.mxu0 0.0
  %852 = vmatprep.subr.mxu0 0.0
  %853 = vmatpush1.msra.mxu0 0.0
  %854 = vmatprep.subr.mxu0 0.0
  %855 = vmatpush1.msra.mxu0 0.0
  %856 = vmatprep.subr.mxu0 0.0
  %857 = vmatpush1.msra.mxu0 0.0
  %858 = vmatprep.subr.mxu0 0.0
  %859 = vmatpush1.msra.mxu0 0.0
  %860 = vmatprep.subr.mxu0 0.0
  %861 = vmatpush1.msra.mxu0 0.0
  %862 = vmatprep.subr.mxu0 0.0
  %863 = vmatpush1.msra.mxu0 0.0
  %864 = vmatprep.subr.mxu0 0.0
  %865 = vmatpush1.msra.mxu0 0.0
  %866 = vmatprep.subr.mxu0 0.0
  %867 = vmatpush1.msra.mxu0 0.0
  %868 = vmatprep.subr.mxu0 %v264
  %869 = vmatpush1.msra.mxu0 %v261
  %870 = vmatprep.subr.mxu0 %v98
  %871 = vmatpush1.msra.mxu0 %v97
  %872 = vmatprep.subr.mxu0 %v34
  %873 = vmatpush1.msra.mxu0 %v33
  %874 = vmatprep.subr.mxu0 0.0
  %875 = vmatpush2.msra.mxu0 0.0
  %876 = vmatprep.subr.mxu0 0.0
  %877 = vmatpush2.msra.mxu0 0.0
  %878 = vmatprep.subr.mxu0 0.0
  %879 = vmatpush2.msra.mxu0 0.0
  %880 = vmatprep.subr.mxu0 0.0
  %881 = vmatpush2.msra.mxu0 0.0
  %882 = vmatprep.subr.mxu0 0.0
  %883 = vmatpush2.msra.mxu0 0.0
  %884 = vmatprep.subr.mxu0 0.0
  %885 = vmatpush2.msra.mxu0 0.0
  %886 = vmatprep.subr.mxu0 0.0
  %887 = vmatpush2.msra.mxu0 0.0
  %888 = vmatprep.subr.mxu0 0.0
  %889 = vmatpush2.msra.mxu0 0.0
  %890 = vmatprep.subr.mxu0 0.0
  %891 = vmatpush2.msra.mxu0 0.0
  %892 = vmatprep.subr.mxu0 0.0
  %893 = vmatpush2.msra.mxu0 0.0
  %894 = vmatprep.subr.mxu0 0.0
  %895 = vmatpush2.msra.mxu0 0.0
  %896 = vmatprep.subr.mxu0 0.0
  %897 = vmatpush2.msra.mxu0 0.0
  %898 = vmatprep.subr.mxu0 0.0
  %899 = vmatpush2.msra.mxu0 0.0
  %900 = vmatprep.subr.mxu0 0.0
  %901 = vmatpush2.msra.mxu0 0.0
  %902 = vmatprep.subr.mxu0 0.0
  %903 = vmatpush2.msra.mxu0 0.0
  %904 = vmatprep.subr.mxu0 0.0
  %905 = vmatpush2.msra.mxu0 0.0
  %906 = vmatprep.mubr.f32.mxu0 0.0
  %907 = vmatmul.mubr.f32.gmra.mxu0 %v221
  %v908 = vpop.f32.mrf.mxu0
  %v909 = vadd.f32 %v217, %v908
  %v910 = vpop.f32.mrf.mxu0
  %v911 = vadd.f32 %v217, %v910
  %912 = vdwg.mxu0
  %913 = vmatprep.subr.mxu0 0.0
  %914 = vmatpush1.msra.mxu0 0.0
  %915 = vmatprep.subr.mxu0 0.0
  %916 = vmatpush1.msra.mxu0 0.0
  %917 = vmatprep.subr.mxu0 0.0
  %918 = vmatpush1.msra.mxu0 0.0
  %919 = vmatprep.subr.mxu0 0.0
  %920 = vmatpush1.msra.mxu0 0.0
  %921 = vmatprep.subr.mxu0 0.0
  %922 = vmatpush1.msra.mxu0 0.0
  %923 = vmatprep.subr.mxu0 0.0
  %924 = vmatpush1.msra.mxu0 0.0
  %925 = vmatprep.subr.mxu0 0.0
  %926 = vmatpush1.msra.mxu0 0.0
  %927 = vmatprep.subr.mxu0 0.0
  %928 = vmatpush1.msra.mxu0 0.0
  %929 = vmatprep.subr.mxu0 0.0
  %930 = vmatpush1.msra.mxu0 0.0
  %931 = vmatprep.subr.mxu0 0.0
  %932 = vmatpush1.msra.mxu0 0.0
  %933 = vmatprep.subr.mxu0 0.0
  %934 = vmatpush1.msra.mxu0 0.0
  %935 = vmatprep.subr.mxu0 0.0
  %936 = vmatpush1.msra.mxu0 0.0
  %937 = vmatprep.subr.mxu0 0.0
  %938 = vmatpush1.msra.mxu0 0.0
  %939 = vmatprep.subr.mxu0 %v270
  %940 = vmatpush1.msra.mxu0 %v267
  %941 = vmatprep.subr.mxu0 %v100
  %942 = vmatpush1.msra.mxu0 %v99
  %943 = vmatprep.subr.mxu0 %v36
  %944 = vmatpush1.msra.mxu0 %v35
  %945 = vmatprep.subr.mxu0 0.0
  %946 = vmatpush2.msra.mxu0 0.0
  %947 = vmatprep.subr.mxu0 0.0
  %948 = vmatpush2.msra.mxu0 0.0
  %949 = vmatprep.subr.mxu0 0.0
  %950 = vmatpush2.msra.mxu0 0.0
  %951 = vmatprep.subr.mxu0 0.0
  %952 = vmatpush2.msra.mxu0 0.0
  %953 = vmatprep.subr.mxu0 0.0
  %954 = vmatpush2.msra.mxu0 0.0
  %955 = vmatprep.subr.mxu0 0.0
  %956 = vmatpush2.msra.mxu0 0.0
  %957 = vmatprep.subr.mxu0 0.0
  %958 = vmatpush2.msra.mxu0 0.0
  %959 = vmatprep.subr.mxu0 0.0
  %960 = vmatpush2.msra.mxu0 0.0
  %961 = vmatprep.subr.mxu0 0.0
  %962 = vmatpush2.msra.mxu0 0.0
  %963 = vmatprep.subr.mxu0 0.0
  %964 = vmatpush2.msra.mxu0 0.0
  %965 = vmatprep.subr.mxu0 0.0
  %966 = vmatpush2.msra.mxu0 0.0
  %967 = vmatprep.subr.mxu0 0.0
  %968 = vmatpush2.msra.mxu0 0.0
  %969 = vmatprep.subr.mxu0 0.0
  %970 = vmatpush2.msra.mxu0 0.0
  %971 = vmatprep.subr.mxu0 0.0
  %972 = vmatpush2.msra.mxu0 0.0
  %973 = vmatprep.subr.mxu0 0.0
  %974 = vmatpush2.msra.mxu0 0.0
  %975 = vmatprep.subr.mxu0 0.0
  %976 = vmatpush2.msra.mxu0 0.0
  %977 = vmatprep.mubr.f32.mxu0 0.0
  %978 = vmatmul.mubr.f32.gmra.mxu0 %v221
  %v979 = vpop.f32.mrf.mxu0
  %v980 = vadd.f32 %v217, %v979
  %v981 = vpop.f32.mrf.mxu0
  %v982 = vadd.f32 %v217, %v981
  %983 = vdwg.mxu0
  %984 = vmatprep.subr.mxu0 0.0
  %985 = vmatpush1.msra.mxu0 0.0
  %986 = vmatprep.subr.mxu0 0.0
  %987 = vmatpush1.msra.mxu0 0.0
  %988 = vmatprep.subr.mxu0 0.0
  %989 = vmatpush1.msra.mxu0 0.0
  %990 = vmatprep.subr.mxu0 0.0
  %991 = vmatpush1.msra.mxu0 0.0
  %992 = vmatprep.subr.mxu0 0.0
  %993 = vmatpush1.msra.mxu0 0.0
  %994 = vmatprep.subr.mxu0 0.0
  %995 = vmatpush1.msra.mxu0 0.0
  %996 = vmatprep.subr.mxu0 0.0
  %997 = vmatpush1.msra.mxu0 0.0
  %998 = vmatprep.subr.mxu0 0.0
  %999 = vmatpush1.msra.mxu0 0.0
  %1000 = vmatprep.subr.mxu0 0.0
  %1001 = vmatpush1.msra.mxu0 0.0
  %1002 = vmatprep.subr.mxu0 0.0
  %1003 = vmatpush1.msra.mxu0 0.0
  %1004 = vmatprep.subr.mxu0 0.0
  %1005 = vmatpush1.msra.mxu0 0.0
  %1006 = vmatprep.subr.mxu0 0.0
  %1007 = vmatpush1.msra.mxu0 0.0
  %1008 = vmatprep.subr.mxu0 0.0
  %1009 = vmatpush1.msra.mxu0 0.0
  %1010 = vmatprep.subr.mxu0 %v276
  %1011 = vmatpush1.msra.mxu0 %v273
  %1012 = vmatprep.subr.mxu0 %v102
  %1013 = vmatpush1.msra.mxu0 %v101
  %1014 = vmatprep.subr.mxu0 %v38
  %1015 = vmatpush1.msra.mxu0 %v37
  %1016 = vmatprep.subr.mxu0 0.0
  %1017 = vmatpush2.msra.mxu0 0.0
  %1018 = vmatprep.subr.mxu0 0.0
  %1019 = vmatpush2.msra.mxu0 0.0
  %1020 = vmatprep.subr.mxu0 0.0
  %1021 = vmatpush2.msra.mxu0 0.0
  %1022 = vmatprep.subr.mxu0 0.0
  %1023 = vmatpush2.msra.mxu0 0.0
  %1024 = vmatprep.subr.mxu0 0.0
  %1025 = vmatpush2.msra.mxu0 0.0
  %1026 = vmatprep.subr.mxu0 0.0
  %1027 = vmatpush2.msra.mxu0 0.0
  %1028 = vmatprep.subr.mxu0 0.0
  %1029 = vmatpush2.msra.mxu0 0.0
  %1030 = vmatprep.subr.mxu0 0.0
  %1031 = vmatpush2.msra.mxu0 0.0
  %1032 = vmatprep.subr.mxu0 0.0
  %1033 = vmatpush2.msra.mxu0 0.0
  %1034 = vmatprep.subr.mxu0 0.0
  %1035 = vmatpush2.msra.mxu0 0.0
  %1036 = vmatprep.subr.mxu0 0.0
  %1037 = vmatpush2.msra.mxu0 0.0
  %1038 = vmatprep.subr.mxu0 0.0
  %1039 = vmatpush2.msra.mxu0 0.0
  %1040 = vmatprep.subr.mxu0 0.0
  %1041 = vmatpush2.msra.mxu0 0.0
  %1042 = vmatprep.subr.mxu0 0.0
  %1043 = vmatpush2.msra.mxu0 0.0
  %1044 = vmatprep.subr.mxu0 0.0
  %1045 = vmatpush2.msra.mxu0 0.0
  %1046 = vmatprep.subr.mxu0 0.0
  %1047 = vmatpush2.msra.mxu0 0.0
  %1048 = vmatprep.mubr.f32.mxu0 0.0
  %1049 = vmatmul.mubr.f32.gmra.mxu0 %v221
  %v1050 = vpop.f32.mrf.mxu0
  %v1051 = vadd.f32 %v217, %v1050
  %v1052 = vpop.f32.mrf.mxu0
  %v1053 = vadd.f32 %v217, %v1052
  %1054 = vdwg.mxu0
  %1055 = vmatprep.subr.mxu0 0.0
  %1056 = vmatpush1.msra.mxu0 0.0
  %1057 = vmatprep.subr.mxu0 0.0
  %1058 = vmatpush1.msra.mxu0 0.0
  %1059 = vmatprep.subr.mxu0 0.0
  %1060 = vmatpush1.msra.mxu0 0.0
  %1061 = vmatprep.subr.mxu0 0.0
  %1062 = vmatpush1.msra.mxu0 0.0
  %1063 = vmatprep.subr.mxu0 0.0
  %1064 = vmatpush1.msra.mxu0 0.0
  %1065 = vmatprep.subr.mxu0 0.0
  %1066 = vmatpush1.msra.mxu0 0.0
  %1067 = vmatprep.subr.mxu0 0.0
  %1068 = vmatpush1.msra.mxu0 0.0
  %1069 = vmatprep.subr.mxu0 0.0
  %1070 = vmatpush1.msra.mxu0 0.0
  %1071 = vmatprep.subr.mxu0 0.0
  %1072 = vmatpush1.msra.mxu0 0.0
  %1073 = vmatprep.subr.mxu0 0.0
  %1074 = vmatpush1.msra.mxu0 0.0
  %1075 = vmatprep.subr.mxu0 0.0
  %1076 = vmatpush1.msra.mxu0 0.0
  %1077 = vmatprep.subr.mxu0 0.0
  %1078 = vmatpush1.msra.mxu0 0.0
  %1079 = vmatprep.subr.mxu0 0.0
  %1080 = vmatpush1.msra.mxu0 0.0
  %1081 = vmatprep.subr.mxu0 %v282
  %1082 = vmatpush1.msra.mxu0 %v279
  %1083 = vmatprep.subr.mxu0 %v104
  %1084 = vmatpush1.msra.mxu0 %v103
  %1085 = vmatprep.subr.mxu0 %v40
  %1086 = vmatpush1.msra.mxu0 %v39
  %1087 = vmatprep.subr.mxu0 0.0
  %1088 = vmatpush2.msra.mxu0 0.0
  %1089 = vmatprep.subr.mxu0 0.0
  %1090 = vmatpush2.msra.mxu0 0.0
  %1091 = vmatprep.subr.mxu0 0.0
  %1092 = vmatpush2.msra.mxu0 0.0
  %1093 = vmatprep.subr.mxu0 0.0
  %1094 = vmatpush2.msra.mxu0 0.0
  %1095 = vmatprep.subr.mxu0 0.0
  %1096 = vmatpush2.msra.mxu0 0.0
  %1097 = vmatprep.subr.mxu0 0.0
  %1098 = vmatpush2.msra.mxu0 0.0
  %1099 = vmatprep.subr.mxu0 0.0
  %1100 = vmatpush2.msra.mxu0 0.0
  %1101 = vmatprep.subr.mxu0 0.0
  %1102 = vmatpush2.msra.mxu0 0.0
  %1103 = vmatprep.subr.mxu0 0.0
  %1104 = vmatpush2.msra.mxu0 0.0
  %1105 = vmatprep.subr.mxu0 0.0
  %1106 = vmatpush2.msra.mxu0 0.0
  %1107 = vmatprep.subr.mxu0 0.0
  %1108 = vmatpush2.msra.mxu0 0.0
  %1109 = vmatprep.subr.mxu0 0.0
  %1110 = vmatpush2.msra.mxu0 0.0
  %1111 = vmatprep.subr.mxu0 0.0
  %1112 = vmatpush2.msra.mxu0 0.0
  %1113 = vmatprep.subr.mxu0 0.0
  %1114 = vmatpush2.msra.mxu0 0.0
  %1115 = vmatprep.subr.mxu0 0.0
  %1116 = vmatpush2.msra.mxu0 0.0
  %1117 = vmatprep.subr.mxu0 0.0
  %1118 = vmatpush2.msra.mxu0 0.0
  %1119 = vmatprep.mubr.f32.mxu0 0.0
  %1120 = vmatmul.mubr.f32.gmra.mxu0 %v221
  %v1121 = vpop.f32.mrf.mxu0
  %v1122 = vadd.f32 %v217, %v1121
  %v1123 = vpop.f32.mrf.mxu0
  %v1124 = vadd.f32 %v217, %v1123
  %1125 = vdwg.mxu0
  %1126 = vmatprep.subr.mxu0 0.0
  %1127 = vmatpush1.msra.mxu0 0.0
  %1128 = vmatprep.subr.mxu0 0.0
  %1129 = vmatpush1.msra.mxu0 0.0
  %1130 = vmatprep.subr.mxu0 0.0
  %1131 = vmatpush1.msra.mxu0 0.0
  %1132 = vmatprep.subr.mxu0 0.0
  %1133 = vmatpush1.msra.mxu0 0.0
  %1134 = vmatprep.subr.mxu0 0.0
  %1135 = vmatpush1.msra.mxu0 0.0
  %1136 = vmatprep.subr.mxu0 0.0
  %1137 = vmatpush1.msra.mxu0 0.0
  %1138 = vmatprep.subr.mxu0 0.0
  %1139 = vmatpush1.msra.mxu0 0.0
  %1140 = vmatprep.subr.mxu0 0.0
  %1141 = vmatpush1.msra.mxu0 0.0
  %1142 = vmatprep.subr.mxu0 0.0
  %1143 = vmatpush1.msra.mxu0 0.0
  %1144 = vmatprep.subr.mxu0 0.0
  %1145 = vmatpush1.msra.mxu0 0.0
  %1146 = vmatprep.subr.mxu0 0.0
  %1147 = vmatpush1.msra.mxu0 0.0
  %1148 = vmatprep.subr.mxu0 0.0
  %1149 = vmatpush1.msra.mxu0 0.0
  %1150 = vmatprep.subr.mxu0 0.0
  %1151 = vmatpush1.msra.mxu0 0.0
  %1152 = vmatprep.subr.mxu0 %v288
  %1153 = vmatpush1.msra.mxu0 %v285
  %1154 = vmatprep.subr.mxu0 %v106
  %1155 = vmatpush1.msra.mxu0 %v105
  %1156 = vmatprep.subr.mxu0 %v42
  %1157 = vmatpush1.msra.mxu0 %v41
  %1158 = vmatprep.subr.mxu0 0.0
  %1159 = vmatpush2.msra.mxu0 0.0
  %1160 = vmatprep.subr.mxu0 0.0
  %1161 = vmatpush2.msra.mxu0 0.0
  %1162 = vmatprep.subr.mxu0 0.0
  %1163 = vmatpush2.msra.mxu0 0.0
  %1164 = vmatprep.subr.mxu0 0.0
  %1165 = vmatpush2.msra.mxu0 0.0
  %1166 = vmatprep.subr.mxu0 0.0
  %1167 = vmatpush2.msra.mxu0 0.0
  %1168 = vmatprep.subr.mxu0 0.0
  %1169 = vmatpush2.msra.mxu0 0.0
  %1170 = vmatprep.subr.mxu0 0.0
  %1171 = vmatpush2.msra.mxu0 0.0
  %1172 = vmatprep.subr.mxu0 0.0
  %1173 = vmatpush2.msra.mxu0 0.0
  %1174 = vmatprep.subr.mxu0 0.0
  %1175 = vmatpush2.msra.mxu0 0.0
  %1176 = vmatprep.subr.mxu0 0.0
  %1177 = vmatpush2.msra.mxu0 0.0
  %1178 = vmatprep.subr.mxu0 0.0
  %1179 = vmatpush2.msra.mxu0 0.0
  %1180 = vmatprep.subr.mxu0 0.0
  %1181 = vmatpush2.msra.mxu0 0.0
  %1182 = vmatprep.subr.mxu0 0.0
  %1183 = vmatpush2.msra.mxu0 0.0
  %1184 = vmatprep.subr.mxu0 0.0
  %1185 = vmatpush2.msra.mxu0 0.0
  %1186 = vmatprep.subr.mxu0 0.0
  %1187 = vmatpush2.msra.mxu0 0.0
  %1188 = vmatprep.subr.mxu0 0.0
  %1189 = vmatpush2.msra.mxu0 0.0
  %1190 = vmatprep.mubr.f32.mxu0 0.0
  %1191 = vmatmul.mubr.f32.gmra.mxu0 %v221
  %v1192 = vpop.f32.mrf.mxu0
  %v1193 = vadd.f32 %v217, %v1192
  %v1194 = vpop.f32.mrf.mxu0
  %v1195 = vadd.f32 %v217, %v1194
  %1196 = vdwg.mxu0
  %1197 = vmatprep.subr.mxu0 0.0
  %1198 = vmatpush1.msra.mxu0 0.0
  %1199 = vmatprep.subr.mxu0 0.0
  %1200 = vmatpush1.msra.mxu0 0.0
  %1201 = vmatprep.subr.mxu0 0.0
  %1202 = vmatpush1.msra.mxu0 0.0
  %1203 = vmatprep.subr.mxu0 0.0
  %1204 = vmatpush1.msra.mxu0 0.0
  %1205 = vmatprep.subr.mxu0 0.0
  %1206 = vmatpush1.msra.mxu0 0.0
  %1207 = vmatprep.subr.mxu0 0.0
  %1208 = vmatpush1.msra.mxu0 0.0
  %1209 = vmatprep.subr.mxu0 0.0
  %1210 = vmatpush1.msra.mxu0 0.0
  %1211 = vmatprep.subr.mxu0 0.0
  %1212 = vmatpush1.msra.mxu0 0.0
  %1213 = vmatprep.subr.mxu0 0.0
  %1214 = vmatpush1.msra.mxu0 0.0
  %1215 = vmatprep.subr.mxu0 0.0
  %1216 = vmatpush1.msra.mxu0 0.0
  %1217 = vmatprep.subr.mxu0 0.0
  %1218 = vmatpush1.msra.mxu0 0.0
  %1219 = vmatprep.subr.mxu0 0.0
  %1220 = vmatpush1.msra.mxu0 0.0
  %1221 = vmatprep.subr.mxu0 0.0
  %1222 = vmatpush1.msra.mxu0 0.0
  %1223 = vmatprep.subr.mxu0 %v294
  %1224 = vmatpush1.msra.mxu0 %v291
  %1225 = vmatprep.subr.mxu0 %v108
  %1226 = vmatpush1.msra.mxu0 %v107
  %1227 = vmatprep.subr.mxu0 %v44
  %1228 = vmatpush1.msra.mxu0 %v43
  %1229 = vmatprep.subr.mxu0 0.0
  %1230 = vmatpush2.msra.mxu0 0.0
  %1231 = vmatprep.subr.mxu0 0.0
  %1232 = vmatpush2.msra.mxu0 0.0
  %1233 = vmatprep.subr.mxu0 0.0
  %1234 = vmatpush2.msra.mxu0 0.0
  %1235 = vmatprep.subr.mxu0 0.0
  %1236 = vmatpush2.msra.mxu0 0.0
  %1237 = vmatprep.subr.mxu0 0.0
  %1238 = vmatpush2.msra.mxu0 0.0
  %1239 = vmatprep.subr.mxu0 0.0
  %1240 = vmatpush2.msra.mxu0 0.0
  %1241 = vmatprep.subr.mxu0 0.0
  %1242 = vmatpush2.msra.mxu0 0.0
  %1243 = vmatprep.subr.mxu0 0.0
  %1244 = vmatpush2.msra.mxu0 0.0
  %1245 = vmatprep.subr.mxu0 0.0
  %1246 = vmatpush2.msra.mxu0 0.0
  %1247 = vmatprep.subr.mxu0 0.0
  %1248 = vmatpush2.msra.mxu0 0.0
  %1249 = vmatprep.subr.mxu0 0.0
  %1250 = vmatpush2.msra.mxu0 0.0
  %1251 = vmatprep.subr.mxu0 0.0
  %1252 = vmatpush2.msra.mxu0 0.0
  %1253 = vmatprep.subr.mxu0 0.0
  %1254 = vmatpush2.msra.mxu0 0.0
  %1255 = vmatprep.subr.mxu0 0.0
  %1256 = vmatpush2.msra.mxu0 0.0
  %1257 = vmatprep.subr.mxu0 0.0
  %1258 = vmatpush2.msra.mxu0 0.0
  %1259 = vmatprep.subr.mxu0 0.0
  %1260 = vmatpush2.msra.mxu0 0.0
  %1261 = vmatprep.mubr.f32.mxu0 0.0
  %1262 = vmatmul.mubr.f32.gmra.mxu0 %v221
  %v1263 = vpop.f32.mrf.mxu0
  %v1264 = vadd.f32 %v217, %v1263
  %v1265 = vpop.f32.mrf.mxu0
  %v1266 = vadd.f32 %v217, %v1265
  %1267 = vdwg.mxu0
  %1268 = vmatprep.subr.mxu0 0.0
  %1269 = vmatpush1.msra.mxu0 0.0
  %1270 = vmatprep.subr.mxu0 0.0
  %1271 = vmatpush1.msra.mxu0 0.0
  %1272 = vmatprep.subr.mxu0 0.0
  %1273 = vmatpush1.msra.mxu0 0.0
  %1274 = vmatprep.subr.mxu0 0.0
  %1275 = vmatpush1.msra.mxu0 0.0
  %1276 = vmatprep.subr.mxu0 0.0
  %1277 = vmatpush1.msra.mxu0 0.0
  %1278 = vmatprep.subr.mxu0 0.0
  %1279 = vmatpush1.msra.mxu0 0.0
  %1280 = vmatprep.subr.mxu0 0.0
  %1281 = vmatpush1.msra.mxu0 0.0
  %1282 = vmatprep.subr.mxu0 0.0
  %1283 = vmatpush1.msra.mxu0 0.0
  %1284 = vmatprep.subr.mxu0 0.0
  %1285 = vmatpush1.msra.mxu0 0.0
  %1286 = vmatprep.subr.mxu0 0.0
  %1287 = vmatpush1.msra.mxu0 0.0
  %1288 = vmatprep.subr.mxu0 0.0
  %1289 = vmatpush1.msra.mxu0 0.0
  %1290 = vmatprep.subr.mxu0 0.0
  %1291 = vmatpush1.msra.mxu0 0.0
  %1292 = vmatprep.subr.mxu0 0.0
  %1293 = vmatpush1.msra.mxu0 0.0
  %1294 = vmatprep.subr.mxu0 %v300
  %1295 = vmatpush1.msra.mxu0 %v297
  %1296 = vmatprep.subr.mxu0 %v110
  %1297 = vmatpush1.msra.mxu0 %v109
  %1298 = vmatprep.subr.mxu0 %v46
  %1299 = vmatpush1.msra.mxu0 %v45
  %1300 = vmatprep.subr.mxu0 0.0
  %1301 = vmatpush2.msra.mxu0 0.0
  %1302 = vmatprep.subr.mxu0 0.0
  %1303 = vmatpush2.msra.mxu0 0.0
  %1304 = vmatprep.subr.mxu0 0.0
  %1305 = vmatpush2.msra.mxu0 0.0
  %1306 = vmatprep.subr.mxu0 0.0
  %1307 = vmatpush2.msra.mxu0 0.0
  %1308 = vmatprep.subr.mxu0 0.0
  %1309 = vmatpush2.msra.mxu0 0.0
  %1310 = vmatprep.subr.mxu0 0.0
  %1311 = vmatpush2.msra.mxu0 0.0
  %1312 = vmatprep.subr.mxu0 0.0
  %1313 = vmatpush2.msra.mxu0 0.0
  %1314 = vmatprep.subr.mxu0 0.0
  %1315 = vmatpush2.msra.mxu0 0.0
  %1316 = vmatprep.subr.mxu0 0.0
  %1317 = vmatpush2.msra.mxu0 0.0
  %1318 = vmatprep.subr.mxu0 0.0
  %1319 = vmatpush2.msra.mxu0 0.0
  %1320 = vmatprep.subr.mxu0 0.0
  %1321 = vmatpush2.msra.mxu0 0.0
  %1322 = vmatprep.subr.mxu0 0.0
  %1323 = vmatpush2.msra.mxu0 0.0
  %1324 = vmatprep.subr.mxu0 0.0
  %1325 = vmatpush2.msra.mxu0 0.0
  %1326 = vmatprep.subr.mxu0 0.0
  %1327 = vmatpush2.msra.mxu0 0.0
  %1328 = vmatprep.subr.mxu0 0.0
  %1329 = vmatpush2.msra.mxu0 0.0
  %1330 = vmatprep.subr.mxu0 0.0
  %1331 = vmatpush2.msra.mxu0 0.0
  %1332 = vmatprep.mubr.f32.mxu0 0.0
  %1333 = vmatmul.mubr.f32.gmra.mxu0 %v221
  %v1334 = vpop.f32.mrf.mxu0
  %v1335 = vadd.f32 %v217, %v1334
  %v1336 = vpop.f32.mrf.mxu0
  %v1337 = vadd.f32 %v217, %v1336
  %1338 = vdwg.mxu0
  %1339 = vmatprep.subr.mxu0 0.0
  %1340 = vmatpush1.msra.mxu0 0.0
  %1341 = vmatprep.subr.mxu0 0.0
  %1342 = vmatpush1.msra.mxu0 0.0
  %1343 = vmatprep.subr.mxu0 0.0
  %1344 = vmatpush1.msra.mxu0 0.0
  %1345 = vmatprep.subr.mxu0 0.0
  %1346 = vmatpush1.msra.mxu0 0.0
  %1347 = vmatprep.subr.mxu0 0.0
  %1348 = vmatpush1.msra.mxu0 0.0
  %1349 = vmatprep.subr.mxu0 0.0
  %1350 = vmatpush1.msra.mxu0 0.0
  %1351 = vmatprep.subr.mxu0 0.0
  %1352 = vmatpush1.msra.mxu0 0.0
  %1353 = vmatprep.subr.mxu0 0.0
  %1354 = vmatpush1.msra.mxu0 0.0
  %1355 = vmatprep.subr.mxu0 0.0
  %1356 = vmatpush1.msra.mxu0 0.0
  %1357 = vmatprep.subr.mxu0 0.0
  %1358 = vmatpush1.msra.mxu0 0.0
  %1359 = vmatprep.subr.mxu0 0.0
  %1360 = vmatpush1.msra.mxu0 0.0
  %1361 = vmatprep.subr.mxu0 0.0
  %1362 = vmatpush1.msra.mxu0 0.0
  %1363 = vmatprep.subr.mxu0 0.0
  %1364 = vmatpush1.msra.mxu0 0.0
  %1365 = vmatprep.subr.mxu0 %v306
  %1366 = vmatpush1.msra.mxu0 %v303
  %1367 = vmatprep.subr.mxu0 %v112
  %1368 = vmatpush1.msra.mxu0 %v111
  %1369 = vmatprep.subr.mxu0 %v48
  %1370 = vmatpush1.msra.mxu0 %v47
  %1371 = vmatprep.subr.mxu0 0.0
  %1372 = vmatpush2.msra.mxu0 0.0
  %1373 = vmatprep.subr.mxu0 0.0
  %1374 = vmatpush2.msra.mxu0 0.0
  %1375 = vmatprep.subr.mxu0 0.0
  %1376 = vmatpush2.msra.mxu0 0.0
  %1377 = vmatprep.subr.mxu0 0.0
  %1378 = vmatpush2.msra.mxu0 0.0
  %1379 = vmatprep.subr.mxu0 0.0
  %1380 = vmatpush2.msra.mxu0 0.0
  %1381 = vmatprep.subr.mxu0 0.0
  %1382 = vmatpush2.msra.mxu0 0.0
  %1383 = vmatprep.subr.mxu0 0.0
  %1384 = vmatpush2.msra.mxu0 0.0
  %1385 = vmatprep.subr.mxu0 0.0
  %1386 = vmatpush2.msra.mxu0 0.0
  %1387 = vmatprep.subr.mxu0 0.0
  %1388 = vmatpush2.msra.mxu0 0.0
  %1389 = vmatprep.subr.mxu0 0.0
  %1390 = vmatpush2.msra.mxu0 0.0
  %1391 = vmatprep.subr.mxu0 0.0
  %1392 = vmatpush2.msra.mxu0 0.0
  %1393 = vmatprep.subr.mxu0 0.0
  %1394 = vmatpush2.msra.mxu0 0.0
  %1395 = vmatprep.subr.mxu0 0.0
  %1396 = vmatpush2.msra.mxu0 0.0
  %1397 = vmatprep.subr.mxu0 0.0
  %1398 = vmatpush2.msra.mxu0 0.0
  %1399 = vmatprep.subr.mxu0 0.0
  %1400 = vmatpush2.msra.mxu0 0.0
  %1401 = vmatprep.subr.mxu0 0.0
  %1402 = vmatpush2.msra.mxu0 0.0
  %1403 = vmatprep.mubr.f32.mxu0 0.0
  %1404 = vmatmul.mubr.f32.gmra.mxu0 %v221
  %v1405 = vpop.f32.mrf.mxu0
  %v1406 = vadd.f32 %v217, %v1405
  %v1407 = vpop.f32.mrf.mxu0
  %v1408 = vadd.f32 %v217, %v1407
  %1409 = vdwg.mxu0
  %1410 = vmatprep.subr.mxu0 0.0
  %1411 = vmatpush1.msra.mxu0 0.0
  %1412 = vmatprep.subr.mxu0 0.0
  %1413 = vmatpush1.msra.mxu0 0.0
  %1414 = vmatprep.subr.mxu0 0.0
  %1415 = vmatpush1.msra.mxu0 0.0
  %1416 = vmatprep.subr.mxu0 0.0
  %1417 = vmatpush1.msra.mxu0 0.0
  %1418 = vmatprep.subr.mxu0 0.0
  %1419 = vmatpush1.msra.mxu0 0.0
  %1420 = vmatprep.subr.mxu0 0.0
  %1421 = vmatpush1.msra.mxu0 0.0
  %1422 = vmatprep.subr.mxu0 0.0
  %1423 = vmatpush1.msra.mxu0 0.0
  %1424 = vmatprep.subr.mxu0 0.0
  %1425 = vmatpush1.msra.mxu0 0.0
  %1426 = vmatprep.subr.mxu0 0.0
  %1427 = vmatpush1.msra.mxu0 0.0
  %1428 = vmatprep.subr.mxu0 0.0
  %1429 = vmatpush1.msra.mxu0 0.0
  %1430 = vmatprep.subr.mxu0 0.0
  %1431 = vmatpush1.msra.mxu0 0.0
  %1432 = vmatprep.subr.mxu0 0.0
  %1433 = vmatpush1.msra.mxu0 0.0
  %1434 = vmatprep.subr.mxu0 0.0
  %1435 = vmatpush1.msra.mxu0 0.0
  %1436 = vmatprep.subr.mxu0 %v312
  %1437 = vmatpush1.msra.mxu0 %v309
  %1438 = vmatprep.subr.mxu0 %v114
  %1439 = vmatpush1.msra.mxu0 %v113
  %1440 = vmatprep.subr.mxu0 %v50
  %1441 = vmatpush1.msra.mxu0 %v49
  %1442 = vmatprep.subr.mxu0 0.0
  %1443 = vmatpush2.msra.mxu0 0.0
  %1444 = vmatprep.subr.mxu0 0.0
  %1445 = vmatpush2.msra.mxu0 0.0
  %1446 = vmatprep.subr.mxu0 0.0
  %1447 = vmatpush2.msra.mxu0 0.0
  %1448 = vmatprep.subr.mxu0 0.0
  %1449 = vmatpush2.msra.mxu0 0.0
  %1450 = vmatprep.subr.mxu0 0.0
  %1451 = vmatpush2.msra.mxu0 0.0
  %1452 = vmatprep.subr.mxu0 0.0
  %1453 = vmatpush2.msra.mxu0 0.0
  %1454 = vmatprep.subr.mxu0 0.0
  %1455 = vmatpush2.msra.mxu0 0.0
  %1456 = vmatprep.subr.mxu0 0.0
  %1457 = vmatpush2.msra.mxu0 0.0
  %1458 = vmatprep.subr.mxu0 0.0
  %1459 = vmatpush2.msra.mxu0 0.0
  %1460 = vmatprep.subr.mxu0 0.0
  %1461 = vmatpush2.msra.mxu0 0.0
  %1462 = vmatprep.subr.mxu0 0.0
  %1463 = vmatpush2.msra.mxu0 0.0
  %1464 = vmatprep.subr.mxu0 0.0
  %1465 = vmatpush2.msra.mxu0 0.0
  %1466 = vmatprep.subr.mxu0 0.0
  %1467 = vmatpush2.msra.mxu0 0.0
  %1468 = vmatprep.subr.mxu0 0.0
  %1469 = vmatpush2.msra.mxu0 0.0
  %1470 = vmatprep.subr.mxu0 0.0
  %1471 = vmatpush2.msra.mxu0 0.0
  %1472 = vmatprep.subr.mxu0 0.0
  %1473 = vmatpush2.msra.mxu0 0.0
  %1474 = vmatprep.mubr.f32.mxu0 0.0
  %1475 = vmatmul.mubr.f32.gmra.mxu0 %v221
  %v1476 = vpop.f32.mrf.mxu0
  %v1477 = vadd.f32 %v217, %v1476
  %v1478 = vpop.f32.mrf.mxu0
  %v1479 = vadd.f32 %v217, %v1478
  %1480 = vdwg.mxu0
  %1481 = vmatprep.subr.mxu0 0.0
  %1482 = vmatpush1.msra.mxu0 0.0
  %1483 = vmatprep.subr.mxu0 0.0
  %1484 = vmatpush1.msra.mxu0 0.0
  %1485 = vmatprep.subr.mxu0 0.0
  %1486 = vmatpush1.msra.mxu0 0.0
  %1487 = vmatprep.subr.mxu0 0.0
  %1488 = vmatpush1.msra.mxu0 0.0
  %1489 = vmatprep.subr.mxu0 0.0
  %1490 = vmatpush1.msra.mxu0 0.0
  %1491 = vmatprep.subr.mxu0 0.0
  %1492 = vmatpush1.msra.mxu0 0.0
  %1493 = vmatprep.subr.mxu0 0.0
  %1494 = vmatpush1.msra.mxu0 0.0
  %1495 = vmatprep.subr.mxu0 0.0
  %1496 = vmatpush1.msra.mxu0 0.0
  %1497 = vmatprep.subr.mxu0 0.0
  %1498 = vmatpush1.msra.mxu0 0.0
  %1499 = vmatprep.subr.mxu0 0.0
  %1500 = vmatpush1.msra.mxu0 0.0
  %1501 = vmatprep.subr.mxu0 0.0
  %1502 = vmatpush1.msra.mxu0 0.0
  %1503 = vmatprep.subr.mxu0 0.0
  %1504 = vmatpush1.msra.mxu0 0.0
  %1505 = vmatprep.subr.mxu0 0.0
  %1506 = vmatpush1.msra.mxu0 0.0
  %1507 = vmatprep.subr.mxu0 %v318
  %1508 = vmatpush1.msra.mxu0 %v315
  %1509 = vmatprep.subr.mxu0 %v116
  %1510 = vmatpush1.msra.mxu0 %v115
  %1511 = vmatprep.subr.mxu0 %v52
  %1512 = vmatpush1.msra.mxu0 %v51
  %1513 = vmatprep.subr.mxu0 0.0
  %1514 = vmatpush2.msra.mxu0 0.0
  %1515 = vmatprep.subr.mxu0 0.0
  %1516 = vmatpush2.msra.mxu0 0.0
  %1517 = vmatprep.subr.mxu0 0.0
  %1518 = vmatpush2.msra.mxu0 0.0
  %1519 = vmatprep.subr.mxu0 0.0
  %1520 = vmatpush2.msra.mxu0 0.0
  %1521 = vmatprep.subr.mxu0 0.0
  %1522 = vmatpush2.msra.mxu0 0.0
  %1523 = vmatprep.subr.mxu0 0.0
  %1524 = vmatpush2.msra.mxu0 0.0
  %1525 = vmatprep.subr.mxu0 0.0
  %1526 = vmatpush2.msra.mxu0 0.0
  %1527 = vmatprep.subr.mxu0 0.0
  %1528 = vmatpush2.msra.mxu0 0.0
  %1529 = vmatprep.subr.mxu0 0.0
  %1530 = vmatpush2.msra.mxu0 0.0
  %1531 = vmatprep.subr.mxu0 0.0
  %1532 = vmatpush2.msra.mxu0 0.0
  %1533 = vmatprep.subr.mxu0 0.0
  %1534 = vmatpush2.msra.mxu0 0.0
  %1535 = vmatprep.subr.mxu0 0.0
  %1536 = vmatpush2.msra.mxu0 0.0
  %1537 = vmatprep.subr.mxu0 0.0
  %1538 = vmatpush2.msra.mxu0 0.0
  %1539 = vmatprep.subr.mxu0 0.0
  %1540 = vmatpush2.msra.mxu0 0.0
  %1541 = vmatprep.subr.mxu0 0.0
  %1542 = vmatpush2.msra.mxu0 0.0
  %1543 = vmatprep.subr.mxu0 0.0
  %1544 = vmatpush2.msra.mxu0 0.0
  %1545 = vmatprep.mubr.f32.mxu0 0.0
  %1546 = vmatmul.mubr.f32.gmra.mxu0 %v221
  %v1547 = vpop.f32.mrf.mxu0
  %v1548 = vadd.f32 %v217, %v1547
  %v1549 = vpop.f32.mrf.mxu0
  %v1550 = vadd.f32 %v217, %v1549
  %1551 = vdwg.mxu0
  %1552 = vmatprep.subr.mxu0 0.0
  %1553 = vmatpush1.msra.mxu0 0.0
  %1554 = vmatprep.subr.mxu0 0.0
  %1555 = vmatpush1.msra.mxu0 0.0
  %1556 = vmatprep.subr.mxu0 0.0
  %1557 = vmatpush1.msra.mxu0 0.0
  %1558 = vmatprep.subr.mxu0 0.0
  %1559 = vmatpush1.msra.mxu0 0.0
  %1560 = vmatprep.subr.mxu0 0.0
  %1561 = vmatpush1.msra.mxu0 0.0
  %1562 = vmatprep.subr.mxu0 0.0
  %1563 = vmatpush1.msra.mxu0 0.0
  %1564 = vmatprep.subr.mxu0 0.0
  %1565 = vmatpush1.msra.mxu0 0.0
  %1566 = vmatprep.subr.mxu0 0.0
  %1567 = vmatpush1.msra.mxu0 0.0
  %1568 = vmatprep.subr.mxu0 0.0
  %1569 = vmatpush1.msra.mxu0 0.0
  %1570 = vmatprep.subr.mxu0 0.0
  %1571 = vmatpush1.msra.mxu0 0.0
  %1572 = vmatprep.subr.mxu0 0.0
  %1573 = vmatpush1.msra.mxu0 0.0
  %1574 = vmatprep.subr.mxu0 0.0
  %1575 = vmatpush1.msra.mxu0 0.0
  %1576 = vmatprep.subr.mxu0 0.0
  %1577 = vmatpush1.msra.mxu0 0.0
  %1578 = vmatprep.subr.mxu0 %v324
  %1579 = vmatpush1.msra.mxu0 %v321
  %1580 = vmatprep.subr.mxu0 %v118
  %1581 = vmatpush1.msra.mxu0 %v117
  %1582 = vmatprep.subr.mxu0 %v54
  %1583 = vmatpush1.msra.mxu0 %v53
  %1584 = vmatprep.subr.mxu0 0.0
  %1585 = vmatpush2.msra.mxu0 0.0
  %1586 = vmatprep.subr.mxu0 0.0
  %1587 = vmatpush2.msra.mxu0 0.0
  %1588 = vmatprep.subr.mxu0 0.0
  %1589 = vmatpush2.msra.mxu0 0.0
  %1590 = vmatprep.subr.mxu0 0.0
  %1591 = vmatpush2.msra.mxu0 0.0
  %1592 = vmatprep.subr.mxu0 0.0
  %1593 = vmatpush2.msra.mxu0 0.0
  %1594 = vmatprep.subr.mxu0 0.0
  %1595 = vmatpush2.msra.mxu0 0.0
  %1596 = vmatprep.subr.mxu0 0.0
  %1597 = vmatpush2.msra.mxu0 0.0
  %1598 = vmatprep.subr.mxu0 0.0
  %1599 = vmatpush2.msra.mxu0 0.0
  %1600 = vmatprep.subr.mxu0 0.0
  %1601 = vmatpush2.msra.mxu0 0.0
  %1602 = vmatprep.subr.mxu0 0.0
  %1603 = vmatpush2.msra.mxu0 0.0
  %1604 = vmatprep.subr.mxu0 0.0
  %1605 = vmatpush2.msra.mxu0 0.0
  %1606 = vmatprep.subr.mxu0 0.0
  %1607 = vmatpush2.msra.mxu0 0.0
  %1608 = vmatprep.subr.mxu0 0.0
  %1609 = vmatpush2.msra.mxu0 0.0
  %1610 = vmatprep.subr.mxu0 0.0
  %1611 = vmatpush2.msra.mxu0 0.0
  %1612 = vmatprep.subr.mxu0 0.0
  %1613 = vmatpush2.msra.mxu0 0.0
  %1614 = vmatprep.subr.mxu0 0.0
  %1615 = vmatpush2.msra.mxu0 0.0
  %1616 = vmatprep.mubr.f32.mxu0 0.0
  %1617 = vmatmul.mubr.f32.gmra.mxu0 %v221
  %v1618 = vpop.f32.mrf.mxu0
  %v1619 = vadd.f32 %v217, %v1618
  %v1620 = vpop.f32.mrf.mxu0
  %v1621 = vadd.f32 %v217, %v1620
  %1622 = vdwg.mxu0
  %1623 = vmatprep.subr.mxu0 0.0
  %1624 = vmatpush1.msra.mxu0 0.0
  %1625 = vmatprep.subr.mxu0 0.0
  %1626 = vmatpush1.msra.mxu0 0.0
  %1627 = vmatprep.subr.mxu0 0.0
  %1628 = vmatpush1.msra.mxu0 0.0
  %1629 = vmatprep.subr.mxu0 0.0
  %1630 = vmatpush1.msra.mxu0 0.0
  %1631 = vmatprep.subr.mxu0 0.0
  %1632 = vmatpush1.msra.mxu0 0.0
  %1633 = vmatprep.subr.mxu0 0.0
  %1634 = vmatpush1.msra.mxu0 0.0
  %1635 = vmatprep.subr.mxu0 0.0
  %1636 = vmatpush1.msra.mxu0 0.0
  %1637 = vmatprep.subr.mxu0 0.0
  %1638 = vmatpush1.msra.mxu0 0.0
  %1639 = vmatprep.subr.mxu0 0.0
  %1640 = vmatpush1.msra.mxu0 0.0
  %1641 = vmatprep.subr.mxu0 0.0
  %1642 = vmatpush1.msra.mxu0 0.0
  %1643 = vmatprep.subr.mxu0 0.0
  %1644 = vmatpush1.msra.mxu0 0.0
  %1645 = vmatprep.subr.mxu0 0.0
  %1646 = vmatpush1.msra.mxu0 0.0
  %1647 = vmatprep.subr.mxu0 0.0
  %1648 = vmatpush1.msra.mxu0 0.0
  %1649 = vmatprep.subr.mxu0 %v330
  %1650 = vmatpush1.msra.mxu0 %v327
  %1651 = vmatprep.subr.mxu0 %v120
  %1652 = vmatpush1.msra.mxu0 %v119
  %1653 = vmatprep.subr.mxu0 %v56
  %1654 = vmatpush1.msra.mxu0 %v55
  %1655 = vmatprep.subr.mxu0 0.0
  %1656 = vmatpush2.msra.mxu0 0.0
  %1657 = vmatprep.subr.mxu0 0.0
  %1658 = vmatpush2.msra.mxu0 0.0
  %1659 = vmatprep.subr.mxu0 0.0
  %1660 = vmatpush2.msra.mxu0 0.0
  %1661 = vmatprep.subr.mxu0 0.0
  %1662 = vmatpush2.msra.mxu0 0.0
  %1663 = vmatprep.subr.mxu0 0.0
  %1664 = vmatpush2.msra.mxu0 0.0
  %1665 = vmatprep.subr.mxu0 0.0
  %1666 = vmatpush2.msra.mxu0 0.0
  %1667 = vmatprep.subr.mxu0 0.0
  %1668 = vmatpush2.msra.mxu0 0.0
  %1669 = vmatprep.subr.mxu0 0.0
  %1670 = vmatpush2.msra.mxu0 0.0
  %1671 = vmatprep.subr.mxu0 0.0
  %1672 = vmatpush2.msra.mxu0 0.0
  %1673 = vmatprep.subr.mxu0 0.0
  %1674 = vmatpush2.msra.mxu0 0.0
  %1675 = vmatprep.subr.mxu0 0.0
  %1676 = vmatpush2.msra.mxu0 0.0
  %1677 = vmatprep.subr.mxu0 0.0
  %1678 = vmatpush2.msra.mxu0 0.0
  %1679 = vmatprep.subr.mxu0 0.0
  %1680 = vmatpush2.msra.mxu0 0.0
  %1681 = vmatprep.subr.mxu0 0.0
  %1682 = vmatpush2.msra.mxu0 0.0
  %1683 = vmatprep.subr.mxu0 0.0
  %1684 = vmatpush2.msra.mxu0 0.0
  %1685 = vmatprep.subr.mxu0 0.0
  %1686 = vmatpush2.msra.mxu0 0.0
  %1687 = vmatprep.mubr.f32.mxu0 0.0
  %1688 = vmatmul.mubr.f32.gmra.mxu0 %v221
  %v1689 = vpop.f32.mrf.mxu0
  %v1690 = vadd.f32 %v217, %v1689
  %v1691 = vpop.f32.mrf.mxu0
  %v1692 = vadd.f32 %v217, %v1691
  %1693 = vdwg.mxu0
  %1694 = vmatprep.subr.mxu0 0.0
  %1695 = vmatpush1.msra.mxu0 0.0
  %1696 = vmatprep.subr.mxu0 0.0
  %1697 = vmatpush1.msra.mxu0 0.0
  %1698 = vmatprep.subr.mxu0 0.0
  %1699 = vmatpush1.msra.mxu0 0.0
  %1700 = vmatprep.subr.mxu0 0.0
  %1701 = vmatpush1.msra.mxu0 0.0
  %1702 = vmatprep.subr.mxu0 0.0
  %1703 = vmatpush1.msra.mxu0 0.0
  %1704 = vmatprep.subr.mxu0 0.0
  %1705 = vmatpush1.msra.mxu0 0.0
  %1706 = vmatprep.subr.mxu0 0.0
  %1707 = vmatpush1.msra.mxu0 0.0
  %1708 = vmatprep.subr.mxu0 0.0
  %1709 = vmatpush1.msra.mxu0 0.0
  %1710 = vmatprep.subr.mxu0 0.0
  %1711 = vmatpush1.msra.mxu0 0.0
  %1712 = vmatprep.subr.mxu0 0.0
  %1713 = vmatpush1.msra.mxu0 0.0
  %1714 = vmatprep.subr.mxu0 0.0
  %1715 = vmatpush1.msra.mxu0 0.0
  %1716 = vmatprep.subr.mxu0 0.0
  %1717 = vmatpush1.msra.mxu0 0.0
  %1718 = vmatprep.subr.mxu0 0.0
  %1719 = vmatpush1.msra.mxu0 0.0
  %1720 = vmatprep.subr.mxu0 %v336
  %1721 = vmatpush1.msra.mxu0 %v333
  %1722 = vmatprep.subr.mxu0 %v122
  %1723 = vmatpush1.msra.mxu0 %v121
  %1724 = vmatprep.subr.mxu0 %v58
  %1725 = vmatpush1.msra.mxu0 %v57
  %1726 = vmatprep.subr.mxu0 0.0
  %1727 = vmatpush2.msra.mxu0 0.0
  %1728 = vmatprep.subr.mxu0 0.0
  %1729 = vmatpush2.msra.mxu0 0.0
  %1730 = vmatprep.subr.mxu0 0.0
  %1731 = vmatpush2.msra.mxu0 0.0
  %1732 = vmatprep.subr.mxu0 0.0
  %1733 = vmatpush2.msra.mxu0 0.0
  %1734 = vmatprep.subr.mxu0 0.0
  %1735 = vmatpush2.msra.mxu0 0.0
  %1736 = vmatprep.subr.mxu0 0.0
  %1737 = vmatpush2.msra.mxu0 0.0
  %1738 = vmatprep.subr.mxu0 0.0
  %1739 = vmatpush2.msra.mxu0 0.0
  %1740 = vmatprep.subr.mxu0 0.0
  %1741 = vmatpush2.msra.mxu0 0.0
  %1742 = vmatprep.subr.mxu0 0.0
  %1743 = vmatpush2.msra.mxu0 0.0
  %1744 = vmatprep.subr.mxu0 0.0
  %1745 = vmatpush2.msra.mxu0 0.0
  %1746 = vmatprep.subr.mxu0 0.0
  %1747 = vmatpush2.msra.mxu0 0.0
  %1748 = vmatprep.subr.mxu0 0.0
  %1749 = vmatpush2.msra.mxu0 0.0
  %1750 = vmatprep.subr.mxu0 0.0
  %1751 = vmatpush2.msra.mxu0 0.0
  %1752 = vmatprep.subr.mxu0 0.0
  %1753 = vmatpush2.msra.mxu0 0.0
  %1754 = vmatprep.subr.mxu0 0.0
  %1755 = vmatpush2.msra.mxu0 0.0
  %1756 = vmatprep.subr.mxu0 0.0
  %1757 = vmatpush2.msra.mxu0 0.0
  %1758 = vmatprep.mubr.f32.mxu0 0.0
  %1759 = vmatmul.mubr.f32.gmra.mxu0 %v221
  %v1760 = vpop.f32.mrf.mxu0
  %v1761 = vadd.f32 %v217, %v1760
  %v1762 = vpop.f32.mrf.mxu0
  %v1763 = vadd.f32 %v217, %v1762
  %1764 = vdwg.mxu0
  %1765 = vmatprep.subr.mxu0 0.0
  %1766 = vmatpush1.msra.mxu0 0.0
  %1767 = vmatprep.subr.mxu0 0.0
  %1768 = vmatpush1.msra.mxu0 0.0
  %1769 = vmatprep.subr.mxu0 0.0
  %1770 = vmatpush1.msra.mxu0 0.0
  %1771 = vmatprep.subr.mxu0 0.0
  %1772 = vmatpush1.msra.mxu0 0.0
  %1773 = vmatprep.subr.mxu0 0.0
  %1774 = vmatpush1.msra.mxu0 0.0
  %1775 = vmatprep.subr.mxu0 0.0
  %1776 = vmatpush1.msra.mxu0 0.0
  %1777 = vmatprep.subr.mxu0 0.0
  %1778 = vmatpush1.msra.mxu0 0.0
  %1779 = vmatprep.subr.mxu0 0.0
  %1780 = vmatpush1.msra.mxu0 0.0
  %1781 = vmatprep.subr.mxu0 0.0
  %1782 = vmatpush1.msra.mxu0 0.0
  %1783 = vmatprep.subr.mxu0 0.0
  %1784 = vmatpush1.msra.mxu0 0.0
  %1785 = vmatprep.subr.mxu0 0.0
  %1786 = vmatpush1.msra.mxu0 0.0
  %1787 = vmatprep.subr.mxu0 0.0
  %1788 = vmatpush1.msra.mxu0 0.0
  %1789 = vmatprep.subr.mxu0 0.0
  %1790 = vmatpush1.msra.mxu0 0.0
  %1791 = vmatprep.subr.mxu0 %v342
  %1792 = vmatpush1.msra.mxu0 %v339
  %1793 = vmatprep.subr.mxu0 %v124
  %1794 = vmatpush1.msra.mxu0 %v123
  %1795 = vmatprep.subr.mxu0 %v60
  %1796 = vmatpush1.msra.mxu0 %v59
  %1797 = vmatprep.subr.mxu0 0.0
  %1798 = vmatpush2.msra.mxu0 0.0
  %1799 = vmatprep.subr.mxu0 0.0
  %1800 = vmatpush2.msra.mxu0 0.0
  %1801 = vmatprep.subr.mxu0 0.0
  %1802 = vmatpush2.msra.mxu0 0.0
  %1803 = vmatprep.subr.mxu0 0.0
  %1804 = vmatpush2.msra.mxu0 0.0
  %1805 = vmatprep.subr.mxu0 0.0
  %1806 = vmatpush2.msra.mxu0 0.0
  %1807 = vmatprep.subr.mxu0 0.0
  %1808 = vmatpush2.msra.mxu0 0.0
  %1809 = vmatprep.subr.mxu0 0.0
  %1810 = vmatpush2.msra.mxu0 0.0
  %1811 = vmatprep.subr.mxu0 0.0
  %1812 = vmatpush2.msra.mxu0 0.0
  %1813 = vmatprep.subr.mxu0 0.0
  %1814 = vmatpush2.msra.mxu0 0.0
  %1815 = vmatprep.subr.mxu0 0.0
  %1816 = vmatpush2.msra.mxu0 0.0
  %1817 = vmatprep.subr.mxu0 0.0
  %1818 = vmatpush2.msra.mxu0 0.0
  %1819 = vmatprep.subr.mxu0 0.0
  %1820 = vmatpush2.msra.mxu0 0.0
  %1821 = vmatprep.subr.mxu0 0.0
  %1822 = vmatpush2.msra.mxu0 0.0
  %1823 = vmatprep.subr.mxu0 0.0
  %1824 = vmatpush2.msra.mxu0 0.0
  %1825 = vmatprep.subr.mxu0 0.0
  %1826 = vmatpush2.msra.mxu0 0.0
  %1827 = vmatprep.subr.mxu0 0.0
  %1828 = vmatpush2.msra.mxu0 0.0
  %1829 = vmatprep.mubr.f32.mxu0 0.0
  %1830 = vmatmul.mubr.f32.gmra.mxu0 %v221
  %v1831 = vpop.f32.mrf.mxu0
  %v1832 = vadd.f32 %v217, %v1831
  %v1833 = vpop.f32.mrf.mxu0
  %v1834 = vadd.f32 %v217, %v1833
  %1835 = vdwg.mxu0
  %1836 = vmatprep.subr.mxu0 0.0
  %1837 = vmatpush1.msra.mxu0 0.0
  %1838 = vmatprep.subr.mxu0 0.0
  %1839 = vmatpush1.msra.mxu0 0.0
  %1840 = vmatprep.subr.mxu0 0.0
  %1841 = vmatpush1.msra.mxu0 0.0
  %1842 = vmatprep.subr.mxu0 0.0
  %1843 = vmatpush1.msra.mxu0 0.0
  %1844 = vmatprep.subr.mxu0 0.0
  %1845 = vmatpush1.msra.mxu0 0.0
  %1846 = vmatprep.subr.mxu0 0.0
  %1847 = vmatpush1.msra.mxu0 0.0
  %1848 = vmatprep.subr.mxu0 0.0
  %1849 = vmatpush1.msra.mxu0 0.0
  %1850 = vmatprep.subr.mxu0 0.0
  %1851 = vmatpush1.msra.mxu0 0.0
  %1852 = vmatprep.subr.mxu0 0.0
  %1853 = vmatpush1.msra.mxu0 0.0
  %1854 = vmatprep.subr.mxu0 0.0
  %1855 = vmatpush1.msra.mxu0 0.0
  %1856 = vmatprep.subr.mxu0 0.0
  %1857 = vmatpush1.msra.mxu0 0.0
  %1858 = vmatprep.subr.mxu0 0.0
  %1859 = vmatpush1.msra.mxu0 0.0
  %1860 = vmatprep.subr.mxu0 0.0
  %1861 = vmatpush1.msra.mxu0 0.0
  %1862 = vmatprep.subr.mxu0 %v348
  %1863 = vmatpush1.msra.mxu0 %v345
  %1864 = vmatprep.subr.mxu0 %v126
  %1865 = vmatpush1.msra.mxu0 %v125
  %1866 = vmatprep.subr.mxu0 %v62
  %1867 = vmatpush1.msra.mxu0 %v61
  %1868 = vmatprep.subr.mxu0 0.0
  %1869 = vmatpush2.msra.mxu0 0.0
  %1870 = vmatprep.subr.mxu0 0.0
  %1871 = vmatpush2.msra.mxu0 0.0
  %1872 = vmatprep.subr.mxu0 0.0
  %1873 = vmatpush2.msra.mxu0 0.0
  %1874 = vmatprep.subr.mxu0 0.0
  %1875 = vmatpush2.msra.mxu0 0.0
  %1876 = vmatprep.subr.mxu0 0.0
  %1877 = vmatpush2.msra.mxu0 0.0
  %1878 = vmatprep.subr.mxu0 0.0
  %1879 = vmatpush2.msra.mxu0 0.0
  %1880 = vmatprep.subr.mxu0 0.0
  %1881 = vmatpush2.msra.mxu0 0.0
  %1882 = vmatprep.subr.mxu0 0.0
  %1883 = vmatpush2.msra.mxu0 0.0
  %1884 = vmatprep.subr.mxu0 0.0
  %1885 = vmatpush2.msra.mxu0 0.0
  %1886 = vmatprep.subr.mxu0 0.0
  %1887 = vmatpush2.msra.mxu0 0.0
  %1888 = vmatprep.subr.mxu0 0.0
  %1889 = vmatpush2.msra.mxu0 0.0
  %1890 = vmatprep.subr.mxu0 0.0
  %1891 = vmatpush2.msra.mxu0 0.0
  %1892 = vmatprep.subr.mxu0 0.0
  %1893 = vmatpush2.msra.mxu0 0.0
  %1894 = vmatprep.subr.mxu0 0.0
  %1895 = vmatpush2.msra.mxu0 0.0
  %1896 = vmatprep.subr.mxu0 0.0
  %1897 = vmatpush2.msra.mxu0 0.0
  %1898 = vmatprep.subr.mxu0 0.0
  %1899 = vmatpush2.msra.mxu0 0.0
  %1900 = vmatprep.mubr.f32.mxu0 0.0
  %1901 = vmatmul.mubr.f32.gmra.mxu0 %v221
  %v1902 = vpop.f32.mrf.mxu0
  %v1903 = vadd.f32 %v217, %v1902
  %v1904 = vpop.f32.mrf.mxu0
  %v1905 = vadd.f32 %v217, %v1904
  %1906 = vdwg.mxu0
  %1907 = vmatprep.subr.mxu0 0.0
  %1908 = vmatpush1.msra.mxu0 0.0
  %1909 = vmatprep.subr.mxu0 0.0
  %1910 = vmatpush1.msra.mxu0 0.0
  %1911 = vmatprep.subr.mxu0 0.0
  %1912 = vmatpush1.msra.mxu0 0.0
  %1913 = vmatprep.subr.mxu0 0.0
  %1914 = vmatpush1.msra.mxu0 0.0
  %1915 = vmatprep.subr.mxu0 0.0
  %1916 = vmatpush1.msra.mxu0 0.0
  %1917 = vmatprep.subr.mxu0 0.0
  %1918 = vmatpush1.msra.mxu0 0.0
  %1919 = vmatprep.subr.mxu0 0.0
  %1920 = vmatpush1.msra.mxu0 0.0
  %1921 = vmatprep.subr.mxu0 0.0
  %1922 = vmatpush1.msra.mxu0 0.0
  %1923 = vmatprep.subr.mxu0 0.0
  %1924 = vmatpush1.msra.mxu0 0.0
  %1925 = vmatprep.subr.mxu0 0.0
  %1926 = vmatpush1.msra.mxu0 0.0
  %1927 = vmatprep.subr.mxu0 0.0
  %1928 = vmatpush1.msra.mxu0 0.0
  %1929 = vmatprep.subr.mxu0 0.0
  %1930 = vmatpush1.msra.mxu0 0.0
  %1931 = vmatprep.subr.mxu0 0.0
  %1932 = vmatpush1.msra.mxu0 0.0
  %1933 = vmatprep.subr.mxu0 %v354
  %1934 = vmatpush1.msra.mxu0 %v351
  %1935 = vmatprep.subr.mxu0 %v128
  %1936 = vmatpush1.msra.mxu0 %v127
  %1937 = vmatprep.subr.mxu0 %v64
  %1938 = vmatpush1.msra.mxu0 %v63
  %1939 = vmatprep.subr.mxu0 0.0
  %1940 = vmatpush2.msra.mxu0 0.0
  %1941 = vmatprep.subr.mxu0 0.0
  %1942 = vmatpush2.msra.mxu0 0.0
  %1943 = vmatprep.subr.mxu0 0.0
  %1944 = vmatpush2.msra.mxu0 0.0
  %1945 = vmatprep.subr.mxu0 0.0
  %1946 = vmatpush2.msra.mxu0 0.0
  %1947 = vmatprep.subr.mxu0 0.0
  %1948 = vmatpush2.msra.mxu0 0.0
  %1949 = vmatprep.subr.mxu0 0.0
  %1950 = vmatpush2.msra.mxu0 0.0
  %1951 = vmatprep.subr.mxu0 0.0
  %1952 = vmatpush2.msra.mxu0 0.0
  %1953 = vmatprep.subr.mxu0 0.0
  %1954 = vmatpush2.msra.mxu0 0.0
  %1955 = vmatprep.subr.mxu0 0.0
  %1956 = vmatpush2.msra.mxu0 0.0
  %1957 = vmatprep.subr.mxu0 0.0
  %1958 = vmatpush2.msra.mxu0 0.0
  %1959 = vmatprep.subr.mxu0 0.0
  %1960 = vmatpush2.msra.mxu0 0.0
  %1961 = vmatprep.subr.mxu0 0.0
  %1962 = vmatpush2.msra.mxu0 0.0
  %1963 = vmatprep.subr.mxu0 0.0
  %1964 = vmatpush2.msra.mxu0 0.0
  %1965 = vmatprep.subr.mxu0 0.0
  %1966 = vmatpush2.msra.mxu0 0.0
  %1967 = vmatprep.subr.mxu0 0.0
  %1968 = vmatpush2.msra.mxu0 0.0
  %1969 = vmatprep.subr.mxu0 0.0
  %1970 = vmatpush2.msra.mxu0 0.0
  %1971 = vmatprep.mubr.f32.mxu0 0.0
  %1972 = vmatmul.mubr.f32.gmra.mxu0 %v221
  %v1973 = vpop.f32.mrf.mxu0
  %v1974 = vadd.f32 %v217, %v1973
  %v1975 = vpop.f32.mrf.mxu0
  %v1976 = vadd.f32 %v217, %v1975
  %1977 = vdwg.mxu0
  %1978 = vmatprep.subr.mxu0 0.0
  %1979 = vmatpush1.msra.mxu0 0.0
  %1980 = vmatprep.subr.mxu0 0.0
  %1981 = vmatpush1.msra.mxu0 0.0
  %1982 = vmatprep.subr.mxu0 0.0
  %1983 = vmatpush1.msra.mxu0 0.0
  %1984 = vmatprep.subr.mxu0 0.0
  %1985 = vmatpush1.msra.mxu0 0.0
  %1986 = vmatprep.subr.mxu0 0.0
  %1987 = vmatpush1.msra.mxu0 0.0
  %1988 = vmatprep.subr.mxu0 0.0
  %1989 = vmatpush1.msra.mxu0 0.0
  %1990 = vmatprep.subr.mxu0 0.0
  %1991 = vmatpush1.msra.mxu0 0.0
  %1992 = vmatprep.subr.mxu0 0.0
  %1993 = vmatpush1.msra.mxu0 0.0
  %1994 = vmatprep.subr.mxu0 0.0
  %1995 = vmatpush1.msra.mxu0 0.0
  %1996 = vmatprep.subr.mxu0 0.0
  %1997 = vmatpush1.msra.mxu0 0.0
  %1998 = vmatprep.subr.mxu0 0.0
  %1999 = vmatpush1.msra.mxu0 0.0
  %2000 = vmatprep.subr.mxu0 0.0
  %2001 = vmatpush1.msra.mxu0 0.0
  %2002 = vmatprep.subr.mxu0 0.0
  %2003 = vmatpush1.msra.mxu0 0.0
  %2004 = vmatprep.subr.mxu0 %v360
  %2005 = vmatpush1.msra.mxu0 %v357
  %2006 = vmatprep.subr.mxu0 %v130
  %2007 = vmatpush1.msra.mxu0 %v129
  %2008 = vmatprep.subr.mxu0 %v66
  %2009 = vmatpush1.msra.mxu0 %v65
  %2010 = vmatprep.subr.mxu0 0.0
  %2011 = vmatpush2.msra.mxu0 0.0
  %2012 = vmatprep.subr.mxu0 0.0
  %2013 = vmatpush2.msra.mxu0 0.0
  %2014 = vmatprep.subr.mxu0 0.0
  %2015 = vmatpush2.msra.mxu0 0.0
  %2016 = vmatprep.subr.mxu0 0.0
  %2017 = vmatpush2.msra.mxu0 0.0
  %2018 = vmatprep.subr.mxu0 0.0
  %2019 = vmatpush2.msra.mxu0 0.0
  %2020 = vmatprep.subr.mxu0 0.0
  %2021 = vmatpush2.msra.mxu0 0.0
  %2022 = vmatprep.subr.mxu0 0.0
  %2023 = vmatpush2.msra.mxu0 0.0
  %2024 = vmatprep.subr.mxu0 0.0
  %2025 = vmatpush2.msra.mxu0 0.0
  %2026 = vmatprep.subr.mxu0 0.0
  %2027 = vmatpush2.msra.mxu0 0.0
  %2028 = vmatprep.subr.mxu0 0.0
  %2029 = vmatpush2.msra.mxu0 0.0
  %2030 = vmatprep.subr.mxu0 0.0
  %2031 = vmatpush2.msra.mxu0 0.0
  %2032 = vmatprep.subr.mxu0 0.0
  %2033 = vmatpush2.msra.mxu0 0.0
  %2034 = vmatprep.subr.mxu0 0.0
  %2035 = vmatpush2.msra.mxu0 0.0
  %2036 = vmatprep.subr.mxu0 0.0
  %2037 = vmatpush2.msra.mxu0 0.0
  %2038 = vmatprep.subr.mxu0 0.0
  %2039 = vmatpush2.msra.mxu0 0.0
  %2040 = vmatprep.subr.mxu0 0.0
  %2041 = vmatpush2.msra.mxu0 0.0
  %2042 = vmatprep.mubr.f32.mxu0 0.0
  %2043 = vmatmul.mubr.f32.gmra.mxu0 %v221
  %v2044 = vpop.f32.mrf.mxu0
  %v2045 = vadd.f32 %v217, %v2044
  %v2046 = vpop.f32.mrf.mxu0
  %v2047 = vadd.f32 %v217, %v2046
  %2048 = vdwg.mxu0
  %2049 = vmatprep.subr.mxu0 0.0
  %2050 = vmatpush1.msra.mxu0 0.0
  %2051 = vmatprep.subr.mxu0 0.0
  %2052 = vmatpush1.msra.mxu0 0.0
  %2053 = vmatprep.subr.mxu0 0.0
  %2054 = vmatpush1.msra.mxu0 0.0
  %2055 = vmatprep.subr.mxu0 0.0
  %2056 = vmatpush1.msra.mxu0 0.0
  %2057 = vmatprep.subr.mxu0 0.0
  %2058 = vmatpush1.msra.mxu0 0.0
  %2059 = vmatprep.subr.mxu0 0.0
  %2060 = vmatpush1.msra.mxu0 0.0
  %2061 = vmatprep.subr.mxu0 0.0
  %2062 = vmatpush1.msra.mxu0 0.0
  %2063 = vmatprep.subr.mxu0 0.0
  %2064 = vmatpush1.msra.mxu0 0.0
  %2065 = vmatprep.subr.mxu0 0.0
  %2066 = vmatpush1.msra.mxu0 0.0
  %2067 = vmatprep.subr.mxu0 0.0
  %2068 = vmatpush1.msra.mxu0 0.0
  %2069 = vmatprep.subr.mxu0 0.0
  %2070 = vmatpush1.msra.mxu0 0.0
  %2071 = vmatprep.subr.mxu0 0.0
  %2072 = vmatpush1.msra.mxu0 0.0
  %2073 = vmatprep.subr.mxu0 0.0
  %2074 = vmatpush1.msra.mxu0 0.0
  %2075 = vmatprep.subr.mxu0 %v366
  %2076 = vmatpush1.msra.mxu0 %v363
  %2077 = vmatprep.subr.mxu0 %v132
  %2078 = vmatpush1.msra.mxu0 %v131
  %2079 = vmatprep.subr.mxu0 %v68
  %2080 = vmatpush1.msra.mxu0 %v67
  %2081 = vmatprep.subr.mxu0 0.0
  %2082 = vmatpush2.msra.mxu0 0.0
  %2083 = vmatprep.subr.mxu0 0.0
  %2084 = vmatpush2.msra.mxu0 0.0
  %2085 = vmatprep.subr.mxu0 0.0
  %2086 = vmatpush2.msra.mxu0 0.0
  %2087 = vmatprep.subr.mxu0 0.0
  %2088 = vmatpush2.msra.mxu0 0.0
  %2089 = vmatprep.subr.mxu0 0.0
  %2090 = vmatpush2.msra.mxu0 0.0
  %2091 = vmatprep.subr.mxu0 0.0
  %2092 = vmatpush2.msra.mxu0 0.0
  %2093 = vmatprep.subr.mxu0 0.0
  %2094 = vmatpush2.msra.mxu0 0.0
  %2095 = vmatprep.subr.mxu0 0.0
  %2096 = vmatpush2.msra.mxu0 0.0
  %2097 = vmatprep.subr.mxu0 0.0
  %2098 = vmatpush2.msra.mxu0 0.0
  %2099 = vmatprep.subr.mxu0 0.0
  %2100 = vmatpush2.msra.mxu0 0.0
  %2101 = vmatprep.subr.mxu0 0.0
  %2102 = vmatpush2.msra.mxu0 0.0
  %2103 = vmatprep.subr.mxu0 0.0
  %2104 = vmatpush2.msra.mxu0 0.0
  %2105 = vmatprep.subr.mxu0 0.0
  %2106 = vmatpush2.msra.mxu0 0.0
  %2107 = vmatprep.subr.mxu0 0.0
  %2108 = vmatpush2.msra.mxu0 0.0
  %2109 = vmatprep.subr.mxu0 0.0
  %2110 = vmatpush2.msra.mxu0 0.0
  %2111 = vmatprep.subr.mxu0 0.0
  %2112 = vmatpush2.msra.mxu0 0.0
  %2113 = vmatprep.mubr.f32.mxu0 0.0
  %2114 = vmatmul.mubr.f32.gmra.mxu0 %v221
  %v2115 = vpop.f32.mrf.mxu0
  %v2116 = vadd.f32 %v217, %v2115
  %v2117 = vpop.f32.mrf.mxu0
  %v2118 = vadd.f32 %v217, %v2117
  %2119 = vdwg.mxu0
  %2120 = vmatprep.subr.mxu0 0.0
  %2121 = vmatpush1.msra.mxu0 0.0
  %2122 = vmatprep.subr.mxu0 0.0
  %2123 = vmatpush1.msra.mxu0 0.0
  %2124 = vmatprep.subr.mxu0 0.0
  %2125 = vmatpush1.msra.mxu0 0.0
  %2126 = vmatprep.subr.mxu0 0.0
  %2127 = vmatpush1.msra.mxu0 0.0
  %2128 = vmatprep.subr.mxu0 0.0
  %2129 = vmatpush1.msra.mxu0 0.0
  %2130 = vmatprep.subr.mxu0 0.0
  %2131 = vmatpush1.msra.mxu0 0.0
  %2132 = vmatprep.subr.mxu0 0.0
  %2133 = vmatpush1.msra.mxu0 0.0
  %2134 = vmatprep.subr.mxu0 0.0
  %2135 = vmatpush1.msra.mxu0 0.0
  %2136 = vmatprep.subr.mxu0 0.0
  %2137 = vmatpush1.msra.mxu0 0.0
  %2138 = vmatprep.subr.mxu0 0.0
  %2139 = vmatpush1.msra.mxu0 0.0
  %2140 = vmatprep.subr.mxu0 0.0
  %2141 = vmatpush1.msra.mxu0 0.0
  %2142 = vmatprep.subr.mxu0 0.0
  %2143 = vmatpush1.msra.mxu0 0.0
  %2144 = vmatprep.subr.mxu0 0.0
  %2145 = vmatpush1.msra.mxu0 0.0
  %2146 = vmatprep.subr.mxu0 %v372
  %2147 = vmatpush1.msra.mxu0 %v369
  %2148 = vmatprep.subr.mxu0 %v134
  %2149 = vmatpush1.msra.mxu0 %v133
  %2150 = vmatprep.subr.mxu0 %v70
  %2151 = vmatpush1.msra.mxu0 %v69
  %2152 = vmatprep.subr.mxu0 0.0
  %2153 = vmatpush2.msra.mxu0 0.0
  %2154 = vmatprep.subr.mxu0 0.0
  %2155 = vmatpush2.msra.mxu0 0.0
  %2156 = vmatprep.subr.mxu0 0.0
  %2157 = vmatpush2.msra.mxu0 0.0
  %2158 = vmatprep.subr.mxu0 0.0
  %2159 = vmatpush2.msra.mxu0 0.0
  %2160 = vmatprep.subr.mxu0 0.0
  %2161 = vmatpush2.msra.mxu0 0.0
  %2162 = vmatprep.subr.mxu0 0.0
  %2163 = vmatpush2.msra.mxu0 0.0
  %2164 = vmatprep.subr.mxu0 0.0
  %2165 = vmatpush2.msra.mxu0 0.0
  %2166 = vmatprep.subr.mxu0 0.0
  %2167 = vmatpush2.msra.mxu0 0.0
  %2168 = vmatprep.subr.mxu0 0.0
  %2169 = vmatpush2.msra.mxu0 0.0
  %2170 = vmatprep.subr.mxu0 0.0
  %2171 = vmatpush2.msra.mxu0 0.0
  %2172 = vmatprep.subr.mxu0 0.0
  %2173 = vmatpush2.msra.mxu0 0.0
  %2174 = vmatprep.subr.mxu0 0.0
  %2175 = vmatpush2.msra.mxu0 0.0
  %2176 = vmatprep.subr.mxu0 0.0
  %2177 = vmatpush2.msra.mxu0 0.0
  %2178 = vmatprep.subr.mxu0 0.0
  %2179 = vmatpush2.msra.mxu0 0.0
  %2180 = vmatprep.subr.mxu0 0.0
  %2181 = vmatpush2.msra.mxu0 0.0
  %2182 = vmatprep.subr.mxu0 0.0
  %2183 = vmatpush2.msra.mxu0 0.0
  %2184 = vmatprep.mubr.f32.mxu0 0.0
  %2185 = vmatmul.mubr.f32.gmra.mxu0 %v221
  %v2186 = vpop.f32.mrf.mxu0
  %v2187 = vadd.f32 %v217, %v2186
  %v2188 = vpop.f32.mrf.mxu0
  %v2189 = vadd.f32 %v217, %v2188
  %2190 = vdwg.mxu0
  %2191 = vmatprep.subr.mxu0 0.0
  %2192 = vmatpush1.msra.mxu0 0.0
  %2193 = vmatprep.subr.mxu0 0.0
  %2194 = vmatpush1.msra.mxu0 0.0
  %2195 = vmatprep.subr.mxu0 0.0
  %2196 = vmatpush1.msra.mxu0 0.0
  %2197 = vmatprep.subr.mxu0 0.0
  %2198 = vmatpush1.msra.mxu0 0.0
  %2199 = vmatprep.subr.mxu0 0.0
  %2200 = vmatpush1.msra.mxu0 0.0
  %2201 = vmatprep.subr.mxu0 0.0
  %2202 = vmatpush1.msra.mxu0 0.0
  %2203 = vmatprep.subr.mxu0 0.0
  %2204 = vmatpush1.msra.mxu0 0.0
  %2205 = vmatprep.subr.mxu0 0.0
  %2206 = vmatpush1.msra.mxu0 0.0
  %2207 = vmatprep.subr.mxu0 0.0
  %2208 = vmatpush1.msra.mxu0 0.0
  %2209 = vmatprep.subr.mxu0 0.0
  %2210 = vmatpush1.msra.mxu0 0.0
  %2211 = vmatprep.subr.mxu0 0.0
  %2212 = vmatpush1.msra.mxu0 0.0
  %2213 = vmatprep.subr.mxu0 0.0
  %2214 = vmatpush1.msra.mxu0 0.0
  %2215 = vmatprep.subr.mxu0 0.0
  %2216 = vmatpush1.msra.mxu0 0.0
  %2217 = vmatprep.subr.mxu0 %v378
  %2218 = vmatpush1.msra.mxu0 %v375
  %2219 = vmatprep.subr.mxu0 %v136
  %2220 = vmatpush1.msra.mxu0 %v135
  %2221 = vmatprep.subr.mxu0 %v72
  %2222 = vmatpush1.msra.mxu0 %v71
  %2223 = vmatprep.subr.mxu0 0.0
  %2224 = vmatpush2.msra.mxu0 0.0
  %2225 = vmatprep.subr.mxu0 0.0
  %2226 = vmatpush2.msra.mxu0 0.0
  %2227 = vmatprep.subr.mxu0 0.0
  %2228 = vmatpush2.msra.mxu0 0.0
  %2229 = vmatprep.subr.mxu0 0.0
  %2230 = vmatpush2.msra.mxu0 0.0
  %2231 = vmatprep.subr.mxu0 0.0
  %2232 = vmatpush2.msra.mxu0 0.0
  %2233 = vmatprep.subr.mxu0 0.0
  %2234 = vmatpush2.msra.mxu0 0.0
  %2235 = vmatprep.subr.mxu0 0.0
  %2236 = vmatpush2.msra.mxu0 0.0
  %2237 = vmatprep.subr.mxu0 0.0
  %2238 = vmatpush2.msra.mxu0 0.0
  %2239 = vmatprep.subr.mxu0 0.0
  %2240 = vmatpush2.msra.mxu0 0.0
  %2241 = vmatprep.subr.mxu0 0.0
  %2242 = vmatpush2.msra.mxu0 0.0
  %2243 = vmatprep.subr.mxu0 0.0
  %2244 = vmatpush2.msra.mxu0 0.0
  %2245 = vmatprep.subr.mxu0 0.0
  %2246 = vmatpush2.msra.mxu0 0.0
  %2247 = vmatprep.subr.mxu0 0.0
  %2248 = vmatpush2.msra.mxu0 0.0
  %2249 = vmatprep.subr.mxu0 0.0
  %2250 = vmatpush2.msra.mxu0 0.0
  %2251 = vmatprep.subr.mxu0 0.0
  %2252 = vmatpush2.msra.mxu0 0.0
  %2253 = vmatprep.subr.mxu0 0.0
  %2254 = vmatpush2.msra.mxu0 0.0
  %2255 = vmatprep.mubr.f32.mxu0 0.0
  %2256 = vmatmul.mubr.f32.gmra.mxu0 %v221
  %v2257 = vpop.f32.mrf.mxu0
  %v2258 = vadd.f32 %v217, %v2257
  %v2259 = vpop.f32.mrf.mxu0
  %v2260 = vadd.f32 %v217, %v2259
  %2261 = vdwg.mxu0
  %2262 = vmatprep.subr.mxu0 0.0
  %2263 = vmatpush1.msra.mxu0 0.0
  %2264 = vmatprep.subr.mxu0 0.0
  %2265 = vmatpush1.msra.mxu0 0.0
  %2266 = vmatprep.subr.mxu0 0.0
  %2267 = vmatpush1.msra.mxu0 0.0
  %2268 = vmatprep.subr.mxu0 0.0
  %2269 = vmatpush1.msra.mxu0 0.0
  %2270 = vmatprep.subr.mxu0 0.0
  %2271 = vmatpush1.msra.mxu0 0.0
  %2272 = vmatprep.subr.mxu0 0.0
  %2273 = vmatpush1.msra.mxu0 0.0
  %2274 = vmatprep.subr.mxu0 0.0
  %2275 = vmatpush1.msra.mxu0 0.0
  %2276 = vmatprep.subr.mxu0 0.0
  %2277 = vmatpush1.msra.mxu0 0.0
  %2278 = vmatprep.subr.mxu0 0.0
  %2279 = vmatpush1.msra.mxu0 0.0
  %2280 = vmatprep.subr.mxu0 0.0
  %2281 = vmatpush1.msra.mxu0 0.0
  %2282 = vmatprep.subr.mxu0 0.0
  %2283 = vmatpush1.msra.mxu0 0.0
  %2284 = vmatprep.subr.mxu0 0.0
  %2285 = vmatpush1.msra.mxu0 0.0
  %2286 = vmatprep.subr.mxu0 0.0
  %2287 = vmatpush1.msra.mxu0 0.0
  %2288 = vmatprep.subr.mxu0 %v384
  %2289 = vmatpush1.msra.mxu0 %v381
  %2290 = vmatprep.subr.mxu0 %v138
  %2291 = vmatpush1.msra.mxu0 %v137
  %2292 = vmatprep.subr.mxu0 %v74
  %2293 = vmatpush1.msra.mxu0 %v73
  %2294 = vmatprep.subr.mxu0 0.0
  %2295 = vmatpush2.msra.mxu0 0.0
  %2296 = vmatprep.subr.mxu0 0.0
  %2297 = vmatpush2.msra.mxu0 0.0
  %2298 = vmatprep.subr.mxu0 0.0
  %2299 = vmatpush2.msra.mxu0 0.0
  %2300 = vmatprep.subr.mxu0 0.0
  %2301 = vmatpush2.msra.mxu0 0.0
  %2302 = vmatprep.subr.mxu0 0.0
  %2303 = vmatpush2.msra.mxu0 0.0
  %2304 = vmatprep.subr.mxu0 0.0
  %2305 = vmatpush2.msra.mxu0 0.0
  %2306 = vmatprep.subr.mxu0 0.0
  %2307 = vmatpush2.msra.mxu0 0.0
  %2308 = vmatprep.subr.mxu0 0.0
  %2309 = vmatpush2.msra.mxu0 0.0
  %2310 = vmatprep.subr.mxu0 0.0
  %2311 = vmatpush2.msra.mxu0 0.0
  %2312 = vmatprep.subr.mxu0 0.0
  %2313 = vmatpush2.msra.mxu0 0.0
  %2314 = vmatprep.subr.mxu0 0.0
  %2315 = vmatpush2.msra.mxu0 0.0
  %2316 = vmatprep.subr.mxu0 0.0
  %2317 = vmatpush2.msra.mxu0 0.0
  %2318 = vmatprep.subr.mxu0 0.0
  %2319 = vmatpush2.msra.mxu0 0.0
  %2320 = vmatprep.subr.mxu0 0.0
  %2321 = vmatpush2.msra.mxu0 0.0
  %2322 = vmatprep.subr.mxu0 0.0
  %2323 = vmatpush2.msra.mxu0 0.0
  %2324 = vmatprep.subr.mxu0 0.0
  %2325 = vmatpush2.msra.mxu0 0.0
  %2326 = vmatprep.mubr.f32.mxu0 0.0
  %2327 = vmatmul.mubr.f32.gmra.mxu0 %v221
  %v2328 = vpop.f32.mrf.mxu0
  %v2329 = vadd.f32 %v217, %v2328
  %v2330 = vpop.f32.mrf.mxu0
  %v2331 = vadd.f32 %v217, %v2330
  %2332 = vdwg.mxu0
  %2333 = vmatprep.subr.mxu0 0.0
  %2334 = vmatpush1.msra.mxu0 0.0
  %2335 = vmatprep.subr.mxu0 0.0
  %2336 = vmatpush1.msra.mxu0 0.0
  %2337 = vmatprep.subr.mxu0 0.0
  %2338 = vmatpush1.msra.mxu0 0.0
  %2339 = vmatprep.subr.mxu0 0.0
  %2340 = vmatpush1.msra.mxu0 0.0
  %2341 = vmatprep.subr.mxu0 0.0
  %2342 = vmatpush1.msra.mxu0 0.0
  %2343 = vmatprep.subr.mxu0 0.0
  %2344 = vmatpush1.msra.mxu0 0.0
  %2345 = vmatprep.subr.mxu0 0.0
  %2346 = vmatpush1.msra.mxu0 0.0
  %2347 = vmatprep.subr.mxu0 0.0
  %2348 = vmatpush1.msra.mxu0 0.0
  %2349 = vmatprep.subr.mxu0 0.0
  %2350 = vmatpush1.msra.mxu0 0.0
  %2351 = vmatprep.subr.mxu0 0.0
  %2352 = vmatpush1.msra.mxu0 0.0
  %2353 = vmatprep.subr.mxu0 0.0
  %2354 = vmatpush1.msra.mxu0 0.0
  %2355 = vmatprep.subr.mxu0 0.0
  %2356 = vmatpush1.msra.mxu0 0.0
  %2357 = vmatprep.subr.mxu0 0.0
  %2358 = vmatpush1.msra.mxu0 0.0
  %2359 = vmatprep.subr.mxu0 %v390
  %2360 = vmatpush1.msra.mxu0 %v387
  %2361 = vmatprep.subr.mxu0 %v140
  %2362 = vmatpush1.msra.mxu0 %v139
  %2363 = vmatprep.subr.mxu0 %v76
  %2364 = vmatpush1.msra.mxu0 %v75
  %2365 = vmatprep.subr.mxu0 0.0
  %2366 = vmatpush2.msra.mxu0 0.0
  %2367 = vmatprep.subr.mxu0 0.0
  %2368 = vmatpush2.msra.mxu0 0.0
  %2369 = vmatprep.subr.mxu0 0.0
  %2370 = vmatpush2.msra.mxu0 0.0
  %2371 = vmatprep.subr.mxu0 0.0
  %2372 = vmatpush2.msra.mxu0 0.0
  %2373 = vmatprep.subr.mxu0 0.0
  %2374 = vmatpush2.msra.mxu0 0.0
  %2375 = vmatprep.subr.mxu0 0.0
  %2376 = vmatpush2.msra.mxu0 0.0
  %2377 = vmatprep.subr.mxu0 0.0
  %2378 = vmatpush2.msra.mxu0 0.0
  %2379 = vmatprep.subr.mxu0 0.0
  %2380 = vmatpush2.msra.mxu0 0.0
  %2381 = vmatprep.subr.mxu0 0.0
  %2382 = vmatpush2.msra.mxu0 0.0
  %2383 = vmatprep.subr.mxu0 0.0
  %2384 = vmatpush2.msra.mxu0 0.0
  %2385 = vmatprep.subr.mxu0 0.0
  %2386 = vmatpush2.msra.mxu0 0.0
  %2387 = vmatprep.subr.mxu0 0.0
  %2388 = vmatpush2.msra.mxu0 0.0
  %2389 = vmatprep.subr.mxu0 0.0
  %2390 = vmatpush2.msra.mxu0 0.0
  %2391 = vmatprep.subr.mxu0 0.0
  %2392 = vmatpush2.msra.mxu0 0.0
  %2393 = vmatprep.subr.mxu0 0.0
  %2394 = vmatpush2.msra.mxu0 0.0
  %2395 = vmatprep.subr.mxu0 0.0
  %2396 = vmatpush2.msra.mxu0 0.0
  %2397 = vmatprep.mubr.f32.mxu0 0.0
  %2398 = vmatmul.mubr.f32.gmra.mxu0 %v221
  %v2399 = vpop.f32.mrf.mxu0
  %v2400 = vadd.f32 %v217, %v2399
  %v2401 = vpop.f32.mrf.mxu0
  %v2402 = vadd.f32 %v217, %v2401
  %2403 = vdwg.mxu0
  %2404 = vmatprep.subr.mxu0 0.0
  %2405 = vmatpush1.msra.mxu0 0.0
  %2406 = vmatprep.subr.mxu0 0.0
  %2407 = vmatpush1.msra.mxu0 0.0
  %2408 = vmatprep.subr.mxu0 0.0
  %2409 = vmatpush1.msra.mxu0 0.0
  %2410 = vmatprep.subr.mxu0 0.0
  %2411 = vmatpush1.msra.mxu0 0.0
  %2412 = vmatprep.subr.mxu0 0.0
  %2413 = vmatpush1.msra.mxu0 0.0
  %2414 = vmatprep.subr.mxu0 0.0
  %2415 = vmatpush1.msra.mxu0 0.0
  %2416 = vmatprep.subr.mxu0 0.0
  %2417 = vmatpush1.msra.mxu0 0.0
  %2418 = vmatprep.subr.mxu0 0.0
  %2419 = vmatpush1.msra.mxu0 0.0
  %2420 = vmatprep.subr.mxu0 0.0
  %2421 = vmatpush1.msra.mxu0 0.0
  %2422 = vmatprep.subr.mxu0 0.0
  %2423 = vmatpush1.msra.mxu0 0.0
  %2424 = vmatprep.subr.mxu0 0.0
  %2425 = vmatpush1.msra.mxu0 0.0
  %2426 = vmatprep.subr.mxu0 0.0
  %2427 = vmatpush1.msra.mxu0 0.0
  %2428 = vmatprep.subr.mxu0 0.0
  %2429 = vmatpush1.msra.mxu0 0.0
  %2430 = vmatprep.subr.mxu0 %v396
  %2431 = vmatpush1.msra.mxu0 %v393
  %2432 = vmatprep.subr.mxu0 %v142
  %2433 = vmatpush1.msra.mxu0 %v141
  %2434 = vmatprep.subr.mxu0 %v78
  %2435 = vmatpush1.msra.mxu0 %v77
  %2436 = vmatprep.subr.mxu0 0.0
  %2437 = vmatpush2.msra.mxu0 0.0
  %2438 = vmatprep.subr.mxu0 0.0
  %2439 = vmatpush2.msra.mxu0 0.0
  %2440 = vmatprep.subr.mxu0 0.0
  %2441 = vmatpush2.msra.mxu0 0.0
  %2442 = vmatprep.subr.mxu0 0.0
  %2443 = vmatpush2.msra.mxu0 0.0
  %2444 = vmatprep.subr.mxu0 0.0
  %2445 = vmatpush2.msra.mxu0 0.0
  %2446 = vmatprep.subr.mxu0 0.0
  %2447 = vmatpush2.msra.mxu0 0.0
  %2448 = vmatprep.subr.mxu0 0.0
  %2449 = vmatpush2.msra.mxu0 0.0
  %2450 = vmatprep.subr.mxu0 0.0
  %2451 = vmatpush2.msra.mxu0 0.0
  %2452 = vmatprep.subr.mxu0 0.0
  %2453 = vmatpush2.msra.mxu0 0.0
  %2454 = vmatprep.subr.mxu0 0.0
  %2455 = vmatpush2.msra.mxu0 0.0
  %2456 = vmatprep.subr.mxu0 0.0
  %2457 = vmatpush2.msra.mxu0 0.0
  %2458 = vmatprep.subr.mxu0 0.0
  %2459 = vmatpush2.msra.mxu0 0.0
  %2460 = vmatprep.subr.mxu0 0.0
  %2461 = vmatpush2.msra.mxu0 0.0
  %2462 = vmatprep.subr.mxu0 0.0
  %2463 = vmatpush2.msra.mxu0 0.0
  %2464 = vmatprep.subr.mxu0 0.0
  %2465 = vmatpush2.msra.mxu0 0.0
  %2466 = vmatprep.subr.mxu0 0.0
  %2467 = vmatpush2.msra.mxu0 0.0
  %2468 = vmatprep.mubr.f32.mxu0 0.0
  %2469 = vmatmul.mubr.f32.gmra.mxu0 %v221
  %v2470 = vpop.f32.mrf.mxu0
  %v2471 = vadd.f32 %v217, %v2470
  %v2472 = vpop.f32.mrf.mxu0
  %v2473 = vadd.f32 %v217, %v2472
  %2474 = vdwg.mxu0
  %2475 = vmatprep.subr.mxu0 0.0
  %2476 = vmatpush1.msra.mxu0 0.0
  %2477 = vmatprep.subr.mxu0 0.0
  %2478 = vmatpush1.msra.mxu0 0.0
  %2479 = vmatprep.subr.mxu0 0.0
  %2480 = vmatpush1.msra.mxu0 0.0
  %2481 = vmatprep.subr.mxu0 0.0
  %2482 = vmatpush1.msra.mxu0 0.0
  %2483 = vmatprep.subr.mxu0 0.0
  %2484 = vmatpush1.msra.mxu0 0.0
  %2485 = vmatprep.subr.mxu0 0.0
  %2486 = vmatpush1.msra.mxu0 0.0
  %2487 = vmatprep.subr.mxu0 0.0
  %2488 = vmatpush1.msra.mxu0 0.0
  %2489 = vmatprep.subr.mxu0 0.0
  %2490 = vmatpush1.msra.mxu0 0.0
  %2491 = vmatprep.subr.mxu0 0.0
  %2492 = vmatpush1.msra.mxu0 0.0
  %2493 = vmatprep.subr.mxu0 0.0
  %2494 = vmatpush1.msra.mxu0 0.0
  %2495 = vmatprep.subr.mxu0 0.0
  %2496 = vmatpush1.msra.mxu0 0.0
  %2497 = vmatprep.subr.mxu0 0.0
  %2498 = vmatpush1.msra.mxu0 0.0
  %2499 = vmatprep.subr.mxu0 0.0
  %2500 = vmatpush1.msra.mxu0 0.0
  %2501 = vmatprep.subr.mxu0 %v402
  %2502 = vmatpush1.msra.mxu0 %v399
  %2503 = vmatprep.subr.mxu0 %v144
  %2504 = vmatpush1.msra.mxu0 %v143
  %2505 = vmatprep.subr.mxu0 %v80
  %2506 = vmatpush1.msra.mxu0 %v79
  %2507 = vmatprep.subr.mxu0 0.0
  %2508 = vmatpush2.msra.mxu0 0.0
  %2509 = vmatprep.subr.mxu0 0.0
  %2510 = vmatpush2.msra.mxu0 0.0
  %2511 = vmatprep.subr.mxu0 0.0
  %2512 = vmatpush2.msra.mxu0 0.0
  %2513 = vmatprep.subr.mxu0 0.0
  %2514 = vmatpush2.msra.mxu0 0.0
  %2515 = vmatprep.subr.mxu0 0.0
  %2516 = vmatpush2.msra.mxu0 0.0
  %2517 = vmatprep.subr.mxu0 0.0
  %2518 = vmatpush2.msra.mxu0 0.0
  %2519 = vmatprep.subr.mxu0 0.0
  %2520 = vmatpush2.msra.mxu0 0.0
  %2521 = vmatprep.subr.mxu0 0.0
  %2522 = vmatpush2.msra.mxu0 0.0
  %2523 = vmatprep.subr.mxu0 0.0
  %2524 = vmatpush2.msra.mxu0 0.0
  %2525 = vmatprep.subr.mxu0 0.0
  %2526 = vmatpush2.msra.mxu0 0.0
  %2527 = vmatprep.subr.mxu0 0.0
  %2528 = vmatpush2.msra.mxu0 0.0
  %2529 = vmatprep.subr.mxu0 0.0
  %2530 = vmatpush2.msra.mxu0 0.0
  %2531 = vmatprep.subr.mxu0 0.0
  %2532 = vmatpush2.msra.mxu0 0.0
  %2533 = vmatprep.subr.mxu0 0.0
  %2534 = vmatpush2.msra.mxu0 0.0
  %2535 = vmatprep.subr.mxu0 0.0
  %2536 = vmatpush2.msra.mxu0 0.0
  %2537 = vmatprep.subr.mxu0 0.0
  %2538 = vmatpush2.msra.mxu0 0.0
  %2539 = vmatprep.mubr.f32.mxu0 0.0
  %2540 = vmatmul.mubr.f32.gmra.mxu0 %v221
  %v2541 = vpop.f32.mrf.mxu0
  %v2542 = vadd.f32 %v217, %v2541
  %v2543 = vpop.f32.mrf.mxu0
  %v2544 = vadd.f32 %v217, %v2543
  %2545 = vdwg.mxu0
  %2546 = vmatprep.subr.mxu0 0.0
  %2547 = vmatpush1.msra.mxu0 0.0
  %2548 = vmatprep.subr.mxu0 0.0
  %2549 = vmatpush1.msra.mxu0 0.0
  %2550 = vmatprep.subr.mxu0 0.0
  %2551 = vmatpush1.msra.mxu0 0.0
  %2552 = vmatprep.subr.mxu0 0.0
  %2553 = vmatpush1.msra.mxu0 0.0
  %2554 = vmatprep.subr.mxu0 0.0
  %2555 = vmatpush1.msra.mxu0 0.0
  %2556 = vmatprep.subr.mxu0 0.0
  %2557 = vmatpush1.msra.mxu0 0.0
  %2558 = vmatprep.subr.mxu0 0.0
  %2559 = vmatpush1.msra.mxu0 0.0
  %2560 = vmatprep.subr.mxu0 0.0
  %2561 = vmatpush1.msra.mxu0 0.0
  %2562 = vmatprep.subr.mxu0 0.0
  %2563 = vmatpush1.msra.mxu0 0.0
  %2564 = vmatprep.subr.mxu0 0.0
  %2565 = vmatpush1.msra.mxu0 0.0
  %2566 = vmatprep.subr.mxu0 0.0
  %2567 = vmatpush1.msra.mxu0 0.0
  %2568 = vmatprep.subr.mxu0 0.0
  %2569 = vmatpush1.msra.mxu0 0.0
  %2570 = vmatprep.subr.mxu0 0.0
  %2571 = vmatpush1.msra.mxu0 0.0
  %2572 = vmatprep.subr.mxu0 %v408
  %2573 = vmatpush1.msra.mxu0 %v405
  %2574 = vmatprep.subr.mxu0 %v146
  %2575 = vmatpush1.msra.mxu0 %v145
  %2576 = vmatprep.subr.mxu0 %v82
  %2577 = vmatpush1.msra.mxu0 %v81
  %2578 = vmatprep.subr.mxu0 0.0
  %2579 = vmatpush2.msra.mxu0 0.0
  %2580 = vmatprep.subr.mxu0 0.0
  %2581 = vmatpush2.msra.mxu0 0.0
  %2582 = vmatprep.subr.mxu0 0.0
  %2583 = vmatpush2.msra.mxu0 0.0
  %2584 = vmatprep.subr.mxu0 0.0
  %2585 = vmatpush2.msra.mxu0 0.0
  %2586 = vmatprep.subr.mxu0 0.0
  %2587 = vmatpush2.msra.mxu0 0.0
  %2588 = vmatprep.subr.mxu0 0.0
  %2589 = vmatpush2.msra.mxu0 0.0
  %2590 = vmatprep.subr.mxu0 0.0
  %2591 = vmatpush2.msra.mxu0 0.0
  %2592 = vmatprep.subr.mxu0 0.0
  %2593 = vmatpush2.msra.mxu0 0.0
  %2594 = vmatprep.subr.mxu0 0.0
  %2595 = vmatpush2.msra.mxu0 0.0
  %2596 = vmatprep.subr.mxu0 0.0
  %2597 = vmatpush2.msra.mxu0 0.0
  %2598 = vmatprep.subr.mxu0 0.0
  %2599 = vmatpush2.msra.mxu0 0.0
  %2600 = vmatprep.subr.mxu0 0.0
  %2601 = vmatpush2.msra.mxu0 0.0
  %2602 = vmatprep.subr.mxu0 0.0
  %2603 = vmatpush2.msra.mxu0 0.0
  %2604 = vmatprep.subr.mxu0 0.0
  %2605 = vmatpush2.msra.mxu0 0.0
  %2606 = vmatprep.subr.mxu0 0.0
  %2607 = vmatpush2.msra.mxu0 0.0
  %2608 = vmatprep.subr.mxu0 0.0
  %2609 = vmatpush2.msra.mxu0 0.0
  %2610 = vmatprep.mubr.f32.mxu0 0.0
  %2611 = vmatmul.mubr.f32.gmra.mxu0 %v221
  %v2612 = vpop.f32.mrf.mxu0
  %v2613 = vadd.f32 %v217, %v2612
  %v2614 = vpop.f32.mrf.mxu0
  %v2615 = vadd.f32 %v217, %v2614
  %2616 = vdwg.mxu0
  %2617 = vmatprep.subr.mxu0 0.0
  %2618 = vmatpush1.msra.mxu0 0.0
  %2619 = vmatprep.subr.mxu0 0.0
  %2620 = vmatpush1.msra.mxu0 0.0
  %2621 = vmatprep.subr.mxu0 0.0
  %2622 = vmatpush1.msra.mxu0 0.0
  %2623 = vmatprep.subr.mxu0 0.0
  %2624 = vmatpush1.msra.mxu0 0.0
  %2625 = vmatprep.subr.mxu0 0.0
  %2626 = vmatpush1.msra.mxu0 0.0
  %2627 = vmatprep.subr.mxu0 0.0
  %2628 = vmatpush1.msra.mxu0 0.0
  %2629 = vmatprep.subr.mxu0 0.0
  %2630 = vmatpush1.msra.mxu0 0.0
  %2631 = vmatprep.subr.mxu0 0.0
  %2632 = vmatpush1.msra.mxu0 0.0
  %2633 = vmatprep.subr.mxu0 0.0
  %2634 = vmatpush1.msra.mxu0 0.0
  %2635 = vmatprep.subr.mxu0 0.0
  %2636 = vmatpush1.msra.mxu0 0.0
  %2637 = vmatprep.subr.mxu0 0.0
  %2638 = vmatpush1.msra.mxu0 0.0
  %2639 = vmatprep.subr.mxu0 0.0
  %2640 = vmatpush1.msra.mxu0 0.0
  %2641 = vmatprep.subr.mxu0 0.0
  %2642 = vmatpush1.msra.mxu0 0.0
  %2643 = vmatprep.subr.mxu0 %v414
  %2644 = vmatpush1.msra.mxu0 %v411
  %2645 = vmatprep.subr.mxu0 %v148
  %2646 = vmatpush1.msra.mxu0 %v147
  %2647 = vmatprep.subr.mxu0 %v84
  %2648 = vmatpush1.msra.mxu0 %v83
  %2649 = vmatprep.subr.mxu0 0.0
  %2650 = vmatpush2.msra.mxu0 0.0
  %2651 = vmatprep.subr.mxu0 0.0
  %2652 = vmatpush2.msra.mxu0 0.0
  %2653 = vmatprep.subr.mxu0 0.0
  %2654 = vmatpush2.msra.mxu0 0.0
  %2655 = vmatprep.subr.mxu0 0.0
  %2656 = vmatpush2.msra.mxu0 0.0
  %2657 = vmatprep.subr.mxu0 0.0
  %2658 = vmatpush2.msra.mxu0 0.0
  %2659 = vmatprep.subr.mxu0 0.0
  %2660 = vmatpush2.msra.mxu0 0.0
  %2661 = vmatprep.subr.mxu0 0.0
  %2662 = vmatpush2.msra.mxu0 0.0
  %2663 = vmatprep.subr.mxu0 0.0
  %2664 = vmatpush2.msra.mxu0 0.0
  %2665 = vmatprep.subr.mxu0 0.0
  %2666 = vmatpush2.msra.mxu0 0.0
  %2667 = vmatprep.subr.mxu0 0.0
  %2668 = vmatpush2.msra.mxu0 0.0
  %2669 = vmatprep.subr.mxu0 0.0
  %2670 = vmatpush2.msra.mxu0 0.0
  %2671 = vmatprep.subr.mxu0 0.0
  %2672 = vmatpush2.msra.mxu0 0.0
  %2673 = vmatprep.subr.mxu0 0.0
  %2674 = vmatpush2.msra.mxu0 0.0
  %2675 = vmatprep.subr.mxu0 0.0
  %2676 = vmatpush2.msra.mxu0 0.0
  %2677 = vmatprep.subr.mxu0 0.0
  %2678 = vmatpush2.msra.mxu0 0.0
  %2679 = vmatprep.subr.mxu0 0.0
  %2680 = vmatpush2.msra.mxu0 0.0
  %2681 = vmatprep.mubr.f32.mxu0 0.0
  %2682 = vmatmul.mubr.f32.gmra.mxu0 %v221
  %v2683 = vpop.f32.mrf.mxu0
  %v2684 = vadd.f32 %v217, %v2683
  %v2685 = vpop.f32.mrf.mxu0
  %v2686 = vadd.f32 %v217, %v2685
  %2687 = vdwg.mxu0
  %v2688 = vmax.f32 %v483, 0.0
  %v2689 = vmax.f32 %v485, 0.0
  %v2690 = vmax.f32 %v554, 0.0
  %v2691 = vmax.f32 %v556, 0.0
  %v2692 = vmax.f32 %v625, 0.0
  %v2693 = vmax.f32 %v627, 0.0
  %v2694 = vmax.f32 %v696, 0.0
  %v2695 = vmax.f32 %v698, 0.0
  %v2696 = vmax.f32 %v767, 0.0
  %v2697 = vmax.f32 %v769, 0.0
  %v2698 = vmax.f32 %v838, 0.0
  %v2699 = vmax.f32 %v840, 0.0
  %v2700 = vmax.f32 %v909, 0.0
  %v2701 = vmax.f32 %v911, 0.0
  %v2702 = vmax.f32 %v980, 0.0
  %v2703 = vmax.f32 %v982, 0.0
  %v2704 = vmax.f32 %v1051, 0.0
  %v2705 = vmax.f32 %v1053, 0.0
  %v2706 = vmax.f32 %v1122, 0.0
  %v2707 = vmax.f32 %v1124, 0.0
  %v2708 = vmax.f32 %v1193, 0.0
  %v2709 = vmax.f32 %v1195, 0.0
  %v2710 = vmax.f32 %v1264, 0.0
  %v2711 = vmax.f32 %v1266, 0.0
  %v2712 = vmax.f32 %v1335, 0.0
  %v2713 = vmax.f32 %v1337, 0.0
  %v2714 = vmax.f32 %v1406, 0.0
  %v2715 = vmax.f32 %v1408, 0.0
  %v2716 = vmax.f32 %v1477, 0.0
  %v2717 = vmax.f32 %v1479, 0.0
  %v2718 = vmax.f32 %v1548, 0.0
  %v2719 = vmax.f32 %v1550, 0.0
  %v2720 = vmax.f32 %v1619, 0.0
  %v2721 = vmax.f32 %v1621, 0.0
  %v2722 = vmax.f32 %v1690, 0.0
  %v2723 = vmax.f32 %v1692, 0.0
  %v2724 = vmax.f32 %v1761, 0.0
  %v2725 = vmax.f32 %v1763, 0.0
  %v2726 = vmax.f32 %v1832, 0.0
  %v2727 = vmax.f32 %v1834, 0.0
  %v2728 = vmax.f32 %v1903, 0.0
  %v2729 = vmax.f32 %v1905, 0.0
  %v2730 = vmax.f32 %v1974, 0.0
  %v2731 = vmax.f32 %v1976, 0.0
  %v2732 = vmax.f32 %v2045, 0.0
  %v2733 = vmax.f32 %v2047, 0.0
  %v2734 = vmax.f32 %v2116, 0.0
  %v2735 = vmax.f32 %v2118, 0.0
  %v2736 = vmax.f32 %v2187, 0.0
  %v2737 = vmax.f32 %v2189, 0.0
  %v2738 = vmax.f32 %v2258, 0.0
  %v2739 = vmax.f32 %v2260, 0.0
  %v2740 = vmax.f32 %v2329, 0.0
  %v2741 = vmax.f32 %v2331, 0.0
  %v2742 = vmax.f32 %v2400, 0.0
  %v2743 = vmax.f32 %v2402, 0.0
  %v2744 = vmax.f32 %v2471, 0.0
  %v2745 = vmax.f32 %v2473, 0.0
  %v2746 = vmax.f32 %v2542, 0.0
  %v2747 = vmax.f32 %v2544, 0.0
  %v2748 = vmax.f32 %v2613, 0.0
  %v2749 = vmax.f32 %v2615, 0.0
  %v2750 = vmax.f32 %v2684, 0.0
  %v2751 = vmax.f32 %v2686, 0.0
  %v2752 = vmax.f32 %v2688, %v2704
  %v2753 = vmax.f32 %v2689, %v2705
  %v2754 = vmax.f32 %v2690, %v2706
  %v2755 = vmax.f32 %v2691, %v2707
  %v2756 = vmax.f32 %v2692, %v2708
  %v2757 = vmax.f32 %v2693, %v2709
  %v2758 = vmax.f32 %v2694, %v2710
  %v2759 = vmax.f32 %v2695, %v2711
  %v2760 = vmax.f32 %v2696, %v2712
  %v2761 = vmax.f32 %v2697, %v2713
  %v2762 = vmax.f32 %v2698, %v2714
  %v2763 = vmax.f32 %v2699, %v2715
  %v2764 = vmax.f32 %v2700, %v2716
  %v2765 = vmax.f32 %v2701, %v2717
  %v2766 = vmax.f32 %v2702, %v2718
  %v2767 = vmax.f32 %v2703, %v2719
  %v2768 = vmax.f32 %v2752, %v2720
  %v2769 = vmax.f32 %v2753, %v2721
  %v2770 = vmax.f32 %v2754, %v2722
  %v2771 = vmax.f32 %v2755, %v2723
  %v2772 = vmax.f32 %v2756, %v2724
  %v2773 = vmax.f32 %v2757, %v2725
  %v2774 = vmax.f32 %v2758, %v2726
  %v2775 = vmax.f32 %v2759, %v2727
  %v2776 = vmax.f32 %v2760, %v2728
  %v2777 = vmax.f32 %v2761, %v2729
  %v2778 = vmax.f32 %v2762, %v2730
  %v2779 = vmax.f32 %v2763, %v2731
  %v2780 = vmax.f32 %v2764, %v2732
  %v2781 = vmax.f32 %v2765, %v2733
  %v2782 = vmax.f32 %v2766, %v2734
  %v2783 = vmax.f32 %v2767, %v2735
  %v2784 = vmax.f32 %v2768, %v2736
  %v2785 = vmax.f32 %v2769, %v2737
  %v2786 = vmax.f32 %v2770, %v2738
  %v2787 = vmax.f32 %v2771, %v2739
  %v2788 = vmax.f32 %v2772, %v2740
  %v2789 = vmax.f32 %v2773, %v2741
  %v2790 = vmax.f32 %v2774, %v2742
  %v2791 = vmax.f32 %v2775, %v2743
  %v2792 = vmax.f32 %v2776, %v2744
  %v2793 = vmax.f32 %v2777, %v2745
  %v2794 = vmax.f32 %v2778, %v2746
  %v2795 = vmax.f32 %v2779, %v2747
  %v2796 = vmax.f32 %v2780, %v2748
  %v2797 = vmax.f32 %v2781, %v2749
  %v2798 = vmax.f32 %v2782, %v2750
  %v2799 = vmax.f32 %v2783, %v2751
  %vm2800 = vcmask 1043456
  %v2801 = vsel %vm2800, %v2784, 0.0
  %v2802 = vsel %vm2800, %v2785, 0.0
  %v2803 = vadd.f32 %v2801, %v2802
  %v2804 = vsel %vm2800, %v2786, 0.0
  %v2805 = vadd.f32 %v2803, %v2804
  %v2806 = vsel %vm2800, %v2787, 0.0
  %v2807 = vadd.f32 %v2805, %v2806
  %v2808 = vsel %vm2800, %v2788, 0.0
  %v2809 = vadd.f32 %v2807, %v2808
  %v2810 = vsel %vm2800, %v2789, 0.0
  %v2811 = vadd.f32 %v2809, %v2810
  %v2812 = vsel %vm2800, %v2790, 0.0
  %v2813 = vadd.f32 %v2811, %v2812
  %v2814 = vsel %vm2800, %v2791, 0.0
  %v2815 = vadd.f32 %v2813, %v2814
  %v2816 = vsel %vm2800, %v2792, 0.0
  %v2817 = vadd.f32 %v2815, %v2816
  %v2818 = vsel %vm2800, %v2793, 0.0
  %v2819 = vadd.f32 %v2817, %v2818
  %v2820 = vsel %vm2800, %v2794, 0.0
  %v2821 = vadd.f32 %v2819, %v2820
  %v2822 = vsel %vm2800, %v2795, 0.0
  %v2823 = vadd.f32 %v2821, %v2822
  %v2824 = vsel %vm2800, %v2796, 0.0
  %v2825 = vadd.f32 %v2823, %v2824
  %v2826 = vsel %vm2800, %v2797, 0.0
  %v2827 = vadd.f32 %v2825, %v2826
  %v2828 = vsel %vm2800, %v2798, 0.0
  %v2829 = vadd.f32 %v2827, %v2828
  %v2830 = vsel %vm2800, %v2799, 0.0
  %v2831 = vadd.f32 %v2829, %v2830
  %2832 = vadd.xlane.f32.xlu0 %v2831
  %v2833 = vpop.xlane.xlu0 %2832
  %v2834 = vrcp.pop 2048.0
  %v2835 = vmul.f32 %v2833, %v2834
  %v2836 = vmul.f32 %v2784, %v2784
  %v2837 = vmul.f32 %v2785, %v2785
  %v2838 = vmul.f32 %v2786, %v2786
  %v2839 = vmul.f32 %v2787, %v2787
  %v2840 = vmul.f32 %v2788, %v2788
  %v2841 = vmul.f32 %v2789, %v2789
  %v2842 = vmul.f32 %v2790, %v2790
  %v2843 = vmul.f32 %v2791, %v2791
  %v2844 = vmul.f32 %v2792, %v2792
  %v2845 = vmul.f32 %v2793, %v2793
  %v2846 = vmul.f32 %v2794, %v2794
  %v2847 = vmul.f32 %v2795, %v2795
  %v2848 = vmul.f32 %v2796, %v2796
  %v2849 = vmul.f32 %v2797, %v2797
  %v2850 = vmul.f32 %v2798, %v2798
  %v2851 = vmul.f32 %v2799, %v2799
  %v2852 = vsel %vm2800, %v2836, 0.0
  %v2853 = vsel %vm2800, %v2837, 0.0
  %v2854 = vadd.f32 %v2852, %v2853
  %v2855 = vsel %vm2800, %v2838, 0.0
  %v2856 = vadd.f32 %v2854, %v2855
  %v2857 = vsel %vm2800, %v2839, 0.0
  %v2858 = vadd.f32 %v2856, %v2857
  %v2859 = vsel %vm2800, %v2840, 0.0
  %v2860 = vadd.f32 %v2858, %v2859
  %v2861 = vsel %vm2800, %v2841, 0.0
  %v2862 = vadd.f32 %v2860, %v2861
  %v2863 = vsel %vm2800, %v2842, 0.0
  %v2864 = vadd.f32 %v2862, %v2863
  %v2865 = vsel %vm2800, %v2843, 0.0
  %v2866 = vadd.f32 %v2864, %v2865
  %v2867 = vsel %vm2800, %v2844, 0.0
  %v2868 = vadd.f32 %v2866, %v2867
  %v2869 = vsel %vm2800, %v2845, 0.0
  %v2870 = vadd.f32 %v2868, %v2869
  %v2871 = vsel %vm2800, %v2846, 0.0
  %v2872 = vadd.f32 %v2870, %v2871
  %v2873 = vsel %vm2800, %v2847, 0.0
  %v2874 = vadd.f32 %v2872, %v2873
  %v2875 = vsel %vm2800, %v2848, 0.0
  %v2876 = vadd.f32 %v2874, %v2875
  %v2877 = vsel %vm2800, %v2849, 0.0
  %v2878 = vadd.f32 %v2876, %v2877
  %v2879 = vsel %vm2800, %v2850, 0.0
  %v2880 = vadd.f32 %v2878, %v2879
  %v2881 = vsel %vm2800, %v2851, 0.0
  %v2882 = vadd.f32 %v2880, %v2881
  %2883 = vadd.xlane.f32.xlu0 %v2882
  %v2884 = vpop.xlane.xlu0 %2883
  %v2885 = vmul.f32 %v2884, %v2834
  %v2886 = vmul.f32 %v2835, %v2835
  %v2887 = vsub.f32 %v2885, %v2886
  %v2888 = vadd.f32 %v2887, 1e-05
  %v2889 = vrsqrt.pop %v2888
  %v2890 = vsub.f32 %v2784, %v2835
  %v2891 = vsub.f32 %v2785, %v2835
  %v2892 = vsub.f32 %v2786, %v2835
  %v2893 = vsub.f32 %v2787, %v2835
  %v2894 = vsub.f32 %v2788, %v2835
  %v2895 = vsub.f32 %v2789, %v2835
  %v2896 = vsub.f32 %v2790, %v2835
  %v2897 = vsub.f32 %v2791, %v2835
  %v2898 = vsub.f32 %v2792, %v2835
  %v2899 = vsub.f32 %v2793, %v2835
  %v2900 = vsub.f32 %v2794, %v2835
  %v2901 = vsub.f32 %v2795, %v2835
  %v2902 = vsub.f32 %v2796, %v2835
  %v2903 = vsub.f32 %v2797, %v2835
  %v2904 = vsub.f32 %v2798, %v2835
  %v2905 = vsub.f32 %v2799, %v2835
  %v2906 = vmul.f32 %v2890, %v2889
  %v2907 = vmul.f32 %v2891, %v2889
  %v2908 = vmul.f32 %v2892, %v2889
  %v2909 = vmul.f32 %v2893, %v2889
  %v2910 = vmul.f32 %v2894, %v2889
  %v2911 = vmul.f32 %v2895, %v2889
  %v2912 = vmul.f32 %v2896, %v2889
  %v2913 = vmul.f32 %v2897, %v2889
  %v2914 = vmul.f32 %v2898, %v2889
  %v2915 = vmul.f32 %v2899, %v2889
  %v2916 = vmul.f32 %v2900, %v2889
  %v2917 = vmul.f32 %v2901, %v2889
  %v2918 = vmul.f32 %v2902, %v2889
  %v2919 = vmul.f32 %v2903, %v2889
  %v2920 = vmul.f32 %v2904, %v2889
  %v2921 = vmul.f32 %v2905, %v2889
  %v2922 = vld [vmem:[%s3] sm:$0xf]
  %2924 = vset.pattern.permute.xlu0 0
  %2925 = vperm.xlu0 %2924, %v2922
  %v2926 = vpop.permute.xlu0 %2925
  %v2928 = vmul.f32 %v2906, %v2926
  %v2929 = vmul.f32 %v2907, %v2926
  %v2930 = vmul.f32 %v2908, %v2926
  %v2931 = vmul.f32 %v2909, %v2926
  %v2932 = vmul.f32 %v2910, %v2926
  %v2933 = vmul.f32 %v2911, %v2926
  %v2934 = vmul.f32 %v2912, %v2926
  %v2935 = vmul.f32 %v2913, %v2926
  %v2936 = vmul.f32 %v2914, %v2926
  %v2937 = vmul.f32 %v2915, %v2926
  %v2938 = vmul.f32 %v2916, %v2926
  %v2939 = vmul.f32 %v2917, %v2926
  %v2940 = vmul.f32 %v2918, %v2926
  %v2941 = vmul.f32 %v2919, %v2926
  %v2942 = vmul.f32 %v2920, %v2926
  %v2943 = vmul.f32 %v2921, %v2926
  %v2944 = vld [vmem:[%s4] sm:$0xf]
  %2946 = vset.pattern.permute.xlu0 0
  %2947 = vperm.xlu0 %2946, %v2944
  %v2948 = vpop.permute.xlu0 %2947
  %v2950 = vadd.f32 %v2928, %v2948
  %v2951 = vadd.f32 %v2929, %v2948
  %v2952 = vadd.f32 %v2930, %v2948
  %v2953 = vadd.f32 %v2931, %v2948
  %v2954 = vadd.f32 %v2932, %v2948
  %v2955 = vadd.f32 %v2933, %v2948
  %v2956 = vadd.f32 %v2934, %v2948
  %v2957 = vadd.f32 %v2935, %v2948
  %v2958 = vadd.f32 %v2936, %v2948
  %v2959 = vadd.f32 %v2937, %v2948
  %v2960 = vadd.f32 %v2938, %v2948
  %v2961 = vadd.f32 %v2939, %v2948
  %v2962 = vadd.f32 %v2940, %v2948
  %v2963 = vadd.f32 %v2941, %v2948
  %v2964 = vadd.f32 %v2942, %v2948
  %v2965 = vadd.f32 %v2943, %v2948
  %v2982 = vcombine.low %v2950, %v2951
  %v2983 = vcombine.low %v2952, %v2953
  %v2984 = vcombine.low %v2954, %v2955
  %v2985 = vcombine.low %v2956, %v2957
  %v2986 = vcombine.low %v2958, %v2959
  %v2987 = vcombine.low %v2960, %v2961
  %v2988 = vcombine.low %v2962, %v2963
  %v2989 = vcombine.low %v2964, %v2965
  %2998 = vst [vmem:[%s5] sm:$0xff] %v2982
  %2999 = vst [vmem:[%s5 + $0x8] sm:$0xff] %v2983
  %3000 = vst [vmem:[%s5 + $0x10] sm:$0xff] %v2984
  %3001 = vst [vmem:[%s5 + $0x18] sm:$0xff] %v2985
  %3002 = vst [vmem:[%s5 + $0x20] sm:$0xff] %v2986
  %3003 = vst [vmem:[%s5 + $0x28] sm:$0xff] %v2987
  %3004 = vst [vmem:[%s5 + $0x30] sm:$0xff] %v2988
  %3005 = vst [vmem:[%s5 + $0x38] sm:$0xff] %v2989
  // Predicated region
  $region22: #{net_forward.5} parent=0 // pred_check
    _
  $region23: #{net_forward.5} parent=0 // pred_check_branch
    %3007 = sbr.rel (0) target = $region25
  $region24: #{net_forward.5} parent=0 // pred_region
    _
  $region25: #{net_forward.5} parent=0 // pred_fallthru
    _
  // Predicated region
  $region26: #{net_forward.5} parent=0 // pred_check
    _
  $region27: #{net_forward.5} parent=0 // pred_check_branch
    %3009 = sbr.rel (0) target = $region29
  $region28: #{net_forward.5} parent=0 // pred_region
    _
  $region29: #{net_forward.5} parent=0 // pred_fallthru
    _

// kernel: net_forward.6
$region0: #{net_forward.6}
  #allocation0 [shape = 'u32[]', space=smem, size = 0x4, offset = 0x4, fixed_abs, tag = 'smem constant byte address 0x4 - core index']
  #allocation1 [shape = 'u32[144,128]{1,0:T(1,128)}', space=vmem, size = 0x12000, scoped, tag = 'internal scratch']
  %s0 = inlined_call_operand.vmem [shape: f32[36,512], index: 0, kind: input, shape index: {}]
  %s1 = inlined_call_operand.vmem [shape: f32[8,36], index: 1, kind: input, shape index: {}]
  %s2 = inlined_call_operand.vmem [shape: f32[8,1], index: 2, kind: input, shape index: {}]
  %s3 = inlined_call_operand.vmem [shape: f32[8,1], index: 3, kind: input, shape index: {}]
  %s4 = inlined_call_operand.vmem [shape: f32[8,1], index: 4, kind: input, shape index: {}]
  %s5 = inlined_call_operand.vmem [shape: f32[8,128], index: 5, kind: output, shape index: {}]
  %s6 = sld [smem:[#allocation0]]
  $region30: #{net_forward.6} parent=0
    _
  %s8 = ssub.s32 1, %s6
  %s9 = scalar_select 0, %s8, %s6
  // Predicated region
  $region2: #{net_forward.6} parent=0 // pred_check
    _
  $region3: #{net_forward.6} parent=0 // pred_check_branch
    %11 = sbr.rel (0) target = $region5
  $region4: #{net_forward.6} parent=0 // pred_region
    _
  $region5: #{net_forward.6} parent=0 // pred_fallthru
    _
  // Predicated region
  $region6: #{net_forward.6} parent=0 // pred_check
    _
  $region7: #{net_forward.6} parent=0 // pred_check_branch
    %13 = sbr.rel (0) target = $region9
  $region8: #{net_forward.6} parent=0 // pred_region
    _
  $region9: #{net_forward.6} parent=0 // pred_fallthru
    _
  // Predicated region
  $region10: #{net_forward.6} parent=0 // pred_check
    _
  $region11: #{net_forward.6} parent=0 // pred_check_branch
    %15 = sbr.rel (0) target = $region13
  $region12: #{net_forward.6} parent=0 // pred_region
    _
  $region13: #{net_forward.6} parent=0 // pred_fallthru
    _
  // Predicated region
  $region14: #{net_forward.6} parent=0 // pred_check
    _
  $region15: #{net_forward.6} parent=0 // pred_check_branch
    %17 = sbr.rel (0) target = $region17
  $region16: #{net_forward.6} parent=0 // pred_region
    _
  $region17: #{net_forward.6} parent=0 // pred_fallthru
    _
  // Predicated region
  $region18: #{net_forward.6} parent=0 // pred_check
    _
  $region19: #{net_forward.6} parent=0 // pred_check_branch
    %19 = sbr.rel (0) target = $region21
  $region20: #{net_forward.6} parent=0 // pred_region
    _
  $region21: #{net_forward.6} parent=0 // pred_fallthru
    _
  %v20 = vld [vmem:[%s1] sm:$0xff]
  %v21 = vld [vmem:[%s0] sm:$0xff]
  %v22 = vld [vmem:[%s0 + $0x8] sm:$0xff]
  %v23 = vld [vmem:[%s0 + $0x10] sm:$0xff]
  %v24 = vld [vmem:[%s0 + $0x18] sm:$0xff]
  %v25 = vld [vmem:[%s0 + $0x20] sm:$0xff]
  %v26 = vld [vmem:[%s0 + $0x28] sm:$0xff]
  %v27 = vld [vmem:[%s0 + $0x30] sm:$0xff]
  %v28 = vld [vmem:[%s0 + $0x38] sm:$0xff]
  %v29 = vld [vmem:[%s0 + $0x40] sm:$0xff]
  %v30 = vld [vmem:[%s0 + $0x48] sm:$0xff]
  %v31 = vld [vmem:[%s0 + $0x50] sm:$0xff]
  %v32 = vld [vmem:[%s0 + $0x58] sm:$0xff]
  %v33 = vld [vmem:[%s0 + $0x60] sm:$0xff]
  %v34 = vld [vmem:[%s0 + $0x68] sm:$0xff]
  %v35 = vld [vmem:[%s0 + $0x70] sm:$0xff]
  %v36 = vld [vmem:[%s0 + $0x78] sm:$0xff]
  %v37 = vld [vmem:[%s0 + $0x80] sm:$0xf]
  %v38 = vld [vmem:[%s0 + $0x88] sm:$0xf]
  %v39 = vld [vmem:[%s0 + $0x90] sm:$0xf]
  %v40 = vld [vmem:[%s0 + $0x98] sm:$0xf]
  %v41 = vld [vmem:[%s2] sm:$0xff]
  %43 = vset.pattern.permute.xlu0 0
  %44 = vperm.xlu0 %43, %v41
  %v45 = vpop.permute.xlu0 %44
  %vm47 = vcmask 293888
  %v49 = vsel %vm47, %v20, 0
  %vm51 = vcmask 1043456
  %v53 = vsel %vm51, %v37, 0
  %v56 = vsel %vm51, %v38, 0
  %v59 = vsel %vm51, %v39, 0
  %v62 = vsel %vm51, %v40, 0
  %64 = vmatprep.subr.mxu0 0.0
  %65 = vmatpush1.msra.mxu0 0.0
  %66 = vmatprep.subr.mxu0 0.0
  %67 = vmatpush1.msra.mxu0 0.0
  %68 = vmatprep.subr.mxu0 0.0
  %69 = vmatpush1.msra.mxu0 0.0
  %70 = vmatprep.subr.mxu0 0.0
  %71 = vmatpush1.msra.mxu0 0.0
  %72 = vmatprep.subr.mxu0 0.0
  %73 = vmatpush1.msra.mxu0 0.0
  %74 = vmatprep.subr.mxu0 0.0
  %75 = vmatpush1.msra.mxu0 0.0
  %76 = vmatprep.subr.mxu0 0.0
  %77 = vmatpush1.msra.mxu0 0.0
  %78 = vmatprep.subr.mxu0 0.0
  %79 = vmatpush1.msra.mxu0 0.0
  %80 = vmatprep.subr.mxu0 0.0
  %81 = vmatpush1.msra.mxu0 0.0
  %82 = vmatprep.subr.mxu0 0.0
  %83 = vmatpush1.msra.mxu0 0.0
  %84 = vmatprep.subr.mxu0 0.0
  %85 = vmatpush1.msra.mxu0 0.0
  %86 = vmatprep.subr.mxu0 %v56
  %87 = vmatpush1.msra.mxu0 %v53
  %88 = vmatprep.subr.mxu0 %v34
  %89 = vmatpush1.msra.mxu0 %v33
  %90 = vmatprep.subr.mxu0 %v30
  %91 = vmatpush1.msra.mxu0 %v29
  %92 = vmatprep.subr.mxu0 %v26
  %93 = vmatpush1.msra.mxu0 %v25
  %94 = vmatprep.subr.mxu0 %v22
  %95 = vmatpush1.msra.mxu0 %v21
  %96 = vmatprep.subr.mxu0 0.0
  %97 = vmatpush2.msra.mxu0 0.0
  %98 = vmatprep.subr.mxu0 0.0
  %99 = vmatpush2.msra.mxu0 0.0
  %100 = vmatprep.subr.mxu0 0.0
  %101 = vmatpush2.msra.mxu0 0.0
  %102 = vmatprep.subr.mxu0 0.0
  %103 = vmatpush2.msra.mxu0 0.0
  %104 = vmatprep.subr.mxu0 0.0
  %105 = vmatpush2.msra.mxu0 0.0
  %106 = vmatprep.subr.mxu0 0.0
  %107 = vmatpush2.msra.mxu0 0.0
  %108 = vmatprep.subr.mxu0 0.0
  %109 = vmatpush2.msra.mxu0 0.0
  %110 = vmatprep.subr.mxu0 0.0
  %111 = vmatpush2.msra.mxu0 0.0
  %112 = vmatprep.subr.mxu0 0.0
  %113 = vmatpush2.msra.mxu0 0.0
  %114 = vmatprep.subr.mxu0 0.0
  %115 = vmatpush2.msra.mxu0 0.0
  %116 = vmatprep.subr.mxu0 0.0
  %117 = vmatpush2.msra.mxu0 0.0
  %118 = vmatprep.subr.mxu0 0.0
  %119 = vmatpush2.msra.mxu0 0.0
  %120 = vmatprep.subr.mxu0 0.0
  %121 = vmatpush2.msra.mxu0 0.0
  %122 = vmatprep.subr.mxu0 0.0
  %123 = vmatpush2.msra.mxu0 0.0
  %124 = vmatprep.subr.mxu0 0.0
  %125 = vmatpush2.msra.mxu0 0.0
  %126 = vmatprep.subr.mxu0 0.0
  %127 = vmatpush2.msra.mxu0 0.0
  %128 = vmatprep.mubr.f32.mxu0 0.0
  %129 = vmatmul.mubr.f32.gmra.mxu0 %v49
  %v130 = vpop.f32.mrf.mxu0
  %v131 = vadd.f32 %v45, %v130
  %v132 = vpop.f32.mrf.mxu0
  %v133 = vadd.f32 %v45, %v132
  %134 = vdwg.mxu0
  %135 = vmatprep.subr.mxu0 0.0
  %136 = vmatpush1.msra.mxu0 0.0
  %137 = vmatprep.subr.mxu0 0.0
  %138 = vmatpush1.msra.mxu0 0.0
  %139 = vmatprep.subr.mxu0 0.0
  %140 = vmatpush1.msra.mxu0 0.0
  %141 = vmatprep.subr.mxu0 0.0
  %142 = vmatpush1.msra.mxu0 0.0
  %143 = vmatprep.subr.mxu0 0.0
  %144 = vmatpush1.msra.mxu0 0.0
  %145 = vmatprep.subr.mxu0 0.0
  %146 = vmatpush1.msra.mxu0 0.0
  %147 = vmatprep.subr.mxu0 0.0
  %148 = vmatpush1.msra.mxu0 0.0
  %149 = vmatprep.subr.mxu0 0.0
  %150 = vmatpush1.msra.mxu0 0.0
  %151 = vmatprep.subr.mxu0 0.0
  %152 = vmatpush1.msra.mxu0 0.0
  %153 = vmatprep.subr.mxu0 0.0
  %154 = vmatpush1.msra.mxu0 0.0
  %155 = vmatprep.subr.mxu0 0.0
  %156 = vmatpush1.msra.mxu0 0.0
  %157 = vmatprep.subr.mxu0 %v62
  %158 = vmatpush1.msra.mxu0 %v59
  %159 = vmatprep.subr.mxu0 %v36
  %160 = vmatpush1.msra.mxu0 %v35
  %161 = vmatprep.subr.mxu0 %v32
  %162 = vmatpush1.msra.mxu0 %v31
  %163 = vmatprep.subr.mxu0 %v28
  %164 = vmatpush1.msra.mxu0 %v27
  %165 = vmatprep.subr.mxu0 %v24
  %166 = vmatpush1.msra.mxu0 %v23
  %167 = vmatprep.subr.mxu0 0.0
  %168 = vmatpush2.msra.mxu0 0.0
  %169 = vmatprep.subr.mxu0 0.0
  %170 = vmatpush2.msra.mxu0 0.0
  %171 = vmatprep.subr.mxu0 0.0
  %172 = vmatpush2.msra.mxu0 0.0
  %173 = vmatprep.subr.mxu0 0.0
  %174 = vmatpush2.msra.mxu0 0.0
  %175 = vmatprep.subr.mxu0 0.0
  %176 = vmatpush2.msra.mxu0 0.0
  %177 = vmatprep.subr.mxu0 0.0
  %178 = vmatpush2.msra.mxu0 0.0
  %179 = vmatprep.subr.mxu0 0.0
  %180 = vmatpush2.msra.mxu0 0.0
  %181 = vmatprep.subr.mxu0 0.0
  %182 = vmatpush2.msra.mxu0 0.0
  %183 = vmatprep.subr.mxu0 0.0
  %184 = vmatpush2.msra.mxu0 0.0
  %185 = vmatprep.subr.mxu0 0.0
  %186 = vmatpush2.msra.mxu0 0.0
  %187 = vmatprep.subr.mxu0 0.0
  %188 = vmatpush2.msra.mxu0 0.0
  %189 = vmatprep.subr.mxu0 0.0
  %190 = vmatpush2.msra.mxu0 0.0
  %191 = vmatprep.subr.mxu0 0.0
  %192 = vmatpush2.msra.mxu0 0.0
  %193 = vmatprep.subr.mxu0 0.0
  %194 = vmatpush2.msra.mxu0 0.0
  %195 = vmatprep.subr.mxu0 0.0
  %196 = vmatpush2.msra.mxu0 0.0
  %197 = vmatprep.subr.mxu0 0.0
  %198 = vmatpush2.msra.mxu0 0.0
  %199 = vmatprep.mubr.f32.mxu0 0.0
  %200 = vmatmul.mubr.f32.gmra.mxu0 %v49
  %v201 = vpop.f32.mrf.mxu0
  %v202 = vadd.f32 %v45, %v201
  %v203 = vpop.f32.mrf.mxu0
  %v204 = vadd.f32 %v45, %v203
  %205 = vdwg.mxu0
  %v206 = vmax.f32 %v131, 0.0
  %v207 = vmax.f32 %v133, 0.0
  %v208 = vmax.f32 %v202, 0.0
  %v209 = vmax.f32 %v204, 0.0
  %v210 = vmax.f32 %v206, %v207
  %v211 = vmax.f32 %v210, %v208
  %v212 = vmax.f32 %v211, %v209
  %213 = vadd.xlane.f32.xlu0 %v212
  %v214 = vpop.xlane.xlu0 %213
  %v215 = vrcp.pop 128.0
  %v216 = vmul.f32 %v214, %v215
  %v217 = vmul.f32 %v212, %v212
  %218 = vadd.xlane.f32.xlu0 %v217
  %v219 = vpop.xlane.xlu0 %218
  %v220 = vmul.f32 %v219, %v215
  %v221 = vmul.f32 %v216, %v216
  %v222 = vsub.f32 %v220, %v221
  %v223 = vadd.f32 %v222, 1e-05
  %v224 = vrsqrt.pop %v223
  %v225 = vsub.f32 %v212, %v216
  %v226 = vmul.f32 %v225, %v224
  %v227 = vld [vmem:[%s3] sm:$0xff]
  %229 = vset.pattern.permute.xlu0 0
  %230 = vperm.xlu0 %229, %v227
  %v231 = vpop.permute.xlu0 %230
  %v233 = vmul.f32 %v226, %v231
  %v234 = vld [vmem:[%s4] sm:$0xff]
  %236 = vset.pattern.permute.xlu0 0
  %237 = vperm.xlu0 %236, %v234
  %v238 = vpop.permute.xlu0 %237
  %v240 = vadd.f32 %v233, %v238
  %241 = vst [vmem:[%s5] sm:$0xff] %v240
  // Predicated region
  $region22: #{net_forward.6} parent=0 // pred_check
    _
  $region23: #{net_forward.6} parent=0 // pred_check_branch
    %243 = sbr.rel (0) target = $region25
  $region24: #{net_forward.6} parent=0 // pred_region
    _
  $region25: #{net_forward.6} parent=0 // pred_fallthru
    _
  // Predicated region
  $region26: #{net_forward.6} parent=0 // pred_check
    _
  $region27: #{net_forward.6} parent=0 // pred_check_branch
    %245 = sbr.rel (0) target = $region29
  $region28: #{net_forward.6} parent=0 // pred_region
    _
  $region29: #{net_forward.6} parent=0 // pred_fallthru
    _

// kernel: net_forward.7
$region0: #{net_forward.7}
  #allocation0 [shape = 'u32[]', space=smem, size = 0x4, offset = 0x4, fixed_abs, tag = 'smem constant byte address 0x4 - core index']
  #allocation1 [shape = 'u32[144,128]{1,0:T(1,128)}', space=vmem, size = 0x12000, scoped, tag = 'internal scratch']
  %s0 = inlined_call_operand.vmem [shape: f32[72,32], index: 0, kind: input, shape index: {}]
  %s1 = inlined_call_operand.vmem [shape: f32[16,72], index: 1, kind: input, shape index: {}]
  %s2 = inlined_call_operand.vmem [shape: f32[16,1], index: 2, kind: input, shape index: {}]
  %s3 = inlined_call_operand.vmem [shape: f32[16,1], index: 3, kind: input, shape index: {}]
  %s4 = inlined_call_operand.vmem [shape: f32[16,1], index: 4, kind: input, shape index: {}]
  %s5 = inlined_call_operand.vmem [shape: f32[16,32], index: 5, kind: output, shape index: {}]
  %s6 = sld [smem:[#allocation0]]
  $region30: #{net_forward.7} parent=0
    _
  %s8 = ssub.s32 1, %s6
  %s9 = scalar_select 0, %s8, %s6
  // Predicated region
  $region2: #{net_forward.7} parent=0 // pred_check
    _
  $region3: #{net_forward.7} parent=0 // pred_check_branch
    %11 = sbr.rel (0) target = $region5
  $region4: #{net_forward.7} parent=0 // pred_region
    _
  $region5: #{net_forward.7} parent=0 // pred_fallthru
    _
  // Predicated region
  $region6: #{net_forward.7} parent=0 // pred_check
    _
  $region7: #{net_forward.7} parent=0 // pred_check_branch
    %13 = sbr.rel (0) target = $region9
  $region8: #{net_forward.7} parent=0 // pred_region
    _
  $region9: #{net_forward.7} parent=0 // pred_fallthru
    _
  // Predicated region
  $region10: #{net_forward.7} parent=0 // pred_check
    _
  $region11: #{net_forward.7} parent=0 // pred_check_branch
    %15 = sbr.rel (0) target = $region13
  $region12: #{net_forward.7} parent=0 // pred_region
    _
  $region13: #{net_forward.7} parent=0 // pred_fallthru
    _
  // Predicated region
  $region14: #{net_forward.7} parent=0 // pred_check
    _
  $region15: #{net_forward.7} parent=0 // pred_check_branch
    %17 = sbr.rel (0) target = $region17
  $region16: #{net_forward.7} parent=0 // pred_region
    _
  $region17: #{net_forward.7} parent=0 // pred_fallthru
    _
  // Predicated region
  $region18: #{net_forward.7} parent=0 // pred_check
    _
  $region19: #{net_forward.7} parent=0 // pred_check_branch
    %19 = sbr.rel (0) target = $region21
  $region20: #{net_forward.7} parent=0 // pred_region
    _
  $region21: #{net_forward.7} parent=0 // pred_fallthru
    _
  %v20 = vld [vmem:[%s1] sm:$0xff]
  %v21 = vld [vmem:[%s1 + $0x8] sm:$0xff]
  %v22 = vld [vmem:[%s0] sm:$0xff]
  %v23 = vld [vmem:[%s0 + $0x8] sm:$0xff]
  %v24 = vld [vmem:[%s0 + $0x10] sm:$0xff]
  %v25 = vld [vmem:[%s0 + $0x18] sm:$0xff]
  %v26 = vld [vmem:[%s0 + $0x20] sm:$0xff]
  %v27 = vld [vmem:[%s0 + $0x28] sm:$0xff]
  %v28 = vld [vmem:[%s0 + $0x30] sm:$0xff]
  %v29 = vld [vmem:[%s0 + $0x38] sm:$0xff]
  %v30 = vld [vmem:[%s0 + $0x40] sm:$0xff]
  %v31 = vld [vmem:[%s2] sm:$0xff]
  %v32 = vld [vmem:[%s2 + $0x8] sm:$0xff]
  %34 = vset.pattern.permute.xlu0 0
  %35 = vperm.xlu0 %34, %v31
  %v36 = vpop.permute.xlu0 %35
  %39 = vset.pattern.permute.xlu0 0
  %40 = vperm.xlu0 %39, %v32
  %v41 = vpop.permute.xlu0 %40
  %vm43 = vcmask 588800
  %v45 = vsel %vm43, %v20, 0
  %v48 = vsel %vm43, %v21, 0
  %50 = vmatprep.subr.mxu0 0.0
  %51 = vmatpush1.msra.mxu0 0.0
  %52 = vmatprep.subr.mxu0 0.0
  %53 = vmatpush1.msra.mxu0 0.0
  %54 = vmatprep.subr.mxu0 0.0
  %55 = vmatpush1.msra.mxu0 0.0
  %56 = vmatprep.subr.mxu0 0.0
  %57 = vmatpush1.msra.mxu0 0.0
  %58 = vmatprep.subr.mxu0 0.0
  %59 = vmatpush1.msra.mxu0 0.0
  %60 = vmatprep.subr.mxu0 0.0
  %61 = vmatpush1.msra.mxu0 0.0
  %62 = vmatprep.subr.mxu0 0.0
  %63 = vmatpush1.msra.mxu0 0.0
  %64 = vmatprep.subr.mxu0 0.0
  %65 = vmatpush1.msra.mxu0 %v30
  %66 = vmatprep.subr.mxu0 0.0
  %67 = vmatpush1.msra.mxu0 %v29
  %68 = vmatprep.subr.mxu0 0.0
  %69 = vmatpush1.msra.mxu0 %v28
  %70 = vmatprep.subr.mxu0 0.0
  %71 = vmatpush1.msra.mxu0 %v27
  %72 = vmatprep.subr.mxu0 0.0
  %73 = vmatpush1.msra.mxu0 %v26
  %74 = vmatprep.subr.mxu0 0.0
  %75 = vmatpush1.msra.mxu0 %v25
  %76 = vmatprep.subr.mxu0 0.0
  %77 = vmatpush1.msra.mxu0 %v24
  %78 = vmatprep.subr.mxu0 0.0
  %79 = vmatpush1.msra.mxu0 %v23
  %80 = vmatprep.subr.mxu0 0.0
  %81 = vmatpush1.msra.mxu0 %v22
  %82 = vmatprep.subr.mxu0 0.0
  %83 = vmatpush2.msra.mxu0 0.0
  %84 = vmatprep.subr.mxu0 0.0
  %85 = vmatpush2.msra.mxu0 0.0
  %86 = vmatprep.subr.mxu0 0.0
  %87 = vmatpush2.msra.mxu0 0.0
  %88 = vmatprep.subr.mxu0 0.0
  %89 = vmatpush2.msra.mxu0 0.0
  %90 = vmatprep.subr.mxu0 0.0
  %91 = vmatpush2.msra.mxu0 0.0
  %92 = vmatprep.subr.mxu0 0.0
  %93 = vmatpush2.msra.mxu0 0.0
  %94 = vmatprep.subr.mxu0 0.0
  %95 = vmatpush2.msra.mxu0 0.0
  %96 = vmatprep.subr.mxu0 0.0
  %97 = vmatpush2.msra.mxu0 0.0
  %98 = vmatprep.subr.mxu0 0.0
  %99 = vmatpush2.msra.mxu0 0.0
  %100 = vmatprep.subr.mxu0 0.0
  %101 = vmatpush2.msra.mxu0 0.0
  %102 = vmatprep.subr.mxu0 0.0
  %103 = vmatpush2.msra.mxu0 0.0
  %104 = vmatprep.subr.mxu0 0.0
  %105 = vmatpush2.msra.mxu0 0.0
  %106 = vmatprep.subr.mxu0 0.0
  %107 = vmatpush2.msra.mxu0 0.0
  %108 = vmatprep.subr.mxu0 0.0
  %109 = vmatpush2.msra.mxu0 0.0
  %110 = vmatprep.subr.mxu0 0.0
  %111 = vmatpush2.msra.mxu0 0.0
  %112 = vmatprep.subr.mxu0 0.0
  %113 = vmatpush2.msra.mxu0 0.0
  %114 = vmatprep.mubr.f32.mxu0 0.0
  %115 = vmatmul.mubr.f32.gmra.mxu0 %v45
  %v116 = vpop.f32.mrf.mxu0
  %v117 = vadd.f32 %v36, %v116
  %v118 = vpop.f32.mrf.mxu0
  %119 = vmatprep.mubr.f32.mxu0 0.0
  %120 = vmatmul.mubr.f32.gmra.mxu0 %v48
  %v121 = vpop.f32.mrf.mxu0
  %v122 = vadd.f32 %v41, %v121
  %v123 = vpop.f32.mrf.mxu0
  %124 = vdwg.mxu0
  %v125 = vmax.f32 %v117, 0.0
  %v126 = vmax.f32 %v122, 0.0
  %vm127 = vcmask 261120
  %v128 = vsel %vm127, %v125, 0.0
  %129 = vadd.xlane.f32.xlu0 %v128
  %v130 = vpop.xlane.xlu0 %129
  %v131 = vsel %vm127, %v126, 0.0
  %132 = vadd.xlane.f32.xlu0 %v131
  %v133 = vpop.xlane.xlu0 %132
  %v134 = vrcp.pop 32.0
  %v135 = vmul.f32 %v130, %v134
  %v136 = vmul.f32 %v133, %v134
  %v137 = vmul.f32 %v125, %v125
  %v138 = vmul.f32 %v126, %v126
  %v139 = vsel %vm127, %v137, 0.0
  %140 = vadd.xlane.f32.xlu0 %v139
  %v141 = vpop.xlane.xlu0 %140
  %v142 = vsel %vm127, %v138, 0.0
  %143 = vadd.xlane.f32.xlu0 %v142
  %v144 = vpop.xlane.xlu0 %143
  %v145 = vmul.f32 %v141, %v134
  %v146 = vmul.f32 %v144, %v134
  %v147 = vmul.f32 %v135, %v135
  %v148 = vmul.f32 %v136, %v136
  %v149 = vsub.f32 %v145, %v147
  %v150 = vsub.f32 %v146, %v148
  %v151 = vadd.f32 %v149, 1e-05
  %v152 = vadd.f32 %v150, 1e-05
  %v153 = vrsqrt.pop %v151
  %v154 = vrsqrt.pop %v152
  %v155 = vsub.f32 %v125, %v135
  %v156 = vsub.f32 %v126, %v136
  %v157 = vmul.f32 %v155, %v153
  %v158 = vmul.f32 %v156, %v154
  %v159 = vld [vmem:[%s3] sm:$0xff]
  %v160 = vld [vmem:[%s3 + $0x8] sm:$0xff]
  %162 = vset.pattern.permute.xlu0 0
  %163 = vperm.xlu0 %162, %v159
  %v164 = vpop.permute.xlu0 %163
  %167 = vset.pattern.permute.xlu0 0
  %168 = vperm.xlu0 %167, %v160
  %v169 = vpop.permute.xlu0 %168
  %v171 = vmul.f32 %v157, %v164
  %v172 = vmul.f32 %v158, %v169
  %v173 = vld [vmem:[%s4] sm:$0xff]
  %v174 = vld [vmem:[%s4 + $0x8] sm:$0xff]
  %176 = vset.pattern.permute.xlu0 0
  %177 = vperm.xlu0 %176, %v173
  %v178 = vpop.permute.xlu0 %177
  %181 = vset.pattern.permute.xlu0 0
  %182 = vperm.xlu0 %181, %v174
  %v183 = vpop.permute.xlu0 %182
  %v185 = vadd.f32 %v171, %v178
  %v186 = vadd.f32 %v172, %v183
  %187 = vst.msk [vmem:[%s5] sm:$0xff] %vm127, %v185
  %188 = vst.msk [vmem:[%s5 + $0x8] sm:$0xff] %vm127, %v186
  // Predicated region
  $region22: #{net_forward.7} parent=0 // pred_check
    _
  $region23: #{net_forward.7} parent=0 // pred_check_branch
    %190 = sbr.rel (0) target = $region25
  $region24: #{net_forward.7} parent=0 // pred_region
    _
  $region25: #{net_forward.7} parent=0 // pred_fallthru
    _
  // Predicated region
  $region26: #{net_forward.7} parent=0 // pred_check
    _
  $region27: #{net_forward.7} parent=0 // pred_check_branch
    %192 = sbr.rel (0) target = $region29
  $region28: #{net_forward.7} parent=0 // pred_region
    _
  $region29: #{net_forward.7} parent=0 // pred_fallthru
    _

// kernel: net_forward.8
$region0: #{net_forward.8}
  #allocation0 [shape = 'u32[]', space=smem, size = 0x4, offset = 0x4, fixed_abs, tag = 'smem constant byte address 0x4 - core index']
  #allocation1 [shape = 'u32[144,128]{1,0:T(1,128)}', space=vmem, size = 0x12000, scoped, tag = 'internal scratch']
  %s0 = inlined_call_operand.vmem [shape: f32[144,8], index: 0, kind: input, shape index: {}]
  %s1 = inlined_call_operand.vmem [shape: f32[32,144], index: 1, kind: input, shape index: {}]
  %s2 = inlined_call_operand.vmem [shape: f32[32,1], index: 2, kind: input, shape index: {}]
  %s3 = inlined_call_operand.vmem [shape: f32[32,1], index: 3, kind: input, shape index: {}]
  %s4 = inlined_call_operand.vmem [shape: f32[32,1], index: 4, kind: input, shape index: {}]
  %s5 = inlined_call_operand.vmem [shape: f32[32,8], index: 5, kind: output, shape index: {}]
  %s6 = sld [smem:[#allocation0]]
  $region30: #{net_forward.8} parent=0
    _
  %s8 = ssub.s32 1, %s6
  %s9 = scalar_select 0, %s8, %s6
  // Predicated region
  $region2: #{net_forward.8} parent=0 // pred_check
    _
  $region3: #{net_forward.8} parent=0 // pred_check_branch
    %11 = sbr.rel (0) target = $region5
  $region4: #{net_forward.8} parent=0 // pred_region
    _
  $region5: #{net_forward.8} parent=0 // pred_fallthru
    _
  // Predicated region
  $region6: #{net_forward.8} parent=0 // pred_check
    _
  $region7: #{net_forward.8} parent=0 // pred_check_branch
    %13 = sbr.rel (0) target = $region9
  $region8: #{net_forward.8} parent=0 // pred_region
    _
  $region9: #{net_forward.8} parent=0 // pred_fallthru
    _
  // Predicated region
  $region10: #{net_forward.8} parent=0 // pred_check
    _
  $region11: #{net_forward.8} parent=0 // pred_check_branch
    %15 = sbr.rel (0) target = $region13
  $region12: #{net_forward.8} parent=0 // pred_region
    _
  $region13: #{net_forward.8} parent=0 // pred_fallthru
    _
  // Predicated region
  $region14: #{net_forward.8} parent=0 // pred_check
    _
  $region15: #{net_forward.8} parent=0 // pred_check_branch
    %17 = sbr.rel (0) target = $region17
  $region16: #{net_forward.8} parent=0 // pred_region
    _
  $region17: #{net_forward.8} parent=0 // pred_fallthru
    _
  // Predicated region
  $region18: #{net_forward.8} parent=0 // pred_check
    _
  $region19: #{net_forward.8} parent=0 // pred_check_branch
    %19 = sbr.rel (0) target = $region21
  $region20: #{net_forward.8} parent=0 // pred_region
    _
  $region21: #{net_forward.8} parent=0 // pred_fallthru
    _
  %v20 = vld [vmem:[%s1] sm:$0xff]
  %v21 = vld [vmem:[%s1 + $0x8] sm:$0xff]
  %v22 = vld [vmem:[%s1 + $0x10] sm:$0xff]
  %v23 = vld [vmem:[%s1 + $0x18] sm:$0xff]
  %v24 = vld [vmem:[%s1 + $0x20] sm:$0xff]
  %v25 = vld [vmem:[%s1 + $0x28] sm:$0xff]
  %v26 = vld [vmem:[%s1 + $0x30] sm:$0xff]
  %v27 = vld [vmem:[%s1 + $0x38] sm:$0xff]
  %v28 = vld [vmem:[%s0] sm:$0xff]
  %v29 = vld [vmem:[%s0 + $0x8] sm:$0xff]
  %v30 = vld [vmem:[%s0 + $0x10] sm:$0xff]
  %v31 = vld [vmem:[%s0 + $0x18] sm:$0xff]
  %v32 = vld [vmem:[%s0 + $0x20] sm:$0xff]
  %v33 = vld [vmem:[%s0 + $0x28] sm:$0xff]
  %v34 = vld [vmem:[%s0 + $0x30] sm:$0xff]
  %v35 = vld [vmem:[%s0 + $0x38] sm:$0xff]
  %v36 = vld [vmem:[%s0 + $0x40] sm:$0xff]
  %v37 = vld [vmem:[%s0 + $0x48] sm:$0xff]
  %v38 = vld [vmem:[%s0 + $0x50] sm:$0xff]
  %v39 = vld [vmem:[%s0 + $0x58] sm:$0xff]
  %v40 = vld [vmem:[%s0 + $0x60] sm:$0xff]
  %v41 = vld [vmem:[%s0 + $0x68] sm:$0xff]
  %v42 = vld [vmem:[%s0 + $0x70] sm:$0xff]
  %v43 = vld [vmem:[%s0 + $0x78] sm:$0xff]
  %v44 = vld [vmem:[%s0 + $0x80] sm:$0xff]
  %v45 = vld [vmem:[%s0 + $0x88] sm:$0xff]
  %v46 = vld [vmem:[%s2] sm:$0xff]
  %v47 = vld [vmem:[%s2 + $0x8] sm:$0xff]
  %v48 = vld [vmem:[%s2 + $0x10] sm:$0xff]
  %v49 = vld [vmem:[%s2 + $0x18] sm:$0xff]
  %51 = vset.pattern.permute.xlu0 0
  %52 = vperm.xlu0 %51, %v46
  %v53 = vpop.permute.xlu0 %52
  %56 = vset.pattern.permute.xlu0 0
  %57 = vperm.xlu0 %56, %v47
  %v58 = vpop.permute.xlu0 %57
  %61 = vset.pattern.permute.xlu0 0
  %62 = vperm.xlu0 %61, %v48
  %v63 = vpop.permute.xlu0 %62
  %66 = vset.pattern.permute.xlu0 0
  %67 = vperm.xlu0 %66, %v49
  %v68 = vpop.permute.xlu0 %67
  %vm70 = vcmask 130048
  %v72 = vsel %vm70, %v21, 0
  %v75 = vsel %vm70, %v23, 0
  %v78 = vsel %vm70, %v25, 0
  %v81 = vsel %vm70, %v27, 0
  %83 = vmatprep.subr.mxu0 0.0
  %84 = vmatpush1.msra.mxu0 %v43
  %85 = vmatprep.subr.mxu0 0.0
  %86 = vmatpush1.msra.mxu0 %v42
  %87 = vmatprep.subr.mxu0 0.0
  %88 = vmatpush1.msra.mxu0 %v41
  %89 = vmatprep.subr.mxu0 0.0
  %90 = vmatpush1.msra.mxu0 %v40
  %91 = vmatprep.subr.mxu0 0.0
  %92 = vmatpush1.msra.mxu0 %v39
  %93 = vmatprep.subr.mxu0 0.0
  %94 = vmatpush1.msra.mxu0 %v38
  %95 = vmatprep.subr.mxu0 0.0
  %96 = vmatpush1.msra.mxu0 %v37
  %97 = vmatprep.subr.mxu0 0.0
  %98 = vmatpush1.msra.mxu0 %v36
  %99 = vmatprep.subr.mxu0 0.0
  %100 = vmatpush1.msra.mxu0 %v35
  %101 = vmatprep.subr.mxu0 0.0
  %102 = vmatpush1.msra.mxu0 %v34
  %103 = vmatprep.subr.mxu0 0.0
  %104 = vmatpush1.msra.mxu0 %v33
  %105 = vmatprep.subr.mxu0 0.0
  %106 = vmatpush1.msra.mxu0 %v32
  %107 = vmatprep.subr.mxu0 0.0
  %108 = vmatpush1.msra.mxu0 %v31
  %109 = vmatprep.subr.mxu0 0.0
  %110 = vmatpush1.msra.mxu0 %v30
  %111 = vmatprep.subr.mxu0 0.0
  %112 = vmatpush1.msra.mxu0 %v29
  %113 = vmatprep.subr.mxu0 0.0
  %114 = vmatpush1.msra.mxu0 %v28
  %115 = vmatprep.subr.mxu0 0.0
  %116 = vmatpush2.msra.mxu0 0.0
  %117 = vmatprep.subr.mxu0 0.0
  %118 = vmatpush2.msra.mxu0 0.0
  %119 = vmatprep.subr.mxu0 0.0
  %120 = vmatpush2.msra.mxu0 0.0
  %121 = vmatprep.subr.mxu0 0.0
  %122 = vmatpush2.msra.mxu0 0.0
  %123 = vmatprep.subr.mxu0 0.0
  %124 = vmatpush2.msra.mxu0 0.0
  %125 = vmatprep.subr.mxu0 0.0
  %126 = vmatpush2.msra.mxu0 0.0
  %127 = vmatprep.subr.mxu0 0.0
  %128 = vmatpush2.msra.mxu0 0.0
  %129 = vmatprep.subr.mxu0 0.0
  %130 = vmatpush2.msra.mxu0 0.0
  %131 = vmatprep.subr.mxu0 0.0
  %132 = vmatpush2.msra.mxu0 0.0
  %133 = vmatprep.subr.mxu0 0.0
  %134 = vmatpush2.msra.mxu0 0.0
  %135 = vmatprep.subr.mxu0 0.0
  %136 = vmatpush2.msra.mxu0 0.0
  %137 = vmatprep.subr.mxu0 0.0
  %138 = vmatpush2.msra.mxu0 0.0
  %139 = vmatprep.subr.mxu0 0.0
  %140 = vmatpush2.msra.mxu0 0.0
  %141 = vmatprep.subr.mxu0 0.0
  %142 = vmatpush2.msra.mxu0 0.0
  %143 = vmatprep.subr.mxu0 0.0
  %144 = vmatpush2.msra.mxu0 %v45
  %145 = vmatprep.subr.mxu0 0.0
  %146 = vmatpush2.msra.mxu0 %v44
  %147 = vmatprep.mubr.f32.mxu0 %v72
  %148 = vmatmul.mubr.f32.gmra.mxu0 %v20
  %v149 = vpop.f32.mrf.mxu0
  %v150 = vadd.f32 %v53, %v149
  %v151 = vpop.f32.mrf.mxu0
  %152 = vmatprep.mubr.f32.mxu0 %v75
  %153 = vmatmul.mubr.f32.gmra.mxu0 %v22
  %v154 = vpop.f32.mrf.mxu0
  %v155 = vadd.f32 %v58, %v154
  %v156 = vpop.f32.mrf.mxu0
  %157 = vmatprep.mubr.f32.mxu0 %v78
  %158 = vmatmul.mubr.f32.gmra.mxu0 %v24
  %v159 = vpop.f32.mrf.mxu0
  %v160 = vadd.f32 %v63, %v159
  %v161 = vpop.f32.mrf.mxu0
  %162 = vmatprep.mubr.f32.mxu0 %v81
  %163 = vmatmul.mubr.f32.gmra.mxu0 %v26
  %v164 = vpop.f32.mrf.mxu0
  %v165 = vadd.f32 %v68, %v164
  %v166 = vpop.f32.mrf.mxu0
  %167 = vdwg.mxu0
  %v168 = vmax.f32 %v150, 0.0
  %v169 = vmax.f32 %v155, 0.0
  %v170 = vmax.f32 %v160, 0.0
  %v171 = vmax.f32 %v165, 0.0
  %vm172 = vcmask 64512
  %v173 = vsel %vm172, %v168, 0.0
  %174 = vadd.xlane.f32.xlu0 %v173
  %v175 = vpop.xlane.xlu0 %174
  %v176 = vsel %vm172, %v169, 0.0
  %177 = vadd.xlane.f32.xlu0 %v176
  %v178 = vpop.xlane.xlu0 %177
  %v179 = vsel %vm172, %v170, 0.0
  %180 = vadd.xlane.f32.xlu0 %v179
  %v181 = vpop.xlane.xlu0 %180
  %v182 = vsel %vm172, %v171, 0.0
  %183 = vadd.xlane.f32.xlu0 %v182
  %v184 = vpop.xlane.xlu0 %183
  %v185 = vrcp.pop 8.0
  %v186 = vmul.f32 %v175, %v185
  %v187 = vmul.f32 %v178, %v185
  %v188 = vmul.f32 %v181, %v185
  %v189 = vmul.f32 %v184, %v185
  %v190 = vmul.f32 %v168, %v168
  %v191 = vmul.f32 %v169, %v169
  %v192 = vmul.f32 %v170, %v170
  %v193 = vmul.f32 %v171, %v171
  %v194 = vsel %vm172, %v190, 0.0
  %195 = vadd.xlane.f32.xlu0 %v194
  %v196 = vpop.xlane.xlu0 %195
  %v197 = vsel %vm172, %v191, 0.0
  %198 = vadd.xlane.f32.xlu0 %v197
  %v199 = vpop.xlane.xlu0 %198
  %v200 = vsel %vm172, %v192, 0.0
  %201 = vadd.xlane.f32.xlu0 %v200
  %v202 = vpop.xlane.xlu0 %201
  %v203 = vsel %vm172, %v193, 0.0
  %204 = vadd.xlane.f32.xlu0 %v203
  %v205 = vpop.xlane.xlu0 %204
  %v206 = vmul.f32 %v196, %v185
  %v207 = vmul.f32 %v199, %v185
  %v208 = vmul.f32 %v202, %v185
  %v209 = vmul.f32 %v205, %v185
  %v210 = vmul.f32 %v186, %v186
  %v211 = vmul.f32 %v187, %v187
  %v212 = vmul.f32 %v188, %v188
  %v213 = vmul.f32 %v189, %v189
  %v214 = vsub.f32 %v206, %v210
  %v215 = vsub.f32 %v207, %v211
  %v216 = vsub.f32 %v208, %v212
  %v217 = vsub.f32 %v209, %v213
  %v218 = vadd.f32 %v214, 1e-05
  %v219 = vadd.f32 %v215, 1e-05
  %v220 = vadd.f32 %v216, 1e-05
  %v221 = vadd.f32 %v217, 1e-05
  %v222 = vrsqrt.pop %v218
  %v223 = vrsqrt.pop %v219
  %v224 = vrsqrt.pop %v220
  %v225 = vrsqrt.pop %v221
  %v226 = vsub.f32 %v168, %v186
  %v227 = vsub.f32 %v169, %v187
  %v228 = vsub.f32 %v170, %v188
  %v229 = vsub.f32 %v171, %v189
  %v230 = vmul.f32 %v226, %v222
  %v231 = vmul.f32 %v227, %v223
  %v232 = vmul.f32 %v228, %v224
  %v233 = vmul.f32 %v229, %v225
  %v234 = vld [vmem:[%s3] sm:$0xff]
  %v235 = vld [vmem:[%s3 + $0x8] sm:$0xff]
  %v236 = vld [vmem:[%s3 + $0x10] sm:$0xff]
  %v237 = vld [vmem:[%s3 + $0x18] sm:$0xff]
  %239 = vset.pattern.permute.xlu0 0
  %240 = vperm.xlu0 %239, %v234
  %v241 = vpop.permute.xlu0 %240
  %244 = vset.pattern.permute.xlu0 0
  %245 = vperm.xlu0 %244, %v235
  %v246 = vpop.permute.xlu0 %245
  %249 = vset.pattern.permute.xlu0 0
  %250 = vperm.xlu0 %249, %v236
  %v251 = vpop.permute.xlu0 %250
  %254 = vset.pattern.permute.xlu0 0
  %255 = vperm.xlu0 %254, %v237
  %v256 = vpop.permute.xlu0 %255
  %v258 = vmul.f32 %v230, %v241
  %v259 = vmul.f32 %v231, %v246
  %v260 = vmul.f32 %v232, %v251
  %v261 = vmul.f32 %v233, %v256
  %v262 = vld [vmem:[%s4] sm:$0xff]
  %v263 = vld [vmem:[%s4 + $0x8] sm:$0xff]
  %v264 = vld [vmem:[%s4 + $0x10] sm:$0xff]
  %v265 = vld [vmem:[%s4 + $0x18] sm:$0xff]
  %267 = vset.pattern.permute.xlu0 0
  %268 = vperm.xlu0 %267, %v262
  %v269 = vpop.permute.xlu0 %268
  %272 = vset.pattern.permute.xlu0 0
  %273 = vperm.xlu0 %272, %v263
  %v274 = vpop.permute.xlu0 %273
  %277 = vset.pattern.permute.xlu0 0
  %278 = vperm.xlu0 %277, %v264
  %v279 = vpop.permute.xlu0 %278
  %282 = vset.pattern.permute.xlu0 0
  %283 = vperm.xlu0 %282, %v265
  %v284 = vpop.permute.xlu0 %283
  %v286 = vadd.f32 %v258, %v269
  %v287 = vadd.f32 %v259, %v274
  %v288 = vadd.f32 %v260, %v279
  %v289 = vadd.f32 %v261, %v284
  %290 = vst.msk [vmem:[%s5] sm:$0xff] %vm172, %v286
  %291 = vst.msk [vmem:[%s5 + $0x8] sm:$0xff] %vm172, %v287
  %292 = vst.msk [vmem:[%s5 + $0x10] sm:$0xff] %vm172, %v288
  %293 = vst.msk [vmem:[%s5 + $0x18] sm:$0xff] %vm172, %v289
  // Predicated region
  $region22: #{net_forward.8} parent=0 // pred_check
    _
  $region23: #{net_forward.8} parent=0 // pred_check_branch
    %295 = sbr.rel (0) target = $region25
  $region24: #{net_forward.8} parent=0 // pred_region
    _
  $region25: #{net_forward.8} parent=0 // pred_fallthru
    _
  // Predicated region
  $region26: #{net_forward.8} parent=0 // pred_check
    _
  $region27: #{net_forward.8} parent=0 // pred_check_branch
    %297 = sbr.rel (0) target = $region29
  $region28: #{net_forward.8} parent=0 // pred_region
    _
  $region29: #{net_forward.8} parent=0 // pred_fallthru
    _

// kernel: net_forward.9
$region0: #{net_forward.9}
  #allocation0 [shape = 'u32[]', space=smem, size = 0x4, offset = 0x4, fixed_abs, tag = 'smem constant byte address 0x4 - core index']
  #allocation1 [shape = 'u32[144,128]{1,0:T(1,128)}', space=vmem, size = 0x12000, scoped, tag = 'internal scratch']
  #allocation2 [shape = 'f32[1,1]{1,0:T(1,128)S(1)}', space=vmem, size = 0x200, scoped, tag = 'scoped memory for net_forward.9']
  %s0 = inlined_call_operand.vmem [shape: f32[2,128], index: 0, kind: input, shape index: {}]
  %s1 = inlined_call_operand.vmem [shape: f32[2,4], index: 1, kind: input, shape index: {}]
  %s2 = inlined_call_operand.vmem [shape: f32[128,64], index: 2, kind: input, shape index: {}]
  %s3 = inlined_call_operand.vmem [shape: f32[1,64], index: 3, kind: input, shape index: {}]
  %s4 = inlined_call_operand.vmem [shape: f32[64,16], index: 4, kind: input, shape index: {}]
  %s5 = inlined_call_operand.vmem [shape: f32[1,16], index: 5, kind: input, shape index: {}]
  %s6 = inlined_call_operand.vmem [shape: f32[16,8], index: 6, kind: input, shape index: {}]
  %s7 = inlined_call_operand.vmem [shape: f32[1,8], index: 7, kind: input, shape index: {}]
  %s8 = inlined_call_operand.vmem [shape: f32[8,12], index: 8, kind: input, shape index: {}]
  %s9 = inlined_call_operand.vmem [shape: f32[4,12], index: 9, kind: input, shape index: {}]
  %s10 = inlined_call_operand.vmem [shape: f32[1,12], index: 10, kind: input, shape index: {}]
  %s11 = inlined_call_operand.vmem [shape: f32[12,1], index: 11, kind: input, shape index: {}]
  %s12 = inlined_call_operand.<no memory space> [shape: f32[1,1], index: 12, kind: input, shape index: {}]
  %s13 = inlined_call_operand.vmem [shape: f32[2,1], index: 13, kind: output, shape index: {}]
  %s14 = sld [smem:[#allocation0]]
  $region62: #{net_forward.9} parent=0
    _
  %s16 = ssub.s32 1, %s14
  %s17 = scalar_select 0, %s16, %s14
  %v18 = vstv %s12
  %19 = vst [vmem:[#allocation2] sm:$0x1] %v18
  // Predicated region
  $region2: #{net_forward.9} parent=0 // pred_check
    _
  $region3: #{net_forward.9} parent=0 // pred_check_branch
    %21 = sbr.rel (0) target = $region5
  $region4: #{net_forward.9} parent=0 // pred_region
    _
  $region5: #{net_forward.9} parent=0 // pred_fallthru
    _
  // Predicated region
  $region6: #{net_forward.9} parent=0 // pred_check
    _
  $region7: #{net_forward.9} parent=0 // pred_check_branch
    %23 = sbr.rel (0) target = $region9
  $region8: #{net_forward.9} parent=0 // pred_region
    _
  $region9: #{net_forward.9} parent=0 // pred_fallthru
    _
  // Predicated region
  $region10: #{net_forward.9} parent=0 // pred_check
    _
  $region11: #{net_forward.9} parent=0 // pred_check_branch
    %25 = sbr.rel (0) target = $region13
  $region12: #{net_forward.9} parent=0 // pred_region
    _
  $region13: #{net_forward.9} parent=0 // pred_fallthru
    _
  // Predicated region
  $region14: #{net_forward.9} parent=0 // pred_check
    _
  $region15: #{net_forward.9} parent=0 // pred_check_branch
    %27 = sbr.rel (0) target = $region17
  $region16: #{net_forward.9} parent=0 // pred_region
    _
  $region17: #{net_forward.9} parent=0 // pred_fallthru
    _
  // Predicated region
  $region18: #{net_forward.9} parent=0 // pred_check
    _
  $region19: #{net_forward.9} parent=0 // pred_check_branch
    %29 = sbr.rel (0) target = $region21
  $region20: #{net_forward.9} parent=0 // pred_region
    _
  $region21: #{net_forward.9} parent=0 // pred_fallthru
    _
  // Predicated region
  $region22: #{net_forward.9} parent=0 // pred_check
    _
  $region23: #{net_forward.9} parent=0 // pred_check_branch
    %31 = sbr.rel (0) target = $region25
  $region24: #{net_forward.9} parent=0 // pred_region
    _
  $region25: #{net_forward.9} parent=0 // pred_fallthru
    _
  // Predicated region
  $region26: #{net_forward.9} parent=0 // pred_check
    _
  $region27: #{net_forward.9} parent=0 // pred_check_branch
    %33 = sbr.rel (0) target = $region29
  $region28: #{net_forward.9} parent=0 // pred_region
    _
  $region29: #{net_forward.9} parent=0 // pred_fallthru
    _
  // Predicated region
  $region30: #{net_forward.9} parent=0 // pred_check
    _
  $region31: #{net_forward.9} parent=0 // pred_check_branch
    %35 = sbr.rel (0) target = $region33
  $region32: #{net_forward.9} parent=0 // pred_region
    _
  $region33: #{net_forward.9} parent=0 // pred_fallthru
    _
  // Predicated region
  $region34: #{net_forward.9} parent=0 // pred_check
    _
  $region35: #{net_forward.9} parent=0 // pred_check_branch
    %37 = sbr.rel (0) target = $region37
  $region36: #{net_forward.9} parent=0 // pred_region
    _
  $region37: #{net_forward.9} parent=0 // pred_fallthru
    _
  // Predicated region
  $region38: #{net_forward.9} parent=0 // pred_check
    _
  $region39: #{net_forward.9} parent=0 // pred_check_branch
    %39 = sbr.rel (0) target = $region41
  $region40: #{net_forward.9} parent=0 // pred_region
    _
  $region41: #{net_forward.9} parent=0 // pred_fallthru
    _
  // Predicated region
  $region42: #{net_forward.9} parent=0 // pred_check
    _
  $region43: #{net_forward.9} parent=0 // pred_check_branch
    %41 = sbr.rel (0) target = $region45
  $region44: #{net_forward.9} parent=0 // pred_region
    _
  $region45: #{net_forward.9} parent=0 // pred_fallthru
    _
  // Predicated region
  $region46: #{net_forward.9} parent=0 // pred_check
    _
  $region47: #{net_forward.9} parent=0 // pred_check_branch
    %43 = sbr.rel (0) target = $region49
  $region48: #{net_forward.9} parent=0 // pred_region
    _
  $region49: #{net_forward.9} parent=0 // pred_fallthru
    _
  // Predicated region
  $region50: #{net_forward.9} parent=0 // pred_check
    _
  $region51: #{net_forward.9} parent=0 // pred_check_branch
    %45 = sbr.rel (0) target = $region53
  $region52: #{net_forward.9} parent=0 // pred_region
    _
  $region53: #{net_forward.9} parent=0 // pred_fallthru
    _
  %v46 = vld [vmem:[%s0] sm:$0x3]
  %v47 = vld [vmem:[%s2] sm:$0xff]
  %v48 = vld [vmem:[%s2 + $0x8] sm:$0xff]
  %v49 = vld [vmem:[%s2 + $0x10] sm:$0xff]
  %v50 = vld [vmem:[%s2 + $0x18] sm:$0xff]
  %v51 = vld [vmem:[%s2 + $0x20] sm:$0xff]
  %v52 = vld [vmem:[%s2 + $0x28] sm:$0xff]
  %v53 = vld [vmem:[%s2 + $0x30] sm:$0xff]
  %v54 = vld [vmem:[%s2 + $0x38] sm:$0xff]
  %v55 = vld [vmem:[%s2 + $0x40] sm:$0xff]
  %v56 = vld [vmem:[%s2 + $0x48] sm:$0xff]
  %v57 = vld [vmem:[%s2 + $0x50] sm:$0xff]
  %v58 = vld [vmem:[%s2 + $0x58] sm:$0xff]
  %v59 = vld [vmem:[%s2 + $0x60] sm:$0xff]
  %v60 = vld [vmem:[%s2 + $0x68] sm:$0xff]
  %v61 = vld [vmem:[%s2 + $0x70] sm:$0xff]
  %v62 = vld [vmem:[%s2 + $0x78] sm:$0xff]
  %v63 = vld [vmem:[%s3] sm:$0x1]
  %v65 = vlaneseq
  %v66 = vshrl.u32 %v65, 7
  %v67 = vsub.s32 0, %v66
  %v68 = vrot.slane %v63, %v67
  %70 = vmatprep.subr.mxu0 0.0
  %71 = vmatpush1.msra.mxu0 %v62
  %72 = vmatprep.subr.mxu0 0.0
  %73 = vmatpush1.msra.mxu0 %v61
  %74 = vmatprep.subr.mxu0 0.0
  %75 = vmatpush1.msra.mxu0 %v60
  %76 = vmatprep.subr.mxu0 0.0
  %77 = vmatpush1.msra.mxu0 %v59
  %78 = vmatprep.subr.mxu0 0.0
  %79 = vmatpush1.msra.mxu0 %v58
  %80 = vmatprep.subr.mxu0 0.0
  %81 = vmatpush1.msra.mxu0 %v57
  %82 = vmatprep.subr.mxu0 0.0
  %83 = vmatpush1.msra.mxu0 %v56
  %84 = vmatprep.subr.mxu0 0.0
  %85 = vmatpush1.msra.mxu0 %v55
  %86 = vmatprep.subr.mxu0 0.0
  %87 = vmatpush1.msra.mxu0 %v54
  %88 = vmatprep.subr.mxu0 0.0
  %89 = vmatpush1.msra.mxu0 %v53
  %90 = vmatprep.subr.mxu0 0.0
  %91 = vmatpush1.msra.mxu0 %v52
  %92 = vmatprep.subr.mxu0 0.0
  %93 = vmatpush1.msra.mxu0 %v51
  %94 = vmatprep.subr.mxu0 0.0
  %95 = vmatpush1.msra.mxu0 %v50
  %96 = vmatprep.subr.mxu0 0.0
  %97 = vmatpush1.msra.mxu0 %v49
  %98 = vmatprep.subr.mxu0 0.0
  %99 = vmatpush1.msra.mxu0 %v48
  %100 = vmatprep.subr.mxu0 0.0
  %101 = vmatpush1.msra.mxu0 %v47
  %102 = vmatprep.subr.mxu0 0.0
  %103 = vmatpush2.msra.mxu0 0.0
  %104 = vmatprep.subr.mxu0 0.0
  %105 = vmatpush2.msra.mxu0 0.0
  %106 = vmatprep.subr.mxu0 0.0
  %107 = vmatpush2.msra.mxu0 0.0
  %108 = vmatprep.subr.mxu0 0.0
  %109 = vmatpush2.msra.mxu0 0.0
  %110 = vmatprep.subr.mxu0 0.0
  %111 = vmatpush2.msra.mxu0 0.0
  %112 = vmatprep.subr.mxu0 0.0
  %113 = vmatpush2.msra.mxu0 0.0
  %114 = vmatprep.subr.mxu0 0.0
  %115 = vmatpush2.msra.mxu0 0.0
  %116 = vmatprep.subr.mxu0 0.0
  %117 = vmatpush2.msra.mxu0 0.0
  %118 = vmatprep.subr.mxu0 0.0
  %119 = vmatpush2.msra.mxu0 0.0
  %120 = vmatprep.subr.mxu0 0.0
  %121 = vmatpush2.msra.mxu0 0.0
  %122 = vmatprep.subr.mxu0 0.0
  %123 = vmatpush2.msra.mxu0 0.0
  %124 = vmatprep.subr.mxu0 0.0
  %125 = vmatpush2.msra.mxu0 0.0
  %126 = vmatprep.subr.mxu0 0.0
  %127 = vmatpush2.msra.mxu0 0.0
  %128 = vmatprep.subr.mxu0 0.0
  %129 = vmatpush2.msra.mxu0 0.0
  %130 = vmatprep.subr.mxu0 0.0
  %131 = vmatpush2.msra.mxu0 0.0
  %132 = vmatprep.subr.mxu0 0.0
  %133 = vmatpush2.msra.mxu0 0.0
  %134 = vmatprep.mubr.f32.mxu0 0.0
  %135 = vmatmul.mubr.f32.gmra.mxu0 %v46
  %v136 = vpop.f32.mrf.mxu0
  %v137 = vadd.f32 %v68, %v136
  %v138 = vpop.f32.mrf.mxu0
  %139 = vdwg.mxu0
  %v140 = vmax.f32 %v137, 0.0
  %v141 = vld [vmem:[%s4] sm:$0xff]
  %v142 = vld [vmem:[%s4 + $0x8] sm:$0xff]
  %v143 = vld [vmem:[%s4 + $0x10] sm:$0xff]
  %v144 = vld [vmem:[%s4 + $0x18] sm:$0xff]
  %v145 = vld [vmem:[%s4 + $0x20] sm:$0xff]
  %v146 = vld [vmem:[%s4 + $0x28] sm:$0xff]
  %v147 = vld [vmem:[%s4 + $0x30] sm:$0xff]
  %v148 = vld [vmem:[%s4 + $0x38] sm:$0xff]
  %v149 = vld [vmem:[%s5] sm:$0x1]
  %v151 = vlaneseq
  %v152 = vshrl.u32 %v151, 7
  %v153 = vsub.s32 0, %v152
  %v154 = vrot.slane %v149, %v153
  %vm156 = vcmask 523264
  %v158 = vsel %vm156, %v140, 0
  %160 = vmatprep.subr.mxu0 0.0
  %161 = vmatpush1.msra.mxu0 0.0
  %162 = vmatprep.subr.mxu0 0.0
  %163 = vmatpush1.msra.mxu0 0.0
  %164 = vmatprep.subr.mxu0 0.0
  %165 = vmatpush1.msra.mxu0 0.0
  %166 = vmatprep.subr.mxu0 0.0
  %167 = vmatpush1.msra.mxu0 0.0
  %168 = vmatprep.subr.mxu0 0.0
  %169 = vmatpush1.msra.mxu0 0.0
  %170 = vmatprep.subr.mxu0 0.0
  %171 = vmatpush1.msra.mxu0 0.0
  %172 = vmatprep.subr.mxu0 0.0
  %173 = vmatpush1.msra.mxu0 0.0
  %174 = vmatprep.subr.mxu0 0.0
  %175 = vmatpush1.msra.mxu0 0.0
  %176 = vmatprep.subr.mxu0 0.0
  %177 = vmatpush1.msra.mxu0 %v148
  %178 = vmatprep.subr.mxu0 0.0
  %179 = vmatpush1.msra.mxu0 %v147
  %180 = vmatprep.subr.mxu0 0.0
  %181 = vmatpush1.msra.mxu0 %v146
  %182 = vmatprep.subr.mxu0 0.0
  %183 = vmatpush1.msra.mxu0 %v145
  %184 = vmatprep.subr.mxu0 0.0
  %185 = vmatpush1.msra.mxu0 %v144
  %186 = vmatprep.subr.mxu0 0.0
  %187 = vmatpush1.msra.mxu0 %v143
  %188 = vmatprep.subr.mxu0 0.0
  %189 = vmatpush1.msra.mxu0 %v142
  %190 = vmatprep.subr.mxu0 0.0
  %191 = vmatpush1.msra.mxu0 %v141
  %192 = vmatprep.subr.mxu0 0.0
  %193 = vmatpush2.msra.mxu0 0.0
  %194 = vmatprep.subr.mxu0 0.0
  %195 = vmatpush2.msra.mxu0 0.0
  %196 = vmatprep.subr.mxu0 0.0
  %197 = vmatpush2.msra.mxu0 0.0
  %198 = vmatprep.subr.mxu0 0.0
  %199 = vmatpush2.msra.mxu0 0.0
  %200 = vmatprep.subr.mxu0 0.0
  %201 = vmatpush2.msra.mxu0 0.0
  %202 = vmatprep.subr.mxu0 0.0
  %203 = vmatpush2.msra.mxu0 0.0
  %204 = vmatprep.subr.mxu0 0.0
  %205 = vmatpush2.msra.mxu0 0.0
  %206 = vmatprep.subr.mxu0 0.0
  %207 = vmatpush2.msra.mxu0 0.0
  %208 = vmatprep.subr.mxu0 0.0
  %209 = vmatpush2.msra.mxu0 0.0
  %210 = vmatprep.subr.mxu0 0.0
  %211 = vmatpush2.msra.mxu0 0.0
  %212 = vmatprep.subr.mxu0 0.0
  %213 = vmatpush2.msra.mxu0 0.0
  %214 = vmatprep.subr.mxu0 0.0
  %215 = vmatpush2.msra.mxu0 0.0
  %216 = vmatprep.subr.mxu0 0.0
  %217 = vmatpush2.msra.mxu0 0.0
  %218 = vmatprep.subr.mxu0 0.0
  %219 = vmatpush2.msra.mxu0 0.0
  %220 = vmatprep.subr.mxu0 0.0
  %221 = vmatpush2.msra.mxu0 0.0
  %222 = vmatprep.subr.mxu0 0.0
  %223 = vmatpush2.msra.mxu0 0.0
  %224 = vmatprep.mubr.f32.mxu0 0.0
  %225 = vmatmul.mubr.f32.gmra.mxu0 %v158
  %v226 = vpop.f32.mrf.mxu0
  %v227 = vadd.f32 %v154, %v226
  %v228 = vpop.f32.mrf.mxu0
  %229 = vdwg.mxu0
  %v230 = vmax.f32 %v227, 0.0
  %v231 = vld [vmem:[%s6] sm:$0xff]
  %v232 = vld [vmem:[%s6 + $0x8] sm:$0xff]
  %v233 = vld [vmem:[%s7] sm:$0x1]
  %v235 = vlaneseq
  %v236 = vshrl.u32 %v235, 7
  %v237 = vsub.s32 0, %v236
  %v238 = vrot.slane %v233, %v237
  %vm240 = vcmask 130048
  %v242 = vsel %vm240, %v230, 0
  %244 = vmatprep.subr.mxu0 0.0
  %245 = vmatpush1.msra.mxu0 0.0
  %246 = vmatprep.subr.mxu0 0.0
  %247 = vmatpush1.msra.mxu0 0.0
  %248 = vmatprep.subr.mxu0 0.0
  %249 = vmatpush1.msra.mxu0 0.0
  %250 = vmatprep.subr.mxu0 0.0
  %251 = vmatpush1.msra.mxu0 0.0
  %252 = vmatprep.subr.mxu0 0.0
  %253 = vmatpush1.msra.mxu0 0.0
  %254 = vmatprep.subr.mxu0 0.0
  %255 = vmatpush1.msra.mxu0 0.0
  %256 = vmatprep.subr.mxu0 0.0
  %257 = vmatpush1.msra.mxu0 0.0
  %258 = vmatprep.subr.mxu0 0.0
  %259 = vmatpush1.msra.mxu0 0.0
  %260 = vmatprep.subr.mxu0 0.0
  %261 = vmatpush1.msra.mxu0 0.0
  %262 = vmatprep.subr.mxu0 0.0
  %263 = vmatpush1.msra.mxu0 0.0
  %264 = vmatprep.subr.mxu0 0.0
  %265 = vmatpush1.msra.mxu0 0.0
  %266 = vmatprep.subr.mxu0 0.0
  %267 = vmatpush1.msra.mxu0 0.0
  %268 = vmatprep.subr.mxu0 0.0
  %269 = vmatpush1.msra.mxu0 0.0
  %270 = vmatprep.subr.mxu0 0.0
  %271 = vmatpush1.msra.mxu0 0.0
  %272 = vmatprep.subr.mxu0 0.0
  %273 = vmatpush1.msra.mxu0 %v232
  %274 = vmatprep.subr.mxu0 0.0
  %275 = vmatpush1.msra.mxu0 %v231
  %276 = vmatprep.subr.mxu0 0.0
  %277 = vmatpush2.msra.mxu0 0.0
  %278 = vmatprep.subr.mxu0 0.0
  %279 = vmatpush2.msra.mxu0 0.0
  %280 = vmatprep.subr.mxu0 0.0
  %281 = vmatpush2.msra.mxu0 0.0
  %282 = vmatprep.subr.mxu0 0.0
  %283 = vmatpush2.msra.mxu0 0.0
  %284 = vmatprep.subr.mxu0 0.0
  %285 = vmatpush2.msra.mxu0 0.0
  %286 = vmatprep.subr.mxu0 0.0
  %287 = vmatpush2.msra.mxu0 0.0
  %288 = vmatprep.subr.mxu0 0.0
  %289 = vmatpush2.msra.mxu0 0.0
  %290 = vmatprep.subr.mxu0 0.0
  %291 = vmatpush2.msra.mxu0 0.0
  %292 = vmatprep.subr.mxu0 0.0
  %293 = vmatpush2.msra.mxu0 0.0
  %294 = vmatprep.subr.mxu0 0.0
  %295 = vmatpush2.msra.mxu0 0.0
  %296 = vmatprep.subr.mxu0 0.0
  %297 = vmatpush2.msra.mxu0 0.0
  %298 = vmatprep.subr.mxu0 0.0
  %299 = vmatpush2.msra.mxu0 0.0
  %300 = vmatprep.subr.mxu0 0.0
  %301 = vmatpush2.msra.mxu0 0.0
  %302 = vmatprep.subr.mxu0 0.0
  %303 = vmatpush2.msra.mxu0 0.0
  %304 = vmatprep.subr.mxu0 0.0
  %305 = vmatpush2.msra.mxu0 0.0
  %306 = vmatprep.subr.mxu0 0.0
  %307 = vmatpush2.msra.mxu0 0.0
  %308 = vmatprep.mubr.f32.mxu0 0.0
  %309 = vmatmul.mubr.f32.gmra.mxu0 %v242
  %v310 = vpop.f32.mrf.mxu0
  %v311 = vadd.f32 %v238, %v310
  %v312 = vpop.f32.mrf.mxu0
  %313 = vdwg.mxu0
  %v314 = vmax.f32 %v311, 0.0
  %v315 = vld [vmem:[%s8] sm:$0xff]
  %v316 = vld [vmem:[%s1] sm:$0x3]
  %v317 = vld [vmem:[%s9] sm:$0xf]
  %vm318 = vcmask 31744
  %v320 = vsel %vm318, %v316, 0
  %vm322 = vcmask 1043456
  %v324 = vsel %vm322, %v317, 0
  %326 = vmatprep.subr.mxu0 0.0
  %327 = vmatpush1.msra.mxu0 0.0
  %328 = vmatprep.subr.mxu0 0.0
  %329 = vmatpush1.msra.mxu0 0.0
  %330 = vmatprep.subr.mxu0 0.0
  %331 = vmatpush1.msra.mxu0 0.0
  %332 = vmatprep.subr.mxu0 0.0
  %333 = vmatpush1.msra.mxu0 0.0
  %334 = vmatprep.subr.mxu0 0.0
  %335 = vmatpush1.msra.mxu0 0.0
  %336 = vmatprep.subr.mxu0 0.0
  %337 = vmatpush1.msra.mxu0 0.0
  %338 = vmatprep.subr.mxu0 0.0
  %339 = vmatpush1.msra.mxu0 0.0
  %340 = vmatprep.subr.mxu0 0.0
  %341 = vmatpush1.msra.mxu0 0.0
  %342 = vmatprep.subr.mxu0 0.0
  %343 = vmatpush1.msra.mxu0 0.0
  %344 = vmatprep.subr.mxu0 0.0
  %345 = vmatpush1.msra.mxu0 0.0
  %346 = vmatprep.subr.mxu0 0.0
  %347 = vmatpush1.msra.mxu0 0.0
  %348 = vmatprep.subr.mxu0 0.0
  %349 = vmatpush1.msra.mxu0 0.0
  %350 = vmatprep.subr.mxu0 0.0
  %351 = vmatpush1.msra.mxu0 0.0
  %352 = vmatprep.subr.mxu0 0.0
  %353 = vmatpush1.msra.mxu0 0.0
  %354 = vmatprep.subr.mxu0 0.0
  %355 = vmatpush1.msra.mxu0 0.0
  %356 = vmatprep.subr.mxu0 0.0
  %357 = vmatpush1.msra.mxu0 %v324
  %358 = vmatprep.subr.mxu0 0.0
  %359 = vmatpush2.msra.mxu0 0.0
  %360 = vmatprep.subr.mxu0 0.0
  %361 = vmatpush2.msra.mxu0 0.0
  %362 = vmatprep.subr.mxu0 0.0
  %363 = vmatpush2.msra.mxu0 0.0
  %364 = vmatprep.subr.mxu0 0.0
  %365 = vmatpush2.msra.mxu0 0.0
  %366 = vmatprep.subr.mxu0 0.0
  %367 = vmatpush2.msra.mxu0 0.0
  %368 = vmatprep.subr.mxu0 0.0
  %369 = vmatpush2.msra.mxu0 0.0
  %370 = vmatprep.subr.mxu0 0.0
  %371 = vmatpush2.msra.mxu0 0.0
  %372 = vmatprep.subr.mxu0 0.0
  %373 = vmatpush2.msra.mxu0 0.0
  %374 = vmatprep.subr.mxu0 0.0
  %375 = vmatpush2.msra.mxu0 0.0
  %376 = vmatprep.subr.mxu0 0.0
  %377 = vmatpush2.msra.mxu0 0.0
  %378 = vmatprep.subr.mxu0 0.0
  %379 = vmatpush2.msra.mxu0 0.0
  %380 = vmatprep.subr.mxu0 0.0
  %381 = vmatpush2.msra.mxu0 0.0
  %382 = vmatprep.subr.mxu0 0.0
  %383 = vmatpush2.msra.mxu0 0.0
  %384 = vmatprep.subr.mxu0 0.0
  %385 = vmatpush2.msra.mxu0 0.0
  %386 = vmatprep.subr.mxu0 0.0
  %387 = vmatpush2.msra.mxu0 0.0
  %388 = vmatprep.subr.mxu0 0.0
  %389 = vmatpush2.msra.mxu0 0.0
  %390 = vmatprep.mubr.f32.mxu0 0.0
  %391 = vmatmul.mubr.f32.gmra.mxu0 %v320
  %v392 = vpop.f32.mrf.mxu0
  %v393 = vadd.f32 0.0, %v392
  %v394 = vpop.f32.mrf.mxu0
  %395 = vdwg.mxu0
  %vm396 = vcmask 64512
  %v398 = vsel %vm396, %v314, 0
  %400 = vmatprep.subr.mxu0 0.0
  %401 = vmatpush1.msra.mxu0 0.0
  %402 = vmatprep.subr.mxu0 0.0
  %403 = vmatpush1.msra.mxu0 0.0
  %404 = vmatprep.subr.mxu0 0.0
  %405 = vmatpush1.msra.mxu0 0.0
  %406 = vmatprep.subr.mxu0 0.0
  %407 = vmatpush1.msra.mxu0 0.0
  %408 = vmatprep.subr.mxu0 0.0
  %409 = vmatpush1.msra.mxu0 0.0
  %410 = vmatprep.subr.mxu0 0.0
  %411 = vmatpush1.msra.mxu0 0.0
  %412 = vmatprep.subr.mxu0 0.0
  %413 = vmatpush1.msra.mxu0 0.0
  %414 = vmatprep.subr.mxu0 0.0
  %415 = vmatpush1.msra.mxu0 0.0
  %416 = vmatprep.subr.mxu0 0.0
  %417 = vmatpush1.msra.mxu0 0.0
  %418 = vmatprep.subr.mxu0 0.0
  %419 = vmatpush1.msra.mxu0 0.0
  %420 = vmatprep.subr.mxu0 0.0
  %421 = vmatpush1.msra.mxu0 0.0
  %422 = vmatprep.subr.mxu0 0.0
  %423 = vmatpush1.msra.mxu0 0.0
  %424 = vmatprep.subr.mxu0 0.0
  %425 = vmatpush1.msra.mxu0 0.0
  %426 = vmatprep.subr.mxu0 0.0
  %427 = vmatpush1.msra.mxu0 0.0
  %428 = vmatprep.subr.mxu0 0.0
  %429 = vmatpush1.msra.mxu0 0.0
  %430 = vmatprep.subr.mxu0 0.0
  %431 = vmatpush1.msra.mxu0 %v315
  %432 = vmatprep.subr.mxu0 0.0
  %433 = vmatpush2.msra.mxu0 0.0
  %434 = vmatprep.subr.mxu0 0.0
  %435 = vmatpush2.msra.mxu0 0.0
  %436 = vmatprep.subr.mxu0 0.0
  %437 = vmatpush2.msra.mxu0 0.0
  %438 = vmatprep.subr.mxu0 0.0
  %439 = vmatpush2.msra.mxu0 0.0
  %440 = vmatprep.subr.mxu0 0.0
  %441 = vmatpush2.msra.mxu0 0.0
  %442 = vmatprep.subr.mxu0 0.0
  %443 = vmatpush2.msra.mxu0 0.0
  %444 = vmatprep.subr.mxu0 0.0
  %445 = vmatpush2.msra.mxu0 0.0
  %446 = vmatprep.subr.mxu0 0.0
  %447 = vmatpush2.msra.mxu0 0.0
  %448 = vmatprep.subr.mxu0 0.0
  %449 = vmatpush2.msra.mxu0 0.0
  %450 = vmatprep.subr.mxu0 0.0
  %451 = vmatpush2.msra.mxu0 0.0
  %452 = vmatprep.subr.mxu0 0.0
  %453 = vmatpush2.msra.mxu0 0.0
  %454 = vmatprep.subr.mxu0 0.0
  %455 = vmatpush2.msra.mxu0 0.0
  %456 = vmatprep.subr.mxu0 0.0
  %457 = vmatpush2.msra.mxu0 0.0
  %458 = vmatprep.subr.mxu0 0.0
  %459 = vmatpush2.msra.mxu0 0.0
  %460 = vmatprep.subr.mxu0 0.0
  %461 = vmatpush2.msra.mxu0 0.0
  %462 = vmatprep.subr.mxu0 0.0
  %463 = vmatpush2.msra.mxu0 0.0
  %464 = vmatprep.mubr.f32.mxu0 0.0
  %465 = vmatmul.mubr.f32.gmra.mxu0 %v398
  %v466 = vpop.f32.mrf.mxu0
  %v467 = vadd.f32 %v393, %v466
  %v468 = vpop.f32.mrf.mxu0
  %469 = vdwg.mxu0
  %v470 = vld [vmem:[%s10] sm:$0x1]
  %v472 = vlaneseq
  %v473 = vshrl.u32 %v472, 7
  %v474 = vsub.s32 0, %v473
  %v475 = vrot.slane %v470, %v474
  %v477 = vadd.f32 %v467, %v475
  %v478 = vmax.f32 %v477, 0.0
  %v479 = vld [vmem:[%s11] sm:$0xff]
  %v480 = vld [vmem:[%s11 + $0x8] sm:$0xf]
  %v481 = vld [vmem:[#allocation2] sm:$0x1]
  %v483 = vlaneseq
  %v484 = vshrl.u32 %v483, 7
  %v485 = vsub.s32 0, %v484
  %v486 = vrot.slane %v481, %v485
  %vm488 = vcmask 97280
  %v490 = vsel %vm488, %v478, 0
  %v493 = vsel %vm322, %v480, 0
  %495 = vmatprep.subr.mxu0 0.0
  %496 = vmatpush1.msra.mxu0 0.0
  %497 = vmatprep.subr.mxu0 0.0
  %498 = vmatpush1.msra.mxu0 0.0
  %499 = vmatprep.subr.mxu0 0.0
  %500 = vmatpush1.msra.mxu0 0.0
  %501 = vmatprep.subr.mxu0 0.0
  %502 = vmatpush1.msra.mxu0 0.0
  %503 = vmatprep.subr.mxu0 0.0
  %504 = vmatpush1.msra.mxu0 0.0
  %505 = vmatprep.subr.mxu0 0.0
  %506 = vmatpush1.msra.mxu0 0.0
  %507 = vmatprep.subr.mxu0 0.0
  %508 = vmatpush1.msra.mxu0 0.0
  %509 = vmatprep.subr.mxu0 0.0
  %510 = vmatpush1.msra.mxu0 0.0
  %511 = vmatprep.subr.mxu0 0.0
  %512 = vmatpush1.msra.mxu0 0.0
  %513 = vmatprep.subr.mxu0 0.0
  %514 = vmatpush1.msra.mxu0 0.0
  %515 = vmatprep.subr.mxu0 0.0
  %516 = vmatpush1.msra.mxu0 0.0
  %517 = vmatprep.subr.mxu0 0.0
  %518 = vmatpush1.msra.mxu0 0.0
  %519 = vmatprep.subr.mxu0 0.0
  %520 = vmatpush1.msra.mxu0 0.0
  %521 = vmatprep.subr.mxu0 0.0
  %522 = vmatpush1.msra.mxu0 0.0
  %523 = vmatprep.subr.mxu0 0.0
  %524 = vmatpush1.msra.mxu0 %v493
  %525 = vmatprep.subr.mxu0 0.0
  %526 = vmatpush1.msra.mxu0 %v479
  %527 = vmatprep.subr.mxu0 0.0
  %528 = vmatpush2.msra.mxu0 0.0
  %529 = vmatprep.subr.mxu0 0.0
  %530 = vmatpush2.msra.mxu0 0.0
  %531 = vmatprep.subr.mxu0 0.0
  %532 = vmatpush2.msra.mxu0 0.0
  %533 = vmatprep.subr.mxu0 0.0
  %534 = vmatpush2.msra.mxu0 0.0
  %535 = vmatprep.subr.mxu0 0.0
  %536 = vmatpush2.msra.mxu0 0.0
  %537 = vmatprep.subr.mxu0 0.0
  %538 = vmatpush2.msra.mxu0 0.0
  %539 = vmatprep.subr.mxu0 0.0
  %540 = vmatpush2.msra.mxu0 0.0
  %541 = vmatprep.subr.mxu0 0.0
  %542 = vmatpush2.msra.mxu0 0.0
  %543 = vmatprep.subr.mxu0 0.0
  %544 = vmatpush2.msra.mxu0 0.0
  %545 = vmatprep.subr.mxu0 0.0
  %546 = vmatpush2.msra.mxu0 0.0
  %547 = vmatprep.subr.mxu0 0.0
  %548 = vmatpush2.msra.mxu0 0.0
  %549 = vmatprep.subr.mxu0 0.0
  %550 = vmatpush2.msra.mxu0 0.0
  %551 = vmatprep.subr.mxu0 0.0
  %552 = vmatpush2.msra.mxu0 0.0
  %553 = vmatprep.subr.mxu0 0.0
  %554 = vmatpush2.msra.mxu0 0.0
  %555 = vmatprep.subr.mxu0 0.0
  %556 = vmatpush2.msra.mxu0 0.0
  %557 = vmatprep.subr.mxu0 0.0
  %558 = vmatpush2.msra.mxu0 0.0
  %559 = vmatprep.mubr.f32.mxu0 0.0
  %560 = vmatmul.mubr.f32.gmra.mxu0 %v490
  %v561 = vpop.f32.mrf.mxu0
  %v562 = vadd.f32 %v486, %v561
  %v563 = vpop.f32.mrf.mxu0
  %564 = vdwg.mxu0
  %vm565 = vcmask 1024
  %566 = vst.msk [vmem:[%s13] sm:$0x3] %vm565, %v562
  // Predicated region
  $region54: #{net_forward.9} parent=0 // pred_check
    _
  $region55: #{net_forward.9} parent=0 // pred_check_branch
    %568 = sbr.rel (0) target = $region57
  $region56: #{net_forward.9} parent=0 // pred_region
    _
  $region57: #{net_forward.9} parent=0 // pred_fallthru
    _
  // Predicated region
  $region58: #{net_forward.9} parent=0 // pred_check
    _
  $region59: #{net_forward.9} parent=0 // pred_check_branch
    %570 = sbr.rel (0) target = $region61
  $region60: #{net_forward.9} parent=0 // pred_region
    _
  $region61: #{net_forward.9} parent=0 // pred_fallthru
    _

</llo_original>
